<compile_context>
chip_gen: v6e
topology: v6e:2x2x1
jax: 0.10.0
libtpu: 0.0.40
codegen_flags: <defaults>
</compile_context>

<pallas_src>
import functools

import numpy as np

import jax
import jax.numpy as jnp
from jax.experimental import pallas as pl
from jax.experimental.pallas import tpu as pltpu


def _cdiv(a, b):
    return -(-a // b)


def _vmem_capacity():
    try:
        info = pltpu.get_tpu_info()
        cap = getattr(info, "vmem_capacity_bytes", None)
        if cap:
            return int(cap)
    except Exception:
        pass
    return 64 * 2 ** 20  # conservative: v7x per-TensorCore VMEM


# ----------------------------------------------------------------------------
# Fused kernel: all GRU layers + FC head in one invocation.
#
#   refs = (x_ref,
#           [w_ih, w_hh, b_gi, b_hn] * num_layers,
#           fc_w, fc_b,                       # inputs
#           o_ref,                            # output
#           gi_ref, seq_ref)                  # VMEM scratch
#
# Packed shapes (P batch rows per 128-lane slab, Hp = packed hidden width):
#   x_ref:   (T, bnp, Pp)        packed scalar inputs, time-major
#   w_ih_0:  (Pp, 3*Hp)          layer-0 input weights (block per lane group)
#   w_ih_l:  (Hp, 3*Hp)  l > 0   block-diagonal
#   w_hh_l:  (Hp, 3*Hp)          block-diagonal
#   b_gi_l:  (1, 3*Hp)           b_ih + (r,z slabs of b_hh), pre-folded
#   b_hn_l:  (1, Hp)             n slab of b_hh (stays inside r*(...))
#   fc_w:    (Hp, P*out), fc_b: (1, P*out)
#   o_ref:   (bnp, P*out)
#   gi_ref:  (T*bnp, 3*Hp) VMEM  precomputed input gates for the current layer
#   seq_ref: (T*bnp, Hp)   VMEM  previous layer's output sequence
# ----------------------------------------------------------------------------
def fbf_gru_kernel(*refs, T, bnp, Hp, num_layers, mm_dtype):
    x_ref = refs[0]
    w_refs = refs[1:1 + 4 * num_layers]
    fc_w_ref = refs[1 + 4 * num_layers]
    fc_b_ref = refs[2 + 4 * num_layers]
    n_in = 3 + 4 * num_layers
    o_ref = refs[n_in]
    gi_ref = refs[n_in + 1]
    seq_ref = refs[n_in + 2]

    TB = T * bnp

    def mm(a, b):
        # MXU matmul; optional bf16 inputs, always f32 accumulation.
        return jnp.dot(a.astype(mm_dtype), b, preferred_element_type=jnp.float32)

    # Fully unroll short recurrences; partial unroll (LLO cross-step visibility)
    # for long ones without blowing vreg live ranges.
    unroll = True if T <= 16 else 2
    h0 = jnp.zeros((bnp, Hp), jnp.float32)
    h_last = h0

    for l in range(num_layers):
        w_ih = w_refs[4 * l][...].astype(mm_dtype)       # cast once per layer
        w_hh = w_refs[4 * l + 1][...].astype(mm_dtype)
        b_gi = w_refs[4 * l + 2][...]
        # Hoist the bias broadcast out of the loop (JAX does not CSE broadcasts).
        b_hn = jnp.broadcast_to(w_refs[4 * l + 3][...], (bnp, Hp))
        is_last = (l == num_layers - 1)

        # ---- input-to-hidden gates for ALL timesteps in one MXU pass --------
        # (off the serial critical path; b_ih and the r/z slabs of b_hh are
        # already folded into b_gi by pad_params)
        if l == 0:
            src = x_ref[...].reshape(TB, -1)             # (T*bnp, Pp)
        else:
            src = seq_ref[...]                           # (T*bnp, Hp)
        gi_ref[...] = (mm(src, w_ih) + b_gi).astype(gi_ref.dtype)

        # ---- serial recurrence over time ------------------------------------
        def step(t, h_prev, *, w_hh=w_hh, b_hn=b_hn, is_last=is_last):
            off = pl.multiple_of(t * bnp, bnp)
            gi_t = gi_ref[pl.ds(off, bnp), :]
            gh_t = mm(h_prev, w_hh)
            # 128-lane-aligned gate slabs: [0:Hp)=r, [Hp:2Hp)=z, [2Hp:3Hp)=n.
            r = jax.nn.sigmoid(gi_t[:, 0:Hp] + gh_t[:, 0:Hp])
            z = jax.nn.sigmoid(gi_t[:, Hp:2 * Hp] + gh_t[:, Hp:2 * Hp])
            n = jnp.tanh(gi_t[:, 2 * Hp:3 * Hp]
                         + r * (gh_t[:, 2 * Hp:3 * Hp] + b_hn))
            h_new = (1.0 - z) * n + z * h_prev
            if not is_last:
                seq_ref[pl.ds(off, bnp), :] = h_new.astype(seq_ref.dtype)
            return h_new

        h_last = jax.lax.fori_loop(0, T, step, h0, unroll=unroll)

    # Final Linear on the last timestep's hidden state.  Block-diagonal fc_w
    # unpacks the lane groups into P*output_len output columns per packed row.
    out = mm(h_last, fc_w_ref[...].astype(mm_dtype)) + fc_b_ref[...]
    o_ref[...] = out.astype(o_ref.dtype)


# ----------------------------------------------------------------------------
# Wrapper: reshape / packing glue in plain JAX, one fused pallas_call.
# ----------------------------------------------------------------------------
def fbf_gru_forward(x, kparams, *, num_flow, hidden, output_len, num_layers,
                    block_rows=None, mm_dtype=jnp.float32):
    """x: (B, T, F) with F == num_flow -> (B, output_len, num_flow)."""
    del hidden  # geometry comes from the packed params
    B, T, F = x.shape
    assert F == num_flow
    N = B * F
    P, Pp, Hp = kparams["P"], kparams["Pp"], kparams["Hp"]
    Od = P * output_len

    # ---- choose packed-row blocking -----------------------------------------
    # VMEM budget (f32 gi + seq scratch per packed row) and a vreg-pressure cap
    # on rows per block; extra grid blocks only pay off on v7x (2 TensorCores),
    # which a caller can force via block_rows.
    vmem_cap = _vmem_capacity()
    per_row_bytes = T * 4 * Hp * 4                       # gi (3*Hp) + seq (Hp)
    cap_rows = max(8, (int(0.5 * vmem_cap) // max(per_row_bytes, 1)) // 8 * 8)
    row_cap = min(cap_rows, block_rows if block_rows else 64)
    row_cap = max(8, (row_cap // 8) * 8)

    Np = _cdiv(N, P)                                     # packed rows needed
    Np8 = max(8, _cdiv(Np, 8) * 8)                       # sublane-align
    grid_n = max(1, _cdiv(Np8, row_cap))
    bnp = _cdiv(_cdiv(Np8, grid_n), 8) * 8               # packed rows per block
    Np_pad = bnp * grid_n
    N_pad = Np_pad * P

    # ---- same permute/reshape as the PyTorch module, then pack --------------
    x2 = jnp.transpose(x, (0, 2, 1)).reshape(N, T)       # rows ordered (b, flow)
    x2 = jnp.pad(x2, ((0, N_pad - N), (0, 0)))
    xp = jnp.transpose(x2.reshape(Np_pad, P, T), (2, 0, 1))   # (T, Np_pad, P)
    if Pp > P:
        xp = jnp.pad(xp, ((0, 0), (0, 0), (0, Pp - P)))

    # ---- flat args + BlockSpecs ----------------------------------------------
    flat_args = []
    in_specs = [pl.BlockSpec((T, bnp, Pp), lambda i: (0, i, 0))]
    for l in range(num_layers):
        for arr in kparams["gru"][l]:
            flat_args.append(arr)
            in_specs.append(pl.BlockSpec(arr.shape, lambda i: (0, 0)))
    for arr in (kparams["fc_w"], kparams["fc_b"]):
        flat_args.append(arr)
        in_specs.append(pl.BlockSpec(arr.shape, lambda i: (0, 0)))

    # ---- explicit VMEM budget -------------------------------------------------
    weight_bytes = sum(int(a.size) * a.dtype.itemsize for a in flat_args)
    need = (T * bnp * 4 * Hp * 4          # gi + seq scratch (f32)
            + 2 * T * bnp * Pp * 4        # double-buffered x block
            + 2 * bnp * Od * 4            # double-buffered out block
            + 2 * weight_bytes)           # double-buffered weights
    vmem_limit = int(min(128 * 2 ** 20, max(need + (8 << 20), 32 << 20)))

    kernel = functools.partial(fbf_gru_kernel, T=T, bnp=bnp, Hp=Hp,
                               num_layers=num_layers, mm_dtype=mm_dtype)

    out = pl.pallas_call(
        kernel,
        out_shape=jax.ShapeDtypeStruct((Np_pad, Od), jnp.float32),
        grid_spec=pltpu.PrefetchScalarGridSpec(
            num_scalar_prefetch=0,
            grid=(grid_n,),
            in_specs=in_specs,
            out_specs=pl.BlockSpec((bnp, Od), lambda i: (i, 0)),
            scratch_shapes=[
                pltpu.VMEM((T * bnp, 3 * Hp), jnp.float32),   # gi scratch
                pltpu.VMEM((T * bnp, Hp), jnp.float32),       # layer-output seq
            ],
        ),
        compiler_params=pltpu.CompilerParams(
            dimension_semantics=("parallel",),
            vmem_limit_bytes=vmem_limit,
        ),
    )(xp, *flat_args)

    # Unpack: out[rp, p*O:(p+1)*O] is row rp*P + p.
    out = out.reshape(Np_pad * P, output_len)[:N]
    out = out.reshape(B, num_flow, output_len)
    return jnp.transpose(out, (0, 2, 1))                 # (B, output_len, F)


# ----------------------------------------------------------------------------
# Parameter construction (torch layout) + packing into the kernel layout.
# ----------------------------------------------------------------------------
def make_params(key, *, hidden, output_len, num_layers):
    """Raw nn.GRU / nn.Linear layout: w_ih (3H, D_in), w_hh (3H, H), b (3H,)."""
    k = 1.0 / jnp.sqrt(jnp.float32(hidden))
    raw = {"gru": []}
    for l in range(num_layers):
        d_in = 1 if l == 0 else hidden
        key, k1, k2, k3, k4 = jax.random.split(key, 5)
        w_ih = jax.random.uniform(k1, (3 * hidden, d_in), jnp.float32, -k, k)
        w_hh = jax.random.uniform(k2, (3 * hidden, hidden), jnp.float32, -k, k)
        b_ih = jax.random.uniform(k3, (3 * hidden,), jnp.float32, -k, k)
        b_hh = jax.random.uniform(k4, (3 * hidden,), jnp.float32, -k, k)
        raw["gru"].append((w_ih, w_hh, b_ih, b_hh))
    key, k5, k6 = jax.random.split(key, 3)
    raw["fc_w"] = jax.random.uniform(k5, (output_len, hidden), jnp.float32, -k, k)
    raw["fc_b"] = jax.random.uniform(k6, (output_len,), jnp.float32, -k, k)
    return raw


def pad_params(raw, *, hidden, output_len, num_layers):
    """Pack P = 128//H batch rows per 128-lane slab; block-diagonal weights.

    Padding lanes (>= P*H within a slab) carry zero weights and biases, so the
    recurrence provably keeps them at zero (sigmoid(0)=0.5, tanh(0)=0,
    h = 0.5*0 + 0.5*0 = 0) and they contribute nothing downstream.
    """
    H = hidden
    if H >= 128:
        P = 1
        Hp = _cdiv(H, 128) * 128
    else:
        P = 128 // H
        Hp = 128
    Pp = _cdiv(P, 8) * 8

    def pack_rec(w):                       # torch (3H, H) -> (Hp, 3*Hp)
        out = np.zeros((Hp, 3 * Hp), np.float32)
        w = np.asarray(w)
        for g in range(3):
            blk = w[g * H:(g + 1) * H, :].T            # (H_in, H_out)
            for p in range(P):
                out[p * H:(p + 1) * H,
                    g * Hp + p * H: g * Hp + (p + 1) * H] = blk
        return jnp.asarray(out)

    def pack_in0(w):                       # torch (3H, 1) -> (Pp, 3*Hp)
        out = np.zeros((Pp, 3 * Hp), np.float32)
        col_all = np.asarray(w)[:, 0]
        for g in range(3):
            col = col_all[g * H:(g + 1) * H]
            for p in range(P):
                out[p, g * Hp + p * H: g * Hp + (p + 1) * H] = col
        return jnp.asarray(out)

    def pack_bias(b, gates):               # (3H,) -> (1, 3*Hp), selected slabs
        out = np.zeros((1, 3 * Hp), np.float32)
        b = np.asarray(b)
        for g in gates:
            seg = b[g * H:(g + 1) * H]
            for p in range(P):
                out[0, g * Hp + p * H: g * Hp + (p + 1) * H] = seg
        return out

    kp = {"P": P, "Pp": Pp, "Hp": Hp, "gru": []}
    for l in range(num_layers):
        w_ih, w_hh, b_ih, b_hh = raw["gru"][l]
        w_ih_p = pack_in0(w_ih) if l == 0 else pack_rec(w_ih)
        w_hh_p = pack_rec(w_hh)
        # Fold b_ih (all slabs) and the r/z slabs of b_hh into the precomputed
        # input gates; only the n-slab of b_hh stays inside r*(...).
        b_gi = jnp.asarray(pack_bias(b_ih, (0, 1, 2)) + pack_bias(b_hh, (0, 1)))
        b_hn_np = np.zeros((1, Hp), np.float32)
        bh = np.asarray(b_hh)
        for p in range(P):
            b_hn_np[0, p * H:(p + 1) * H] = bh[2 * H:3 * H]
        kp["gru"].append((w_ih_p, w_hh_p, b_gi, jnp.asarray(b_hn_np)))

    fw = np.asarray(raw["fc_w"])           # (O, H)
    fb = np.asarray(raw["fc_b"])           # (O,)
    O = output_len
    fcw = np.zeros((Hp, P * O), np.float32)
    fcb = np.zeros((1, P * O), np.float32)
    for p in range(P):
        fcw[p * H:(p + 1) * H, p * O:(p + 1) * O] = fw.T
        fcb[0, p * O:(p + 1) * O] = fb
    kp["fc_w"] = jnp.asarray(fcw)
    kp["fc_b"] = jnp.asarray(fcb)
    return kp


# ----------------------------------------------------------------------------
# Pure-JAX reference (torch-layout weights) for correctness checking.
# ----------------------------------------------------------------------------
def gru_forward_ref(x, raw, *, num_flow, hidden, output_len, num_layers):
    B, T, F = x.shape
    N = B * F
    H = hidden
    inp = jnp.transpose(jnp.transpose(x, (0, 2, 1)).reshape(N, T, 1), (1, 0, 2))
    for l in range(num_layers):
        w_ih, w_hh, b_ih, b_hh = raw["gru"][l]
        h = jnp.zeros((N, H), jnp.float32)
        outs = []
        for t in range(T):
            gi = inp[t] @ w_ih.T + b_ih
            gh = h @ w_hh.T + b_hh
            r = jax.nn.sigmoid(gi[:, :H] + gh[:, :H])
            z = jax.nn.sigmoid(gi[:, H:2 * H] + gh[:, H:2 * H])
            n = jnp.tanh(gi[:, 2 * H:] + r * gh[:, 2 * H:])
            h = (1.0 - z) * n + z * h
            outs.append(h)
        inp = jnp.stack(outs, 0)
    out = inp[-1] @ raw["fc_w"].T + raw["fc_b"]
    out = out.reshape(B, F, output_len)
    return jnp.transpose(out, (0, 2, 1))


if __name__ == "__main__":
    # Small shapes consistent with the module's forward.
    B, T, NUM_FLOW = 2, 8, 4
    HIDDEN, LAYERS, OUTPUT_LEN = 32, 2, 4

    key = jax.random.PRNGKey(0)
    key, kx = jax.random.split(key)
    x = jax.random.normal(kx, (B, T, NUM_FLOW), jnp.float32)

    raw = make_params(key, hidden=HIDDEN, output_len=OUTPUT_LEN,
                      num_layers=LAYERS)
    kparams = pad_params(raw, hidden=HIDDEN, output_len=OUTPUT_LEN,
                         num_layers=LAYERS)

    ref = gru_forward_ref(x, raw, num_flow=NUM_FLOW, hidden=HIDDEN,
                          output_len=OUTPUT_LEN, num_layers=LAYERS)
    ref = jax.block_until_ready(ref)

    # Full-precision (f32 MXU) path: strict check against the reference.
    out = fbf_gru_forward(x, kparams, num_flow=NUM_FLOW, hidden=HIDDEN,
                          output_len=OUTPUT_LEN, num_layers=LAYERS)
    out = jax.block_until_ready(out)
    assert out.shape == (B, OUTPUT_LEN, NUM_FLOW), out.shape
    assert jnp.allclose(out, ref, rtol=1e-3, atol=1e-3), (
        float(jnp.max(jnp.abs(out - ref))))

    # bf16-MXU path (f32 accumulation, f32 hidden-state carry): drift smoke test.
    out_bf16 = fbf_gru_forward(x, kparams, num_flow=NUM_FLOW, hidden=HIDDEN,
                               output_len=OUTPUT_LEN, num_layers=LAYERS,
                               mm_dtype=jnp.bfloat16)
    out_bf16 = jax.block_until_ready(out_bf16)
    assert jnp.allclose(out_bf16, ref, rtol=1e-1, atol=1e-1), (
        float(jnp.max(jnp.abs(out_bf16 - ref))))

    print("KERNEL_OK")
</pallas_src>

<mosaic_0001>
module attributes {stable_mosaic.version = 11 : i64} {
  func.func @fbf_gru_kernel(%arg0: i32, %arg1: memref<8x8x8xf32, #tpu.memory_space<vmem>>, %arg2: memref<8x384xf32, #tpu.memory_space<vmem>>, %arg3: memref<128x384xf32, #tpu.memory_space<vmem>>, %arg4: memref<1x384xf32, #tpu.memory_space<vmem>>, %arg5: memref<1x128xf32, #tpu.memory_space<vmem>>, %arg6: memref<128x384xf32, #tpu.memory_space<vmem>>, %arg7: memref<128x384xf32, #tpu.memory_space<vmem>>, %arg8: memref<1x384xf32, #tpu.memory_space<vmem>>, %arg9: memref<1x128xf32, #tpu.memory_space<vmem>>, %arg10: memref<128x16xf32, #tpu.memory_space<vmem>>, %arg11: memref<1x16xf32, #tpu.memory_space<vmem>>, %arg12: memref<8x16xf32, #tpu.memory_space<vmem>>, %arg13: memref<64x384xf32, #tpu.memory_space<vmem>>, %arg14: memref<64x128xf32, #tpu.memory_space<vmem>>) attributes {dimension_semantics = [#tpu.dimension_semantics<parallel>], iteration_bounds = array<i64: 1>, scalar_prefetch = 0 : i64, scratch_operands = 2 : i64, tpu.core_type = #tpu.core_type<tc>, window_params = [{transform_indices = @transform_0, window_bounds = array<i64: 8, 8, 8>}, {pipeline_mode = #tpu.pipeline_mode<synchronous>, transform_indices = @transform_1, window_bounds = array<i64: 8, 384>}, {pipeline_mode = #tpu.pipeline_mode<synchronous>, transform_indices = @transform_2, window_bounds = array<i64: 128, 384>}, {pipeline_mode = #tpu.pipeline_mode<synchronous>, transform_indices = @transform_3, window_bounds = array<i64: 1, 384>}, {pipeline_mode = #tpu.pipeline_mode<synchronous>, transform_indices = @transform_4, window_bounds = array<i64: 1, 128>}, {pipeline_mode = #tpu.pipeline_mode<synchronous>, transform_indices = @transform_5, window_bounds = array<i64: 128, 384>}, {pipeline_mode = #tpu.pipeline_mode<synchronous>, transform_indices = @transform_6, window_bounds = array<i64: 128, 384>}, {pipeline_mode = #tpu.pipeline_mode<synchronous>, transform_indices = @transform_7, window_bounds = array<i64: 1, 384>}, {pipeline_mode = #tpu.pipeline_mode<synchronous>, transform_indices = @transform_8, window_bounds = array<i64: 1, 128>}, {pipeline_mode = #tpu.pipeline_mode<synchronous>, transform_indices = @transform_9, window_bounds = array<i64: 128, 16>}, {pipeline_mode = #tpu.pipeline_mode<synchronous>, transform_indices = @transform_10, window_bounds = array<i64: 1, 16>}, {transform_indices = @transform_11, window_bounds = array<i64: 8, 16>}]} {
    %cst = arith.constant 0.000000e+00 : f32
    %0 = vector.broadcast %cst : f32 to vector<8x128xf32>
    %c0 = arith.constant 0 : index
    %c0_0 = arith.constant 0 : index
    %1 = vector.load %arg2[%c0, %c0_0] : memref<8x384xf32, #tpu.memory_space<vmem>>, vector<8x384xf32>
    %c0_1 = arith.constant 0 : index
    %c0_2 = arith.constant 0 : index
    %2 = vector.load %arg3[%c0_1, %c0_2] : memref<128x384xf32, #tpu.memory_space<vmem>>, vector<128x384xf32>
    %c0_3 = arith.constant 0 : index
    %c0_4 = arith.constant 0 : index
    %3 = vector.load %arg4[%c0_3, %c0_4] : memref<1x384xf32, #tpu.memory_space<vmem>>, vector<1x384xf32>
    %c0_5 = arith.constant 0 : index
    %c0_6 = arith.constant 0 : index
    %4 = vector.load %arg5[%c0_5, %c0_6] : memref<1x128xf32, #tpu.memory_space<vmem>>, vector<1x128xf32>
    %5 = vector.shape_cast %4 : vector<1x128xf32> to vector<1x128xf32>
    %6 = vector.broadcast %5 : vector<1x128xf32> to vector<8x128xf32>
    %c0_7 = arith.constant 0 : index
    %c0_8 = arith.constant 0 : index
    %c0_9 = arith.constant 0 : index
    %7 = vector.load %arg1[%c0_7, %c0_8, %c0_9] : memref<8x8x8xf32, #tpu.memory_space<vmem>>, vector<8x8x8xf32>
    %8 = vector.shape_cast %7 : vector<8x8x8xf32> to vector<64x8xf32>
    %cst_10 = arith.constant dense<0.000000e+00> : vector<64x384xf32>
    %9 = tpu.matmul %8, %1, %cst_10 {dimension_numbers = #tpu.dot_dimension_numbers<[1], [0], [0], [1], [0, 0, 1, 1], [], []>} : vector<64x8xf32>, vector<8x384xf32>, vector<64x384xf32> -> vector<64x384xf32>
    %10 = vector.broadcast %3 : vector<1x384xf32> to vector<64x384xf32>
    %11 = arith.addf %9, %10 : vector<64x384xf32>
    %c0_11 = arith.constant 0 : index
    %c0_12 = arith.constant 0 : index
    %12 = vector.load %arg13[%c0_11, %c0_12] : memref<64x384xf32, #tpu.memory_space<vmem>>, vector<64x384xf32>
    tpu.vector_store %arg13[%c0_11, %c0_12], %11 {strides = array<i32>} : memref<64x384xf32, #tpu.memory_space<vmem>>, vector<64x384xf32>,
    %c0_i32 = arith.constant 0 : i32
    %c8_i32 = arith.constant 8 : i32
    %13 = arith.muli %c0_i32, %c8_i32 : i32
    %14 = tpu.assume_multiple %13, 8 : i32
    %15 = arith.index_cast %14 : i32 to index
    %c0_13 = arith.constant 0 : index
    %16 = vector.load %arg13[%15, %c0_13] : memref<64x384xf32, #tpu.memory_space<vmem>>, vector<8x384xf32>
    %cst_14 = arith.constant dense<0.000000e+00> : vector<8x384xf32>
    %17 = tpu.matmul %0, %2, %cst_14 {dimension_numbers = #tpu.dot_dimension_numbers<[1], [0], [0], [1], [0, 0, 1, 1], [], []>} : vector<8x128xf32>, vector<128x384xf32>, vector<8x384xf32> -> vector<8x384xf32>
    %18 = vector.extract_strided_slice %16 {offsets = [0, 0], sizes = [8, 128], strides = [1, 1]} : vector<8x384xf32> to vector<8x128xf32>
    %19 = vector.extract_strided_slice %17 {offsets = [0, 0], sizes = [8, 128], strides = [1, 1]} : vector<8x384xf32> to vector<8x128xf32>
    %20 = arith.addf %18, %19 : vector<8x128xf32>
    %21 = arith.negf %20 : vector<8x128xf32>
    %22 = math.exp %21 : vector<8x128xf32>
    %cst_15 = arith.constant 1.000000e+00 : f32
    %23 = vector.broadcast %cst_15 : f32 to vector<8x128xf32>
    %24 = arith.addf %23, %22 : vector<8x128xf32>
    %25 = arith.divf %23, %24 : vector<8x128xf32>
    %26 = vector.extract_strided_slice %16 {offsets = [0, 128], sizes = [8, 128], strides = [1, 1]} : vector<8x384xf32> to vector<8x128xf32>
    %27 = vector.extract_strided_slice %17 {offsets = [0, 128], sizes = [8, 128], strides = [1, 1]} : vector<8x384xf32> to vector<8x128xf32>
    %28 = arith.addf %26, %27 : vector<8x128xf32>
    %29 = arith.negf %28 : vector<8x128xf32>
    %30 = math.exp %29 : vector<8x128xf32>
    %cst_16 = arith.constant 1.000000e+00 : f32
    %31 = vector.broadcast %cst_16 : f32 to vector<8x128xf32>
    %32 = arith.addf %31, %30 : vector<8x128xf32>
    %33 = arith.divf %31, %32 : vector<8x128xf32>
    %34 = vector.extract_strided_slice %16 {offsets = [0, 256], sizes = [8, 128], strides = [1, 1]} : vector<8x384xf32> to vector<8x128xf32>
    %35 = vector.extract_strided_slice %17 {offsets = [0, 256], sizes = [8, 128], strides = [1, 1]} : vector<8x384xf32> to vector<8x128xf32>
    %36 = arith.addf %35, %6 : vector<8x128xf32>
    %37 = arith.mulf %25, %36 : vector<8x128xf32>
    %38 = arith.addf %34, %37 : vector<8x128xf32>
    %39 = math.tanh %38 : vector<8x128xf32>
    %cst_17 = arith.constant 1.000000e+00 : f32
    %40 = vector.broadcast %cst_17 : f32 to vector<8x128xf32>
    %41 = arith.subf %40, %33 : vector<8x128xf32>
    %42 = arith.mulf %41, %39 : vector<8x128xf32>
    %43 = arith.mulf %33, %0 : vector<8x128xf32>
    %44 = arith.addf %42, %43 : vector<8x128xf32>
    %45 = arith.index_cast %14 : i32 to index
    %c0_18 = arith.constant 0 : index
    %46 = vector.load %arg14[%45, %c0_18] : memref<64x128xf32, #tpu.memory_space<vmem>>, vector<8x128xf32>
    tpu.vector_store %arg14[%45, %c0_18], %44 {strides = array<i32>} : memref<64x128xf32, #tpu.memory_space<vmem>>, vector<8x128xf32>,
    %c1_i32 = arith.constant 1 : i32
    %c8_i32_19 = arith.constant 8 : i32
    %47 = arith.muli %c1_i32, %c8_i32_19 : i32
    %48 = tpu.assume_multiple %47, 8 : i32
    %49 = arith.index_cast %48 : i32 to index
    %c0_20 = arith.constant 0 : index
    %50 = vector.load %arg13[%49, %c0_20] : memref<64x384xf32, #tpu.memory_space<vmem>>, vector<8x384xf32>
    %cst_21 = arith.constant dense<0.000000e+00> : vector<8x384xf32>
    %51 = tpu.matmul %44, %2, %cst_21 {dimension_numbers = #tpu.dot_dimension_numbers<[1], [0], [0], [1], [0, 0, 1, 1], [], []>} : vector<8x128xf32>, vector<128x384xf32>, vector<8x384xf32> -> vector<8x384xf32>
    %52 = vector.extract_strided_slice %50 {offsets = [0, 0], sizes = [8, 128], strides = [1, 1]} : vector<8x384xf32> to vector<8x128xf32>
    %53 = vector.extract_strided_slice %51 {offsets = [0, 0], sizes = [8, 128], strides = [1, 1]} : vector<8x384xf32> to vector<8x128xf32>
    %54 = arith.addf %52, %53 : vector<8x128xf32>
    %55 = arith.negf %54 : vector<8x128xf32>
    %56 = math.exp %55 : vector<8x128xf32>
    %cst_22 = arith.constant 1.000000e+00 : f32
    %57 = vector.broadcast %cst_22 : f32 to vector<8x128xf32>
    %58 = arith.addf %57, %56 : vector<8x128xf32>
    %59 = arith.divf %57, %58 : vector<8x128xf32>
    %60 = vector.extract_strided_slice %50 {offsets = [0, 128], sizes = [8, 128], strides = [1, 1]} : vector<8x384xf32> to vector<8x128xf32>
    %61 = vector.extract_strided_slice %51 {offsets = [0, 128], sizes = [8, 128], strides = [1, 1]} : vector<8x384xf32> to vector<8x128xf32>
    %62 = arith.addf %60, %61 : vector<8x128xf32>
    %63 = arith.negf %62 : vector<8x128xf32>
    %64 = math.exp %63 : vector<8x128xf32>
    %cst_23 = arith.constant 1.000000e+00 : f32
    %65 = vector.broadcast %cst_23 : f32 to vector<8x128xf32>
    %66 = arith.addf %65, %64 : vector<8x128xf32>
    %67 = arith.divf %65, %66 : vector<8x128xf32>
    %68 = vector.extract_strided_slice %50 {offsets = [0, 256], sizes = [8, 128], strides = [1, 1]} : vector<8x384xf32> to vector<8x128xf32>
    %69 = vector.extract_strided_slice %51 {offsets = [0, 256], sizes = [8, 128], strides = [1, 1]} : vector<8x384xf32> to vector<8x128xf32>
    %70 = arith.addf %69, %6 : vector<8x128xf32>
    %71 = arith.mulf %59, %70 : vector<8x128xf32>
    %72 = arith.addf %68, %71 : vector<8x128xf32>
    %73 = math.tanh %72 : vector<8x128xf32>
    %cst_24 = arith.constant 1.000000e+00 : f32
    %74 = vector.broadcast %cst_24 : f32 to vector<8x128xf32>
    %75 = arith.subf %74, %67 : vector<8x128xf32>
    %76 = arith.mulf %75, %73 : vector<8x128xf32>
    %77 = arith.mulf %67, %44 : vector<8x128xf32>
    %78 = arith.addf %76, %77 : vector<8x128xf32>
    %79 = arith.index_cast %48 : i32 to index
    %c0_25 = arith.constant 0 : index
    %80 = vector.load %arg14[%79, %c0_25] : memref<64x128xf32, #tpu.memory_space<vmem>>, vector<8x128xf32>
    tpu.vector_store %arg14[%79, %c0_25], %78 {strides = array<i32>} : memref<64x128xf32, #tpu.memory_space<vmem>>, vector<8x128xf32>,
    %c2_i32 = arith.constant 2 : i32
    %c8_i32_26 = arith.constant 8 : i32
    %81 = arith.muli %c2_i32, %c8_i32_26 : i32
    %82 = tpu.assume_multiple %81, 8 : i32
    %83 = arith.index_cast %82 : i32 to index
    %c0_27 = arith.constant 0 : index
    %84 = vector.load %arg13[%83, %c0_27] : memref<64x384xf32, #tpu.memory_space<vmem>>, vector<8x384xf32>
    %cst_28 = arith.constant dense<0.000000e+00> : vector<8x384xf32>
    %85 = tpu.matmul %78, %2, %cst_28 {dimension_numbers = #tpu.dot_dimension_numbers<[1], [0], [0], [1], [0, 0, 1, 1], [], []>} : vector<8x128xf32>, vector<128x384xf32>, vector<8x384xf32> -> vector<8x384xf32>
    %86 = vector.extract_strided_slice %84 {offsets = [0, 0], sizes = [8, 128], strides = [1, 1]} : vector<8x384xf32> to vector<8x128xf32>
    %87 = vector.extract_strided_slice %85 {offsets = [0, 0], sizes = [8, 128], strides = [1, 1]} : vector<8x384xf32> to vector<8x128xf32>
    %88 = arith.addf %86, %87 : vector<8x128xf32>
    %89 = arith.negf %88 : vector<8x128xf32>
    %90 = math.exp %89 : vector<8x128xf32>
    %cst_29 = arith.constant 1.000000e+00 : f32
    %91 = vector.broadcast %cst_29 : f32 to vector<8x128xf32>
    %92 = arith.addf %91, %90 : vector<8x128xf32>
    %93 = arith.divf %91, %92 : vector<8x128xf32>
    %94 = vector.extract_strided_slice %84 {offsets = [0, 128], sizes = [8, 128], strides = [1, 1]} : vector<8x384xf32> to vector<8x128xf32>
    %95 = vector.extract_strided_slice %85 {offsets = [0, 128], sizes = [8, 128], strides = [1, 1]} : vector<8x384xf32> to vector<8x128xf32>
    %96 = arith.addf %94, %95 : vector<8x128xf32>
    %97 = arith.negf %96 : vector<8x128xf32>
    %98 = math.exp %97 : vector<8x128xf32>
    %cst_30 = arith.constant 1.000000e+00 : f32
    %99 = vector.broadcast %cst_30 : f32 to vector<8x128xf32>
    %100 = arith.addf %99, %98 : vector<8x128xf32>
    %101 = arith.divf %99, %100 : vector<8x128xf32>
    %102 = vector.extract_strided_slice %84 {offsets = [0, 256], sizes = [8, 128], strides = [1, 1]} : vector<8x384xf32> to vector<8x128xf32>
    %103 = vector.extract_strided_slice %85 {offsets = [0, 256], sizes = [8, 128], strides = [1, 1]} : vector<8x384xf32> to vector<8x128xf32>
    %104 = arith.addf %103, %6 : vector<8x128xf32>
    %105 = arith.mulf %93, %104 : vector<8x128xf32>
    %106 = arith.addf %102, %105 : vector<8x128xf32>
    %107 = math.tanh %106 : vector<8x128xf32>
    %cst_31 = arith.constant 1.000000e+00 : f32
    %108 = vector.broadcast %cst_31 : f32 to vector<8x128xf32>
    %109 = arith.subf %108, %101 : vector<8x128xf32>
    %110 = arith.mulf %109, %107 : vector<8x128xf32>
    %111 = arith.mulf %101, %78 : vector<8x128xf32>
    %112 = arith.addf %110, %111 : vector<8x128xf32>
    %113 = arith.index_cast %82 : i32 to index
    %c0_32 = arith.constant 0 : index
    %114 = vector.load %arg14[%113, %c0_32] : memref<64x128xf32, #tpu.memory_space<vmem>>, vector<8x128xf32>
    tpu.vector_store %arg14[%113, %c0_32], %112 {strides = array<i32>} : memref<64x128xf32, #tpu.memory_space<vmem>>, vector<8x128xf32>,
    %c3_i32 = arith.constant 3 : i32
    %c8_i32_33 = arith.constant 8 : i32
    %115 = arith.muli %c3_i32, %c8_i32_33 : i32
    %116 = tpu.assume_multiple %115, 8 : i32
    %117 = arith.index_cast %116 : i32 to index
    %c0_34 = arith.constant 0 : index
    %118 = vector.load %arg13[%117, %c0_34] : memref<64x384xf32, #tpu.memory_space<vmem>>, vector<8x384xf32>
    %cst_35 = arith.constant dense<0.000000e+00> : vector<8x384xf32>
    %119 = tpu.matmul %112, %2, %cst_35 {dimension_numbers = #tpu.dot_dimension_numbers<[1], [0], [0], [1], [0, 0, 1, 1], [], []>} : vector<8x128xf32>, vector<128x384xf32>, vector<8x384xf32> -> vector<8x384xf32>
    %120 = vector.extract_strided_slice %118 {offsets = [0, 0], sizes = [8, 128], strides = [1, 1]} : vector<8x384xf32> to vector<8x128xf32>
    %121 = vector.extract_strided_slice %119 {offsets = [0, 0], sizes = [8, 128], strides = [1, 1]} : vector<8x384xf32> to vector<8x128xf32>
    %122 = arith.addf %120, %121 : vector<8x128xf32>
    %123 = arith.negf %122 : vector<8x128xf32>
    %124 = math.exp %123 : vector<8x128xf32>
    %cst_36 = arith.constant 1.000000e+00 : f32
    %125 = vector.broadcast %cst_36 : f32 to vector<8x128xf32>
    %126 = arith.addf %125, %124 : vector<8x128xf32>
    %127 = arith.divf %125, %126 : vector<8x128xf32>
    %128 = vector.extract_strided_slice %118 {offsets = [0, 128], sizes = [8, 128], strides = [1, 1]} : vector<8x384xf32> to vector<8x128xf32>
    %129 = vector.extract_strided_slice %119 {offsets = [0, 128], sizes = [8, 128], strides = [1, 1]} : vector<8x384xf32> to vector<8x128xf32>
    %130 = arith.addf %128, %129 : vector<8x128xf32>
    %131 = arith.negf %130 : vector<8x128xf32>
    %132 = math.exp %131 : vector<8x128xf32>
    %cst_37 = arith.constant 1.000000e+00 : f32
    %133 = vector.broadcast %cst_37 : f32 to vector<8x128xf32>
    %134 = arith.addf %133, %132 : vector<8x128xf32>
    %135 = arith.divf %133, %134 : vector<8x128xf32>
    %136 = vector.extract_strided_slice %118 {offsets = [0, 256], sizes = [8, 128], strides = [1, 1]} : vector<8x384xf32> to vector<8x128xf32>
    %137 = vector.extract_strided_slice %119 {offsets = [0, 256], sizes = [8, 128], strides = [1, 1]} : vector<8x384xf32> to vector<8x128xf32>
    %138 = arith.addf %137, %6 : vector<8x128xf32>
    %139 = arith.mulf %127, %138 : vector<8x128xf32>
    %140 = arith.addf %136, %139 : vector<8x128xf32>
    %141 = math.tanh %140 : vector<8x128xf32>
    %cst_38 = arith.constant 1.000000e+00 : f32
    %142 = vector.broadcast %cst_38 : f32 to vector<8x128xf32>
    %143 = arith.subf %142, %135 : vector<8x128xf32>
    %144 = arith.mulf %143, %141 : vector<8x128xf32>
    %145 = arith.mulf %135, %112 : vector<8x128xf32>
    %146 = arith.addf %144, %145 : vector<8x128xf32>
    %147 = arith.index_cast %116 : i32 to index
    %c0_39 = arith.constant 0 : index
    %148 = vector.load %arg14[%147, %c0_39] : memref<64x128xf32, #tpu.memory_space<vmem>>, vector<8x128xf32>
    tpu.vector_store %arg14[%147, %c0_39], %146 {strides = array<i32>} : memref<64x128xf32, #tpu.memory_space<vmem>>, vector<8x128xf32>,
    %c4_i32 = arith.constant 4 : i32
    %c8_i32_40 = arith.constant 8 : i32
    %149 = arith.muli %c4_i32, %c8_i32_40 : i32
    %150 = tpu.assume_multiple %149, 8 : i32
    %151 = arith.index_cast %150 : i32 to index
    %c0_41 = arith.constant 0 : index
    %152 = vector.load %arg13[%151, %c0_41] : memref<64x384xf32, #tpu.memory_space<vmem>>, vector<8x384xf32>
    %cst_42 = arith.constant dense<0.000000e+00> : vector<8x384xf32>
    %153 = tpu.matmul %146, %2, %cst_42 {dimension_numbers = #tpu.dot_dimension_numbers<[1], [0], [0], [1], [0, 0, 1, 1], [], []>} : vector<8x128xf32>, vector<128x384xf32>, vector<8x384xf32> -> vector<8x384xf32>
    %154 = vector.extract_strided_slice %152 {offsets = [0, 0], sizes = [8, 128], strides = [1, 1]} : vector<8x384xf32> to vector<8x128xf32>
    %155 = vector.extract_strided_slice %153 {offsets = [0, 0], sizes = [8, 128], strides = [1, 1]} : vector<8x384xf32> to vector<8x128xf32>
    %156 = arith.addf %154, %155 : vector<8x128xf32>
    %157 = arith.negf %156 : vector<8x128xf32>
    %158 = math.exp %157 : vector<8x128xf32>
    %cst_43 = arith.constant 1.000000e+00 : f32
    %159 = vector.broadcast %cst_43 : f32 to vector<8x128xf32>
    %160 = arith.addf %159, %158 : vector<8x128xf32>
    %161 = arith.divf %159, %160 : vector<8x128xf32>
    %162 = vector.extract_strided_slice %152 {offsets = [0, 128], sizes = [8, 128], strides = [1, 1]} : vector<8x384xf32> to vector<8x128xf32>
    %163 = vector.extract_strided_slice %153 {offsets = [0, 128], sizes = [8, 128], strides = [1, 1]} : vector<8x384xf32> to vector<8x128xf32>
    %164 = arith.addf %162, %163 : vector<8x128xf32>
    %165 = arith.negf %164 : vector<8x128xf32>
    %166 = math.exp %165 : vector<8x128xf32>
    %cst_44 = arith.constant 1.000000e+00 : f32
    %167 = vector.broadcast %cst_44 : f32 to vector<8x128xf32>
    %168 = arith.addf %167, %166 : vector<8x128xf32>
    %169 = arith.divf %167, %168 : vector<8x128xf32>
    %170 = vector.extract_strided_slice %152 {offsets = [0, 256], sizes = [8, 128], strides = [1, 1]} : vector<8x384xf32> to vector<8x128xf32>
    %171 = vector.extract_strided_slice %153 {offsets = [0, 256], sizes = [8, 128], strides = [1, 1]} : vector<8x384xf32> to vector<8x128xf32>
    %172 = arith.addf %171, %6 : vector<8x128xf32>
    %173 = arith.mulf %161, %172 : vector<8x128xf32>
    %174 = arith.addf %170, %173 : vector<8x128xf32>
    %175 = math.tanh %174 : vector<8x128xf32>
    %cst_45 = arith.constant 1.000000e+00 : f32
    %176 = vector.broadcast %cst_45 : f32 to vector<8x128xf32>
    %177 = arith.subf %176, %169 : vector<8x128xf32>
    %178 = arith.mulf %177, %175 : vector<8x128xf32>
    %179 = arith.mulf %169, %146 : vector<8x128xf32>
    %180 = arith.addf %178, %179 : vector<8x128xf32>
    %181 = arith.index_cast %150 : i32 to index
    %c0_46 = arith.constant 0 : index
    %182 = vector.load %arg14[%181, %c0_46] : memref<64x128xf32, #tpu.memory_space<vmem>>, vector<8x128xf32>
    tpu.vector_store %arg14[%181, %c0_46], %180 {strides = array<i32>} : memref<64x128xf32, #tpu.memory_space<vmem>>, vector<8x128xf32>,
    %c5_i32 = arith.constant 5 : i32
    %c8_i32_47 = arith.constant 8 : i32
    %183 = arith.muli %c5_i32, %c8_i32_47 : i32
    %184 = tpu.assume_multiple %183, 8 : i32
    %185 = arith.index_cast %184 : i32 to index
    %c0_48 = arith.constant 0 : index
    %186 = vector.load %arg13[%185, %c0_48] : memref<64x384xf32, #tpu.memory_space<vmem>>, vector<8x384xf32>
    %cst_49 = arith.constant dense<0.000000e+00> : vector<8x384xf32>
    %187 = tpu.matmul %180, %2, %cst_49 {dimension_numbers = #tpu.dot_dimension_numbers<[1], [0], [0], [1], [0, 0, 1, 1], [], []>} : vector<8x128xf32>, vector<128x384xf32>, vector<8x384xf32> -> vector<8x384xf32>
    %188 = vector.extract_strided_slice %186 {offsets = [0, 0], sizes = [8, 128], strides = [1, 1]} : vector<8x384xf32> to vector<8x128xf32>
    %189 = vector.extract_strided_slice %187 {offsets = [0, 0], sizes = [8, 128], strides = [1, 1]} : vector<8x384xf32> to vector<8x128xf32>
    %190 = arith.addf %188, %189 : vector<8x128xf32>
    %191 = arith.negf %190 : vector<8x128xf32>
    %192 = math.exp %191 : vector<8x128xf32>
    %cst_50 = arith.constant 1.000000e+00 : f32
    %193 = vector.broadcast %cst_50 : f32 to vector<8x128xf32>
    %194 = arith.addf %193, %192 : vector<8x128xf32>
    %195 = arith.divf %193, %194 : vector<8x128xf32>
    %196 = vector.extract_strided_slice %186 {offsets = [0, 128], sizes = [8, 128], strides = [1, 1]} : vector<8x384xf32> to vector<8x128xf32>
    %197 = vector.extract_strided_slice %187 {offsets = [0, 128], sizes = [8, 128], strides = [1, 1]} : vector<8x384xf32> to vector<8x128xf32>
    %198 = arith.addf %196, %197 : vector<8x128xf32>
    %199 = arith.negf %198 : vector<8x128xf32>
    %200 = math.exp %199 : vector<8x128xf32>
    %cst_51 = arith.constant 1.000000e+00 : f32
    %201 = vector.broadcast %cst_51 : f32 to vector<8x128xf32>
    %202 = arith.addf %201, %200 : vector<8x128xf32>
    %203 = arith.divf %201, %202 : vector<8x128xf32>
    %204 = vector.extract_strided_slice %186 {offsets = [0, 256], sizes = [8, 128], strides = [1, 1]} : vector<8x384xf32> to vector<8x128xf32>
    %205 = vector.extract_strided_slice %187 {offsets = [0, 256], sizes = [8, 128], strides = [1, 1]} : vector<8x384xf32> to vector<8x128xf32>
    %206 = arith.addf %205, %6 : vector<8x128xf32>
    %207 = arith.mulf %195, %206 : vector<8x128xf32>
    %208 = arith.addf %204, %207 : vector<8x128xf32>
    %209 = math.tanh %208 : vector<8x128xf32>
    %cst_52 = arith.constant 1.000000e+00 : f32
    %210 = vector.broadcast %cst_52 : f32 to vector<8x128xf32>
    %211 = arith.subf %210, %203 : vector<8x128xf32>
    %212 = arith.mulf %211, %209 : vector<8x128xf32>
    %213 = arith.mulf %203, %180 : vector<8x128xf32>
    %214 = arith.addf %212, %213 : vector<8x128xf32>
    %215 = arith.index_cast %184 : i32 to index
    %c0_53 = arith.constant 0 : index
    %216 = vector.load %arg14[%215, %c0_53] : memref<64x128xf32, #tpu.memory_space<vmem>>, vector<8x128xf32>
    tpu.vector_store %arg14[%215, %c0_53], %214 {strides = array<i32>} : memref<64x128xf32, #tpu.memory_space<vmem>>, vector<8x128xf32>,
    %c6_i32 = arith.constant 6 : i32
    %c8_i32_54 = arith.constant 8 : i32
    %217 = arith.muli %c6_i32, %c8_i32_54 : i32
    %218 = tpu.assume_multiple %217, 8 : i32
    %219 = arith.index_cast %218 : i32 to index
    %c0_55 = arith.constant 0 : index
    %220 = vector.load %arg13[%219, %c0_55] : memref<64x384xf32, #tpu.memory_space<vmem>>, vector<8x384xf32>
    %cst_56 = arith.constant dense<0.000000e+00> : vector<8x384xf32>
    %221 = tpu.matmul %214, %2, %cst_56 {dimension_numbers = #tpu.dot_dimension_numbers<[1], [0], [0], [1], [0, 0, 1, 1], [], []>} : vector<8x128xf32>, vector<128x384xf32>, vector<8x384xf32> -> vector<8x384xf32>
    %222 = vector.extract_strided_slice %220 {offsets = [0, 0], sizes = [8, 128], strides = [1, 1]} : vector<8x384xf32> to vector<8x128xf32>
    %223 = vector.extract_strided_slice %221 {offsets = [0, 0], sizes = [8, 128], strides = [1, 1]} : vector<8x384xf32> to vector<8x128xf32>
    %224 = arith.addf %222, %223 : vector<8x128xf32>
    %225 = arith.negf %224 : vector<8x128xf32>
    %226 = math.exp %225 : vector<8x128xf32>
    %cst_57 = arith.constant 1.000000e+00 : f32
    %227 = vector.broadcast %cst_57 : f32 to vector<8x128xf32>
    %228 = arith.addf %227, %226 : vector<8x128xf32>
    %229 = arith.divf %227, %228 : vector<8x128xf32>
    %230 = vector.extract_strided_slice %220 {offsets = [0, 128], sizes = [8, 128], strides = [1, 1]} : vector<8x384xf32> to vector<8x128xf32>
    %231 = vector.extract_strided_slice %221 {offsets = [0, 128], sizes = [8, 128], strides = [1, 1]} : vector<8x384xf32> to vector<8x128xf32>
    %232 = arith.addf %230, %231 : vector<8x128xf32>
    %233 = arith.negf %232 : vector<8x128xf32>
    %234 = math.exp %233 : vector<8x128xf32>
    %cst_58 = arith.constant 1.000000e+00 : f32
    %235 = vector.broadcast %cst_58 : f32 to vector<8x128xf32>
    %236 = arith.addf %235, %234 : vector<8x128xf32>
    %237 = arith.divf %235, %236 : vector<8x128xf32>
    %238 = vector.extract_strided_slice %220 {offsets = [0, 256], sizes = [8, 128], strides = [1, 1]} : vector<8x384xf32> to vector<8x128xf32>
    %239 = vector.extract_strided_slice %221 {offsets = [0, 256], sizes = [8, 128], strides = [1, 1]} : vector<8x384xf32> to vector<8x128xf32>
    %240 = arith.addf %239, %6 : vector<8x128xf32>
    %241 = arith.mulf %229, %240 : vector<8x128xf32>
    %242 = arith.addf %238, %241 : vector<8x128xf32>
    %243 = math.tanh %242 : vector<8x128xf32>
    %cst_59 = arith.constant 1.000000e+00 : f32
    %244 = vector.broadcast %cst_59 : f32 to vector<8x128xf32>
    %245 = arith.subf %244, %237 : vector<8x128xf32>
    %246 = arith.mulf %245, %243 : vector<8x128xf32>
    %247 = arith.mulf %237, %214 : vector<8x128xf32>
    %248 = arith.addf %246, %247 : vector<8x128xf32>
    %249 = arith.index_cast %218 : i32 to index
    %c0_60 = arith.constant 0 : index
    %250 = vector.load %arg14[%249, %c0_60] : memref<64x128xf32, #tpu.memory_space<vmem>>, vector<8x128xf32>
    tpu.vector_store %arg14[%249, %c0_60], %248 {strides = array<i32>} : memref<64x128xf32, #tpu.memory_space<vmem>>, vector<8x128xf32>,
    %c7_i32 = arith.constant 7 : i32
    %c8_i32_61 = arith.constant 8 : i32
    %251 = arith.muli %c7_i32, %c8_i32_61 : i32
    %252 = tpu.assume_multiple %251, 8 : i32
    %253 = arith.index_cast %252 : i32 to index
    %c0_62 = arith.constant 0 : index
    %254 = vector.load %arg13[%253, %c0_62] : memref<64x384xf32, #tpu.memory_space<vmem>>, vector<8x384xf32>
    %cst_63 = arith.constant dense<0.000000e+00> : vector<8x384xf32>
    %255 = tpu.matmul %248, %2, %cst_63 {dimension_numbers = #tpu.dot_dimension_numbers<[1], [0], [0], [1], [0, 0, 1, 1], [], []>} : vector<8x128xf32>, vector<128x384xf32>, vector<8x384xf32> -> vector<8x384xf32>
    %256 = vector.extract_strided_slice %254 {offsets = [0, 0], sizes = [8, 128], strides = [1, 1]} : vector<8x384xf32> to vector<8x128xf32>
    %257 = vector.extract_strided_slice %255 {offsets = [0, 0], sizes = [8, 128], strides = [1, 1]} : vector<8x384xf32> to vector<8x128xf32>
    %258 = arith.addf %256, %257 : vector<8x128xf32>
    %259 = arith.negf %258 : vector<8x128xf32>
    %260 = math.exp %259 : vector<8x128xf32>
    %cst_64 = arith.constant 1.000000e+00 : f32
    %261 = vector.broadcast %cst_64 : f32 to vector<8x128xf32>
    %262 = arith.addf %261, %260 : vector<8x128xf32>
    %263 = arith.divf %261, %262 : vector<8x128xf32>
    %264 = vector.extract_strided_slice %254 {offsets = [0, 128], sizes = [8, 128], strides = [1, 1]} : vector<8x384xf32> to vector<8x128xf32>
    %265 = vector.extract_strided_slice %255 {offsets = [0, 128], sizes = [8, 128], strides = [1, 1]} : vector<8x384xf32> to vector<8x128xf32>
    %266 = arith.addf %264, %265 : vector<8x128xf32>
    %267 = arith.negf %266 : vector<8x128xf32>
    %268 = math.exp %267 : vector<8x128xf32>
    %cst_65 = arith.constant 1.000000e+00 : f32
    %269 = vector.broadcast %cst_65 : f32 to vector<8x128xf32>
    %270 = arith.addf %269, %268 : vector<8x128xf32>
    %271 = arith.divf %269, %270 : vector<8x128xf32>
    %272 = vector.extract_strided_slice %254 {offsets = [0, 256], sizes = [8, 128], strides = [1, 1]} : vector<8x384xf32> to vector<8x128xf32>
    %273 = vector.extract_strided_slice %255 {offsets = [0, 256], sizes = [8, 128], strides = [1, 1]} : vector<8x384xf32> to vector<8x128xf32>
    %274 = arith.addf %273, %6 : vector<8x128xf32>
    %275 = arith.mulf %263, %274 : vector<8x128xf32>
    %276 = arith.addf %272, %275 : vector<8x128xf32>
    %277 = math.tanh %276 : vector<8x128xf32>
    %cst_66 = arith.constant 1.000000e+00 : f32
    %278 = vector.broadcast %cst_66 : f32 to vector<8x128xf32>
    %279 = arith.subf %278, %271 : vector<8x128xf32>
    %280 = arith.mulf %279, %277 : vector<8x128xf32>
    %281 = arith.mulf %271, %248 : vector<8x128xf32>
    %282 = arith.addf %280, %281 : vector<8x128xf32>
    %283 = arith.index_cast %252 : i32 to index
    %c0_67 = arith.constant 0 : index
    %284 = vector.load %arg14[%283, %c0_67] : memref<64x128xf32, #tpu.memory_space<vmem>>, vector<8x128xf32>
    tpu.vector_store %arg14[%283, %c0_67], %282 {strides = array<i32>} : memref<64x128xf32, #tpu.memory_space<vmem>>, vector<8x128xf32>,
    %c8_i32_68 = arith.constant 8 : i32
    %c0_69 = arith.constant 0 : index
    %c0_70 = arith.constant 0 : index
    %285 = vector.load %arg6[%c0_69, %c0_70] : memref<128x384xf32, #tpu.memory_space<vmem>>, vector<128x384xf32>
    %c0_71 = arith.constant 0 : index
    %c0_72 = arith.constant 0 : index
    %286 = vector.load %arg7[%c0_71, %c0_72] : memref<128x384xf32, #tpu.memory_space<vmem>>, vector<128x384xf32>
    %c0_73 = arith.constant 0 : index
    %c0_74 = arith.constant 0 : index
    %287 = vector.load %arg8[%c0_73, %c0_74] : memref<1x384xf32, #tpu.memory_space<vmem>>, vector<1x384xf32>
    %c0_75 = arith.constant 0 : index
    %c0_76 = arith.constant 0 : index
    %288 = vector.load %arg9[%c0_75, %c0_76] : memref<1x128xf32, #tpu.memory_space<vmem>>, vector<1x128xf32>
    %289 = vector.shape_cast %288 : vector<1x128xf32> to vector<1x128xf32>
    %290 = vector.broadcast %289 : vector<1x128xf32> to vector<8x128xf32>
    %c0_77 = arith.constant 0 : index
    %c0_78 = arith.constant 0 : index
    %291 = vector.load %arg14[%c0_77, %c0_78] : memref<64x128xf32, #tpu.memory_space<vmem>>, vector<64x128xf32>
    %cst_79 = arith.constant dense<0.000000e+00> : vector<64x384xf32>
    %292 = tpu.matmul %291, %285, %cst_79 {dimension_numbers = #tpu.dot_dimension_numbers<[1], [0], [0], [1], [0, 0, 1, 1], [], []>} : vector<64x128xf32>, vector<128x384xf32>, vector<64x384xf32> -> vector<64x384xf32>
    %293 = vector.broadcast %287 : vector<1x384xf32> to vector<64x384xf32>
    %294 = arith.addf %292, %293 : vector<64x384xf32>
    %c0_80 = arith.constant 0 : index
    %c0_81 = arith.constant 0 : index
    %295 = vector.load %arg13[%c0_80, %c0_81] : memref<64x384xf32, #tpu.memory_space<vmem>>, vector<64x384xf32>
    tpu.vector_store %arg13[%c0_80, %c0_81], %294 {strides = array<i32>} : memref<64x384xf32, #tpu.memory_space<vmem>>, vector<64x384xf32>,
    %c0_i32_82 = arith.constant 0 : i32
    %c8_i32_83 = arith.constant 8 : i32
    %296 = arith.muli %c0_i32_82, %c8_i32_83 : i32
    %297 = tpu.assume_multiple %296, 8 : i32
    %298 = arith.index_cast %297 : i32 to index
    %c0_84 = arith.constant 0 : index
    %299 = vector.load %arg13[%298, %c0_84] : memref<64x384xf32, #tpu.memory_space<vmem>>, vector<8x384xf32>
    %cst_85 = arith.constant dense<0.000000e+00> : vector<8x384xf32>
    %300 = tpu.matmul %0, %286, %cst_85 {dimension_numbers = #tpu.dot_dimension_numbers<[1], [0], [0], [1], [0, 0, 1, 1], [], []>} : vector<8x128xf32>, vector<128x384xf32>, vector<8x384xf32> -> vector<8x384xf32>
    %301 = vector.extract_strided_slice %299 {offsets = [0, 0], sizes = [8, 128], strides = [1, 1]} : vector<8x384xf32> to vector<8x128xf32>
    %302 = vector.extract_strided_slice %300 {offsets = [0, 0], sizes = [8, 128], strides = [1, 1]} : vector<8x384xf32> to vector<8x128xf32>
    %303 = arith.addf %301, %302 : vector<8x128xf32>
    %304 = arith.negf %303 : vector<8x128xf32>
    %305 = math.exp %304 : vector<8x128xf32>
    %cst_86 = arith.constant 1.000000e+00 : f32
    %306 = vector.broadcast %cst_86 : f32 to vector<8x128xf32>
    %307 = arith.addf %306, %305 : vector<8x128xf32>
    %308 = arith.divf %306, %307 : vector<8x128xf32>
    %309 = vector.extract_strided_slice %299 {offsets = [0, 128], sizes = [8, 128], strides = [1, 1]} : vector<8x384xf32> to vector<8x128xf32>
    %310 = vector.extract_strided_slice %300 {offsets = [0, 128], sizes = [8, 128], strides = [1, 1]} : vector<8x384xf32> to vector<8x128xf32>
    %311 = arith.addf %309, %310 : vector<8x128xf32>
    %312 = arith.negf %311 : vector<8x128xf32>
    %313 = math.exp %312 : vector<8x128xf32>
    %cst_87 = arith.constant 1.000000e+00 : f32
    %314 = vector.broadcast %cst_87 : f32 to vector<8x128xf32>
    %315 = arith.addf %314, %313 : vector<8x128xf32>
    %316 = arith.divf %314, %315 : vector<8x128xf32>
    %317 = vector.extract_strided_slice %299 {offsets = [0, 256], sizes = [8, 128], strides = [1, 1]} : vector<8x384xf32> to vector<8x128xf32>
    %318 = vector.extract_strided_slice %300 {offsets = [0, 256], sizes = [8, 128], strides = [1, 1]} : vector<8x384xf32> to vector<8x128xf32>
    %319 = arith.addf %318, %290 : vector<8x128xf32>
    %320 = arith.mulf %308, %319 : vector<8x128xf32>
    %321 = arith.addf %317, %320 : vector<8x128xf32>
    %322 = math.tanh %321 : vector<8x128xf32>
    %cst_88 = arith.constant 1.000000e+00 : f32
    %323 = vector.broadcast %cst_88 : f32 to vector<8x128xf32>
    %324 = arith.subf %323, %316 : vector<8x128xf32>
    %325 = arith.mulf %324, %322 : vector<8x128xf32>
    %326 = arith.mulf %316, %0 : vector<8x128xf32>
    %327 = arith.addf %325, %326 : vector<8x128xf32>
    %c1_i32_89 = arith.constant 1 : i32
    %c8_i32_90 = arith.constant 8 : i32
    %328 = arith.muli %c1_i32_89, %c8_i32_90 : i32
    %329 = tpu.assume_multiple %328, 8 : i32
    %330 = arith.index_cast %329 : i32 to index
    %c0_91 = arith.constant 0 : index
    %331 = vector.load %arg13[%330, %c0_91] : memref<64x384xf32, #tpu.memory_space<vmem>>, vector<8x384xf32>
    %cst_92 = arith.constant dense<0.000000e+00> : vector<8x384xf32>
    %332 = tpu.matmul %327, %286, %cst_92 {dimension_numbers = #tpu.dot_dimension_numbers<[1], [0], [0], [1], [0, 0, 1, 1], [], []>} : vector<8x128xf32>, vector<128x384xf32>, vector<8x384xf32> -> vector<8x384xf32>
    %333 = vector.extract_strided_slice %331 {offsets = [0, 0], sizes = [8, 128], strides = [1, 1]} : vector<8x384xf32> to vector<8x128xf32>
    %334 = vector.extract_strided_slice %332 {offsets = [0, 0], sizes = [8, 128], strides = [1, 1]} : vector<8x384xf32> to vector<8x128xf32>
    %335 = arith.addf %333, %334 : vector<8x128xf32>
    %336 = arith.negf %335 : vector<8x128xf32>
    %337 = math.exp %336 : vector<8x128xf32>
    %cst_93 = arith.constant 1.000000e+00 : f32
    %338 = vector.broadcast %cst_93 : f32 to vector<8x128xf32>
    %339 = arith.addf %338, %337 : vector<8x128xf32>
    %340 = arith.divf %338, %339 : vector<8x128xf32>
    %341 = vector.extract_strided_slice %331 {offsets = [0, 128], sizes = [8, 128], strides = [1, 1]} : vector<8x384xf32> to vector<8x128xf32>
    %342 = vector.extract_strided_slice %332 {offsets = [0, 128], sizes = [8, 128], strides = [1, 1]} : vector<8x384xf32> to vector<8x128xf32>
    %343 = arith.addf %341, %342 : vector<8x128xf32>
    %344 = arith.negf %343 : vector<8x128xf32>
    %345 = math.exp %344 : vector<8x128xf32>
    %cst_94 = arith.constant 1.000000e+00 : f32
    %346 = vector.broadcast %cst_94 : f32 to vector<8x128xf32>
    %347 = arith.addf %346, %345 : vector<8x128xf32>
    %348 = arith.divf %346, %347 : vector<8x128xf32>
    %349 = vector.extract_strided_slice %331 {offsets = [0, 256], sizes = [8, 128], strides = [1, 1]} : vector<8x384xf32> to vector<8x128xf32>
    %350 = vector.extract_strided_slice %332 {offsets = [0, 256], sizes = [8, 128], strides = [1, 1]} : vector<8x384xf32> to vector<8x128xf32>
    %351 = arith.addf %350, %290 : vector<8x128xf32>
    %352 = arith.mulf %340, %351 : vector<8x128xf32>
    %353 = arith.addf %349, %352 : vector<8x128xf32>
    %354 = math.tanh %353 : vector<8x128xf32>
    %cst_95 = arith.constant 1.000000e+00 : f32
    %355 = vector.broadcast %cst_95 : f32 to vector<8x128xf32>
    %356 = arith.subf %355, %348 : vector<8x128xf32>
    %357 = arith.mulf %356, %354 : vector<8x128xf32>
    %358 = arith.mulf %348, %327 : vector<8x128xf32>
    %359 = arith.addf %357, %358 : vector<8x128xf32>
    %c2_i32_96 = arith.constant 2 : i32
    %c8_i32_97 = arith.constant 8 : i32
    %360 = arith.muli %c2_i32_96, %c8_i32_97 : i32
    %361 = tpu.assume_multiple %360, 8 : i32
    %362 = arith.index_cast %361 : i32 to index
    %c0_98 = arith.constant 0 : index
    %363 = vector.load %arg13[%362, %c0_98] : memref<64x384xf32, #tpu.memory_space<vmem>>, vector<8x384xf32>
    %cst_99 = arith.constant dense<0.000000e+00> : vector<8x384xf32>
    %364 = tpu.matmul %359, %286, %cst_99 {dimension_numbers = #tpu.dot_dimension_numbers<[1], [0], [0], [1], [0, 0, 1, 1], [], []>} : vector<8x128xf32>, vector<128x384xf32>, vector<8x384xf32> -> vector<8x384xf32>
    %365 = vector.extract_strided_slice %363 {offsets = [0, 0], sizes = [8, 128], strides = [1, 1]} : vector<8x384xf32> to vector<8x128xf32>
    %366 = vector.extract_strided_slice %364 {offsets = [0, 0], sizes = [8, 128], strides = [1, 1]} : vector<8x384xf32> to vector<8x128xf32>
    %367 = arith.addf %365, %366 : vector<8x128xf32>
    %368 = arith.negf %367 : vector<8x128xf32>
    %369 = math.exp %368 : vector<8x128xf32>
    %cst_100 = arith.constant 1.000000e+00 : f32
    %370 = vector.broadcast %cst_100 : f32 to vector<8x128xf32>
    %371 = arith.addf %370, %369 : vector<8x128xf32>
    %372 = arith.divf %370, %371 : vector<8x128xf32>
    %373 = vector.extract_strided_slice %363 {offsets = [0, 128], sizes = [8, 128], strides = [1, 1]} : vector<8x384xf32> to vector<8x128xf32>
    %374 = vector.extract_strided_slice %364 {offsets = [0, 128], sizes = [8, 128], strides = [1, 1]} : vector<8x384xf32> to vector<8x128xf32>
    %375 = arith.addf %373, %374 : vector<8x128xf32>
    %376 = arith.negf %375 : vector<8x128xf32>
    %377 = math.exp %376 : vector<8x128xf32>
    %cst_101 = arith.constant 1.000000e+00 : f32
    %378 = vector.broadcast %cst_101 : f32 to vector<8x128xf32>
    %379 = arith.addf %378, %377 : vector<8x128xf32>
    %380 = arith.divf %378, %379 : vector<8x128xf32>
    %381 = vector.extract_strided_slice %363 {offsets = [0, 256], sizes = [8, 128], strides = [1, 1]} : vector<8x384xf32> to vector<8x128xf32>
    %382 = vector.extract_strided_slice %364 {offsets = [0, 256], sizes = [8, 128], strides = [1, 1]} : vector<8x384xf32> to vector<8x128xf32>
    %383 = arith.addf %382, %290 : vector<8x128xf32>
    %384 = arith.mulf %372, %383 : vector<8x128xf32>
    %385 = arith.addf %381, %384 : vector<8x128xf32>
    %386 = math.tanh %385 : vector<8x128xf32>
    %cst_102 = arith.constant 1.000000e+00 : f32
    %387 = vector.broadcast %cst_102 : f32 to vector<8x128xf32>
    %388 = arith.subf %387, %380 : vector<8x128xf32>
    %389 = arith.mulf %388, %386 : vector<8x128xf32>
    %390 = arith.mulf %380, %359 : vector<8x128xf32>
    %391 = arith.addf %389, %390 : vector<8x128xf32>
    %c3_i32_103 = arith.constant 3 : i32
    %c8_i32_104 = arith.constant 8 : i32
    %392 = arith.muli %c3_i32_103, %c8_i32_104 : i32
    %393 = tpu.assume_multiple %392, 8 : i32
    %394 = arith.index_cast %393 : i32 to index
    %c0_105 = arith.constant 0 : index
    %395 = vector.load %arg13[%394, %c0_105] : memref<64x384xf32, #tpu.memory_space<vmem>>, vector<8x384xf32>
    %cst_106 = arith.constant dense<0.000000e+00> : vector<8x384xf32>
    %396 = tpu.matmul %391, %286, %cst_106 {dimension_numbers = #tpu.dot_dimension_numbers<[1], [0], [0], [1], [0, 0, 1, 1], [], []>} : vector<8x128xf32>, vector<128x384xf32>, vector<8x384xf32> -> vector<8x384xf32>
    %397 = vector.extract_strided_slice %395 {offsets = [0, 0], sizes = [8, 128], strides = [1, 1]} : vector<8x384xf32> to vector<8x128xf32>
    %398 = vector.extract_strided_slice %396 {offsets = [0, 0], sizes = [8, 128], strides = [1, 1]} : vector<8x384xf32> to vector<8x128xf32>
    %399 = arith.addf %397, %398 : vector<8x128xf32>
    %400 = arith.negf %399 : vector<8x128xf32>
    %401 = math.exp %400 : vector<8x128xf32>
    %cst_107 = arith.constant 1.000000e+00 : f32
    %402 = vector.broadcast %cst_107 : f32 to vector<8x128xf32>
    %403 = arith.addf %402, %401 : vector<8x128xf32>
    %404 = arith.divf %402, %403 : vector<8x128xf32>
    %405 = vector.extract_strided_slice %395 {offsets = [0, 128], sizes = [8, 128], strides = [1, 1]} : vector<8x384xf32> to vector<8x128xf32>
    %406 = vector.extract_strided_slice %396 {offsets = [0, 128], sizes = [8, 128], strides = [1, 1]} : vector<8x384xf32> to vector<8x128xf32>
    %407 = arith.addf %405, %406 : vector<8x128xf32>
    %408 = arith.negf %407 : vector<8x128xf32>
    %409 = math.exp %408 : vector<8x128xf32>
    %cst_108 = arith.constant 1.000000e+00 : f32
    %410 = vector.broadcast %cst_108 : f32 to vector<8x128xf32>
    %411 = arith.addf %410, %409 : vector<8x128xf32>
    %412 = arith.divf %410, %411 : vector<8x128xf32>
    %413 = vector.extract_strided_slice %395 {offsets = [0, 256], sizes = [8, 128], strides = [1, 1]} : vector<8x384xf32> to vector<8x128xf32>
    %414 = vector.extract_strided_slice %396 {offsets = [0, 256], sizes = [8, 128], strides = [1, 1]} : vector<8x384xf32> to vector<8x128xf32>
    %415 = arith.addf %414, %290 : vector<8x128xf32>
    %416 = arith.mulf %404, %415 : vector<8x128xf32>
    %417 = arith.addf %413, %416 : vector<8x128xf32>
    %418 = math.tanh %417 : vector<8x128xf32>
    %cst_109 = arith.constant 1.000000e+00 : f32
    %419 = vector.broadcast %cst_109 : f32 to vector<8x128xf32>
    %420 = arith.subf %419, %412 : vector<8x128xf32>
    %421 = arith.mulf %420, %418 : vector<8x128xf32>
    %422 = arith.mulf %412, %391 : vector<8x128xf32>
    %423 = arith.addf %421, %422 : vector<8x128xf32>
    %c4_i32_110 = arith.constant 4 : i32
    %c8_i32_111 = arith.constant 8 : i32
    %424 = arith.muli %c4_i32_110, %c8_i32_111 : i32
    %425 = tpu.assume_multiple %424, 8 : i32
    %426 = arith.index_cast %425 : i32 to index
    %c0_112 = arith.constant 0 : index
    %427 = vector.load %arg13[%426, %c0_112] : memref<64x384xf32, #tpu.memory_space<vmem>>, vector<8x384xf32>
    %cst_113 = arith.constant dense<0.000000e+00> : vector<8x384xf32>
    %428 = tpu.matmul %423, %286, %cst_113 {dimension_numbers = #tpu.dot_dimension_numbers<[1], [0], [0], [1], [0, 0, 1, 1], [], []>} : vector<8x128xf32>, vector<128x384xf32>, vector<8x384xf32> -> vector<8x384xf32>
    %429 = vector.extract_strided_slice %427 {offsets = [0, 0], sizes = [8, 128], strides = [1, 1]} : vector<8x384xf32> to vector<8x128xf32>
    %430 = vector.extract_strided_slice %428 {offsets = [0, 0], sizes = [8, 128], strides = [1, 1]} : vector<8x384xf32> to vector<8x128xf32>
    %431 = arith.addf %429, %430 : vector<8x128xf32>
    %432 = arith.negf %431 : vector<8x128xf32>
    %433 = math.exp %432 : vector<8x128xf32>
    %cst_114 = arith.constant 1.000000e+00 : f32
    %434 = vector.broadcast %cst_114 : f32 to vector<8x128xf32>
    %435 = arith.addf %434, %433 : vector<8x128xf32>
    %436 = arith.divf %434, %435 : vector<8x128xf32>
    %437 = vector.extract_strided_slice %427 {offsets = [0, 128], sizes = [8, 128], strides = [1, 1]} : vector<8x384xf32> to vector<8x128xf32>
    %438 = vector.extract_strided_slice %428 {offsets = [0, 128], sizes = [8, 128], strides = [1, 1]} : vector<8x384xf32> to vector<8x128xf32>
    %439 = arith.addf %437, %438 : vector<8x128xf32>
    %440 = arith.negf %439 : vector<8x128xf32>
    %441 = math.exp %440 : vector<8x128xf32>
    %cst_115 = arith.constant 1.000000e+00 : f32
    %442 = vector.broadcast %cst_115 : f32 to vector<8x128xf32>
    %443 = arith.addf %442, %441 : vector<8x128xf32>
    %444 = arith.divf %442, %443 : vector<8x128xf32>
    %445 = vector.extract_strided_slice %427 {offsets = [0, 256], sizes = [8, 128], strides = [1, 1]} : vector<8x384xf32> to vector<8x128xf32>
    %446 = vector.extract_strided_slice %428 {offsets = [0, 256], sizes = [8, 128], strides = [1, 1]} : vector<8x384xf32> to vector<8x128xf32>
    %447 = arith.addf %446, %290 : vector<8x128xf32>
    %448 = arith.mulf %436, %447 : vector<8x128xf32>
    %449 = arith.addf %445, %448 : vector<8x128xf32>
    %450 = math.tanh %449 : vector<8x128xf32>
    %cst_116 = arith.constant 1.000000e+00 : f32
    %451 = vector.broadcast %cst_116 : f32 to vector<8x128xf32>
    %452 = arith.subf %451, %444 : vector<8x128xf32>
    %453 = arith.mulf %452, %450 : vector<8x128xf32>
    %454 = arith.mulf %444, %423 : vector<8x128xf32>
    %455 = arith.addf %453, %454 : vector<8x128xf32>
    %c5_i32_117 = arith.constant 5 : i32
    %c8_i32_118 = arith.constant 8 : i32
    %456 = arith.muli %c5_i32_117, %c8_i32_118 : i32
    %457 = tpu.assume_multiple %456, 8 : i32
    %458 = arith.index_cast %457 : i32 to index
    %c0_119 = arith.constant 0 : index
    %459 = vector.load %arg13[%458, %c0_119] : memref<64x384xf32, #tpu.memory_space<vmem>>, vector<8x384xf32>
    %cst_120 = arith.constant dense<0.000000e+00> : vector<8x384xf32>
    %460 = tpu.matmul %455, %286, %cst_120 {dimension_numbers = #tpu.dot_dimension_numbers<[1], [0], [0], [1], [0, 0, 1, 1], [], []>} : vector<8x128xf32>, vector<128x384xf32>, vector<8x384xf32> -> vector<8x384xf32>
    %461 = vector.extract_strided_slice %459 {offsets = [0, 0], sizes = [8, 128], strides = [1, 1]} : vector<8x384xf32> to vector<8x128xf32>
    %462 = vector.extract_strided_slice %460 {offsets = [0, 0], sizes = [8, 128], strides = [1, 1]} : vector<8x384xf32> to vector<8x128xf32>
    %463 = arith.addf %461, %462 : vector<8x128xf32>
    %464 = arith.negf %463 : vector<8x128xf32>
    %465 = math.exp %464 : vector<8x128xf32>
    %cst_121 = arith.constant 1.000000e+00 : f32
    %466 = vector.broadcast %cst_121 : f32 to vector<8x128xf32>
    %467 = arith.addf %466, %465 : vector<8x128xf32>
    %468 = arith.divf %466, %467 : vector<8x128xf32>
    %469 = vector.extract_strided_slice %459 {offsets = [0, 128], sizes = [8, 128], strides = [1, 1]} : vector<8x384xf32> to vector<8x128xf32>
    %470 = vector.extract_strided_slice %460 {offsets = [0, 128], sizes = [8, 128], strides = [1, 1]} : vector<8x384xf32> to vector<8x128xf32>
    %471 = arith.addf %469, %470 : vector<8x128xf32>
    %472 = arith.negf %471 : vector<8x128xf32>
    %473 = math.exp %472 : vector<8x128xf32>
    %cst_122 = arith.constant 1.000000e+00 : f32
    %474 = vector.broadcast %cst_122 : f32 to vector<8x128xf32>
    %475 = arith.addf %474, %473 : vector<8x128xf32>
    %476 = arith.divf %474, %475 : vector<8x128xf32>
    %477 = vector.extract_strided_slice %459 {offsets = [0, 256], sizes = [8, 128], strides = [1, 1]} : vector<8x384xf32> to vector<8x128xf32>
    %478 = vector.extract_strided_slice %460 {offsets = [0, 256], sizes = [8, 128], strides = [1, 1]} : vector<8x384xf32> to vector<8x128xf32>
    %479 = arith.addf %478, %290 : vector<8x128xf32>
    %480 = arith.mulf %468, %479 : vector<8x128xf32>
    %481 = arith.addf %477, %480 : vector<8x128xf32>
    %482 = math.tanh %481 : vector<8x128xf32>
    %cst_123 = arith.constant 1.000000e+00 : f32
    %483 = vector.broadcast %cst_123 : f32 to vector<8x128xf32>
    %484 = arith.subf %483, %476 : vector<8x128xf32>
    %485 = arith.mulf %484, %482 : vector<8x128xf32>
    %486 = arith.mulf %476, %455 : vector<8x128xf32>
    %487 = arith.addf %485, %486 : vector<8x128xf32>
    %c6_i32_124 = arith.constant 6 : i32
    %c8_i32_125 = arith.constant 8 : i32
    %488 = arith.muli %c6_i32_124, %c8_i32_125 : i32
    %489 = tpu.assume_multiple %488, 8 : i32
    %490 = arith.index_cast %489 : i32 to index
    %c0_126 = arith.constant 0 : index
    %491 = vector.load %arg13[%490, %c0_126] : memref<64x384xf32, #tpu.memory_space<vmem>>, vector<8x384xf32>
    %cst_127 = arith.constant dense<0.000000e+00> : vector<8x384xf32>
    %492 = tpu.matmul %487, %286, %cst_127 {dimension_numbers = #tpu.dot_dimension_numbers<[1], [0], [0], [1], [0, 0, 1, 1], [], []>} : vector<8x128xf32>, vector<128x384xf32>, vector<8x384xf32> -> vector<8x384xf32>
    %493 = vector.extract_strided_slice %491 {offsets = [0, 0], sizes = [8, 128], strides = [1, 1]} : vector<8x384xf32> to vector<8x128xf32>
    %494 = vector.extract_strided_slice %492 {offsets = [0, 0], sizes = [8, 128], strides = [1, 1]} : vector<8x384xf32> to vector<8x128xf32>
    %495 = arith.addf %493, %494 : vector<8x128xf32>
    %496 = arith.negf %495 : vector<8x128xf32>
    %497 = math.exp %496 : vector<8x128xf32>
    %cst_128 = arith.constant 1.000000e+00 : f32
    %498 = vector.broadcast %cst_128 : f32 to vector<8x128xf32>
    %499 = arith.addf %498, %497 : vector<8x128xf32>
    %500 = arith.divf %498, %499 : vector<8x128xf32>
    %501 = vector.extract_strided_slice %491 {offsets = [0, 128], sizes = [8, 128], strides = [1, 1]} : vector<8x384xf32> to vector<8x128xf32>
    %502 = vector.extract_strided_slice %492 {offsets = [0, 128], sizes = [8, 128], strides = [1, 1]} : vector<8x384xf32> to vector<8x128xf32>
    %503 = arith.addf %501, %502 : vector<8x128xf32>
    %504 = arith.negf %503 : vector<8x128xf32>
    %505 = math.exp %504 : vector<8x128xf32>
    %cst_129 = arith.constant 1.000000e+00 : f32
    %506 = vector.broadcast %cst_129 : f32 to vector<8x128xf32>
    %507 = arith.addf %506, %505 : vector<8x128xf32>
    %508 = arith.divf %506, %507 : vector<8x128xf32>
    %509 = vector.extract_strided_slice %491 {offsets = [0, 256], sizes = [8, 128], strides = [1, 1]} : vector<8x384xf32> to vector<8x128xf32>
    %510 = vector.extract_strided_slice %492 {offsets = [0, 256], sizes = [8, 128], strides = [1, 1]} : vector<8x384xf32> to vector<8x128xf32>
    %511 = arith.addf %510, %290 : vector<8x128xf32>
    %512 = arith.mulf %500, %511 : vector<8x128xf32>
    %513 = arith.addf %509, %512 : vector<8x128xf32>
    %514 = math.tanh %513 : vector<8x128xf32>
    %cst_130 = arith.constant 1.000000e+00 : f32
    %515 = vector.broadcast %cst_130 : f32 to vector<8x128xf32>
    %516 = arith.subf %515, %508 : vector<8x128xf32>
    %517 = arith.mulf %516, %514 : vector<8x128xf32>
    %518 = arith.mulf %508, %487 : vector<8x128xf32>
    %519 = arith.addf %517, %518 : vector<8x128xf32>
    %c7_i32_131 = arith.constant 7 : i32
    %c8_i32_132 = arith.constant 8 : i32
    %520 = arith.muli %c7_i32_131, %c8_i32_132 : i32
    %521 = tpu.assume_multiple %520, 8 : i32
    %522 = arith.index_cast %521 : i32 to index
    %c0_133 = arith.constant 0 : index
    %523 = vector.load %arg13[%522, %c0_133] : memref<64x384xf32, #tpu.memory_space<vmem>>, vector<8x384xf32>
    %cst_134 = arith.constant dense<0.000000e+00> : vector<8x384xf32>
    %524 = tpu.matmul %519, %286, %cst_134 {dimension_numbers = #tpu.dot_dimension_numbers<[1], [0], [0], [1], [0, 0, 1, 1], [], []>} : vector<8x128xf32>, vector<128x384xf32>, vector<8x384xf32> -> vector<8x384xf32>
    %525 = vector.extract_strided_slice %523 {offsets = [0, 0], sizes = [8, 128], strides = [1, 1]} : vector<8x384xf32> to vector<8x128xf32>
    %526 = vector.extract_strided_slice %524 {offsets = [0, 0], sizes = [8, 128], strides = [1, 1]} : vector<8x384xf32> to vector<8x128xf32>
    %527 = arith.addf %525, %526 : vector<8x128xf32>
    %528 = arith.negf %527 : vector<8x128xf32>
    %529 = math.exp %528 : vector<8x128xf32>
    %cst_135 = arith.constant 1.000000e+00 : f32
    %530 = vector.broadcast %cst_135 : f32 to vector<8x128xf32>
    %531 = arith.addf %530, %529 : vector<8x128xf32>
    %532 = arith.divf %530, %531 : vector<8x128xf32>
    %533 = vector.extract_strided_slice %523 {offsets = [0, 128], sizes = [8, 128], strides = [1, 1]} : vector<8x384xf32> to vector<8x128xf32>
    %534 = vector.extract_strided_slice %524 {offsets = [0, 128], sizes = [8, 128], strides = [1, 1]} : vector<8x384xf32> to vector<8x128xf32>
    %535 = arith.addf %533, %534 : vector<8x128xf32>
    %536 = arith.negf %535 : vector<8x128xf32>
    %537 = math.exp %536 : vector<8x128xf32>
    %cst_136 = arith.constant 1.000000e+00 : f32
    %538 = vector.broadcast %cst_136 : f32 to vector<8x128xf32>
    %539 = arith.addf %538, %537 : vector<8x128xf32>
    %540 = arith.divf %538, %539 : vector<8x128xf32>
    %541 = vector.extract_strided_slice %523 {offsets = [0, 256], sizes = [8, 128], strides = [1, 1]} : vector<8x384xf32> to vector<8x128xf32>
    %542 = vector.extract_strided_slice %524 {offsets = [0, 256], sizes = [8, 128], strides = [1, 1]} : vector<8x384xf32> to vector<8x128xf32>
    %543 = arith.addf %542, %290 : vector<8x128xf32>
    %544 = arith.mulf %532, %543 : vector<8x128xf32>
    %545 = arith.addf %541, %544 : vector<8x128xf32>
    %546 = math.tanh %545 : vector<8x128xf32>
    %cst_137 = arith.constant 1.000000e+00 : f32
    %547 = vector.broadcast %cst_137 : f32 to vector<8x128xf32>
    %548 = arith.subf %547, %540 : vector<8x128xf32>
    %549 = arith.mulf %548, %546 : vector<8x128xf32>
    %550 = arith.mulf %540, %519 : vector<8x128xf32>
    %551 = arith.addf %549, %550 : vector<8x128xf32>
    %c8_i32_138 = arith.constant 8 : i32
    %c0_139 = arith.constant 0 : index
    %c0_140 = arith.constant 0 : index
    %552 = vector.load %arg10[%c0_139, %c0_140] : memref<128x16xf32, #tpu.memory_space<vmem>>, vector<128x16xf32>
    %cst_141 = arith.constant dense<0.000000e+00> : vector<8x16xf32>
    %553 = tpu.matmul %551, %552, %cst_141 {dimension_numbers = #tpu.dot_dimension_numbers<[1], [0], [0], [1], [0, 0, 1, 1], [], []>} : vector<8x128xf32>, vector<128x16xf32>, vector<8x16xf32> -> vector<8x16xf32>
    %c0_142 = arith.constant 0 : index
    %c0_143 = arith.constant 0 : index
    %554 = vector.load %arg11[%c0_142, %c0_143] : memref<1x16xf32, #tpu.memory_space<vmem>>, vector<1x16xf32>
    %555 = vector.broadcast %554 : vector<1x16xf32> to vector<8x16xf32>
    %556 = arith.addf %553, %555 : vector<8x16xf32>
    %c0_144 = arith.constant 0 : index
    %c0_145 = arith.constant 0 : index
    %557 = vector.load %arg12[%c0_144, %c0_145] : memref<8x16xf32, #tpu.memory_space<vmem>>, vector<8x16xf32>
    tpu.vector_store %arg12[%c0_144, %c0_145], %556 {strides = array<i32>} : memref<8x16xf32, #tpu.memory_space<vmem>>, vector<8x16xf32>,
    return
  }
  func.func @transform_0(%arg0: i32) -> (i32, i32, i32) {
    %c0_i32 = arith.constant 0 : i32
    %c0_i32_0 = arith.constant 0 : i32
    %c0_i32_1 = arith.constant 0 : i32
    return %c0_i32, %arg0, %c0_i32_0 : i32, i32, i32
  }
  func.func @transform_1(%arg0: i32) -> (i32, i32) {
    %c0_i32 = arith.constant 0 : i32
    %c0_i32_0 = arith.constant 0 : i32
    %c0_i32_1 = arith.constant 0 : i32
    return %c0_i32, %c0_i32_0 : i32, i32
  }
  func.func @transform_2(%arg0: i32) -> (i32, i32) {
    %c0_i32 = arith.constant 0 : i32
    %c0_i32_0 = arith.constant 0 : i32
    %c0_i32_1 = arith.constant 0 : i32
    return %c0_i32, %c0_i32_0 : i32, i32
  }
  func.func @transform_3(%arg0: i32) -> (i32, i32) {
    %c0_i32 = arith.constant 0 : i32
    %c0_i32_0 = arith.constant 0 : i32
    %c0_i32_1 = arith.constant 0 : i32
    return %c0_i32, %c0_i32_0 : i32, i32
  }
  func.func @transform_4(%arg0: i32) -> (i32, i32) {
    %c0_i32 = arith.constant 0 : i32
    %c0_i32_0 = arith.constant 0 : i32
    %c0_i32_1 = arith.constant 0 : i32
    return %c0_i32, %c0_i32_0 : i32, i32
  }
  func.func @transform_5(%arg0: i32) -> (i32, i32) {
    %c0_i32 = arith.constant 0 : i32
    %c0_i32_0 = arith.constant 0 : i32
    %c0_i32_1 = arith.constant 0 : i32
    return %c0_i32, %c0_i32_0 : i32, i32
  }
  func.func @transform_6(%arg0: i32) -> (i32, i32) {
    %c0_i32 = arith.constant 0 : i32
    %c0_i32_0 = arith.constant 0 : i32
    %c0_i32_1 = arith.constant 0 : i32
    return %c0_i32, %c0_i32_0 : i32, i32
  }
  func.func @transform_7(%arg0: i32) -> (i32, i32) {
    %c0_i32 = arith.constant 0 : i32
    %c0_i32_0 = arith.constant 0 : i32
    %c0_i32_1 = arith.constant 0 : i32
    return %c0_i32, %c0_i32_0 : i32, i32
  }
  func.func @transform_8(%arg0: i32) -> (i32, i32) {
    %c0_i32 = arith.constant 0 : i32
    %c0_i32_0 = arith.constant 0 : i32
    %c0_i32_1 = arith.constant 0 : i32
    return %c0_i32, %c0_i32_0 : i32, i32
  }
  func.func @transform_9(%arg0: i32) -> (i32, i32) {
    %c0_i32 = arith.constant 0 : i32
    %c0_i32_0 = arith.constant 0 : i32
    %c0_i32_1 = arith.constant 0 : i32
    return %c0_i32, %c0_i32_0 : i32, i32
  }
  func.func @transform_10(%arg0: i32) -> (i32, i32) {
    %c0_i32 = arith.constant 0 : i32
    %c0_i32_0 = arith.constant 0 : i32
    %c0_i32_1 = arith.constant 0 : i32
    return %c0_i32, %c0_i32_0 : i32, i32
  }
  func.func @transform_11(%arg0: i32) -> (i32, i32) {
    %c0_i32 = arith.constant 0 : i32
    %c0_i32_0 = arith.constant 0 : i32
    return %arg0, %c0_i32 : i32, i32
  }
}

</mosaic_0001>

<llo_original>
// kernel: tpu_custom_call.1
$region0: #{tpu_custom_call.1}
  #allocation0 [shape = 'u32[]', space=smem, size = 0x4, offset = 0x4, fixed_abs, tag = 'smem constant byte address 0x4 - core index']
  #allocation1 [shape = 'u32[144,128]{1,0:T(1,128)}', space=vmem, size = 0x12000, scoped, tag = 'internal scratch']
  #allocation2 [shape = 'f32[64,384]{1,0:T(8,128)}', space=vmem, size = 0x18000, scoped, tag = 'scratch operand']
  #allocation3 [shape = 'f32[64,128]{1,0:T(8,128)}', space=vmem, size = 0x8000, scoped, tag = 'scratch operand']
  %s0 = inlined_call_operand.vmem [shape: f32[8,8,8], index: 0, kind: input, shape index: {}]
  %s1 = inlined_call_operand.vmem [shape: f32[8,384], index: 1, kind: input, shape index: {}]
  %s2 = inlined_call_operand.hbm [shape: f32[128,384], index: 2, kind: input, shape index: {}]
  %s3 = inlined_call_operand.vmem [shape: f32[1,384], index: 3, kind: input, shape index: {}]
  %s4 = inlined_call_operand.vmem [shape: f32[1,128], index: 4, kind: input, shape index: {}]
  %s5 = inlined_call_operand.hbm [shape: f32[128,384], index: 5, kind: input, shape index: {}]
  %s6 = inlined_call_operand.hbm [shape: f32[128,384], index: 6, kind: input, shape index: {}]
  %s7 = inlined_call_operand.vmem [shape: f32[1,384], index: 7, kind: input, shape index: {}]
  %s8 = inlined_call_operand.vmem [shape: f32[1,128], index: 8, kind: input, shape index: {}]
  %s9 = inlined_call_operand.vmem [shape: f32[128,16], index: 9, kind: input, shape index: {}]
  %s10 = inlined_call_operand.vmem [shape: f32[1,16], index: 10, kind: input, shape index: {}]
  %s11 = inlined_call_operand.hbm [shape: f32[8,16], index: 11, kind: output, shape index: {}]
  %s12 = sld [smem:[#allocation0]]
  $region66: #{tpu_custom_call.1} parent=0
    _
  %s14 = ssub.s32 1, %s12
  %s15 = scalar_select 0, %s14, %s12
  $region1: #{tpu_custom_call.1} parent=0
    #allocation4 [shape = 'u8[196608]{0}', space=vmem, size = 0x30000, scoped, tag = 'input window, operand 2, single buffered']
    #allocation5 [shape = 's32[1]{0}', space=sflag, size = 0x4, scoped, tag = 'scoped memory for tpu_custom_call.1']
    #allocation6 [shape = 's32[1]{0}', space=sflag, size = 0x4, scoped, tag = 'scoped memory for tpu_custom_call.1']
    #allocation7 [shape = 'u8[196608]{0}', space=vmem, size = 0x30000, scoped, tag = 'input window, operand 5, single buffered']
    #allocation8 [shape = 's32[1]{0}', space=sflag, size = 0x4, scoped, tag = 'scoped memory for tpu_custom_call.1']
    #allocation9 [shape = 'u8[196608]{0}', space=vmem, size = 0x30000, scoped, tag = 'input window, operand 6, single buffered']
    #allocation10 [shape = 'u8[4096]{0}', space=vmem, size = 0x1000, scoped, tag = 'output window, operand 0, single buffered']
    %16 = vsyncpa [#allocation5], 0
    %17 = vsyncpa [#allocation8], 0
    %18 = vsyncpa [#allocation6], 0
    // Predicated region
    $region2: #{tpu_custom_call.1} parent=1 // pred_check
      _
    $region3: #{tpu_custom_call.1} parent=1 // pred_check_branch
      %20 = sbr.rel (0) target = $region5
    $region4: #{tpu_custom_call.1} parent=1 // pred_region
      _
    $region5: #{tpu_custom_call.1} parent=1 // pred_fallthru
      _
    // Predicated region
    $region6: #{tpu_custom_call.1} parent=1 // pred_check
      _
    $region7: #{tpu_custom_call.1} parent=1 // pred_check_branch
      %22 = sbr.rel (0) target = $region9
    $region8: #{tpu_custom_call.1} parent=1 // pred_region
      _
    $region9: #{tpu_custom_call.1} parent=1 // pred_fallthru
      _
    // Predicated region
    $region10: #{tpu_custom_call.1} parent=1 // pred_check
      _
    $region11: #{tpu_custom_call.1} parent=1 // pred_check_branch
      %24 = sbr.rel (0) target = $region13
    $region12: #{tpu_custom_call.1} parent=1 // pred_region
      %s26 = ssub.s32 6144, 6144
      %27 = vsyncadd [#allocation5], %s26
      %s28 = sshll.u32 [#allocation4], 4
      %s29 = int_to_ptr.vmem [resolvable:$true] %s28
      %34 = dma.hbm_to_vmem [thread:$0]  %s2, 6144, %s29, [#allocation5], 384, 384, 24
    $region13: #{tpu_custom_call.1} parent=1 // pred_fallthru
      _
    // Predicated region
    $region14: #{tpu_custom_call.1} parent=1 // pred_check
      _
    $region15: #{tpu_custom_call.1} parent=1 // pred_check_branch
      %36 = sbr.rel (0) target = $region17
    $region16: #{tpu_custom_call.1} parent=1 // pred_region
      _
    $region17: #{tpu_custom_call.1} parent=1 // pred_fallthru
      _
    // Predicated region
    $region18: #{tpu_custom_call.1} parent=1 // pred_check
      _
    $region19: #{tpu_custom_call.1} parent=1 // pred_check_branch
      %38 = sbr.rel (0) target = $region21
    $region20: #{tpu_custom_call.1} parent=1 // pred_region
      _
    $region21: #{tpu_custom_call.1} parent=1 // pred_fallthru
      _
    // Predicated region
    $region22: #{tpu_custom_call.1} parent=1 // pred_check
      _
    $region23: #{tpu_custom_call.1} parent=1 // pred_check_branch
      %40 = sbr.rel (0) target = $region25
    $region24: #{tpu_custom_call.1} parent=1 // pred_region
      %s42 = ssub.s32 6144, 6144
      %43 = vsyncadd [#allocation8], %s42
      %s44 = sshll.u32 [#allocation7], 4
      %s45 = int_to_ptr.vmem [resolvable:$true] %s44
      %50 = dma.hbm_to_vmem [thread:$0]  %s5, 6144, %s45, [#allocation8], 384, 384, 24
    $region25: #{tpu_custom_call.1} parent=1 // pred_fallthru
      _
    // Predicated region
    $region26: #{tpu_custom_call.1} parent=1 // pred_check
      _
    $region27: #{tpu_custom_call.1} parent=1 // pred_check_branch
      %52 = sbr.rel (0) target = $region29
    $region28: #{tpu_custom_call.1} parent=1 // pred_region
      %s54 = ssub.s32 6144, 6144
      %55 = vsyncadd [#allocation8], %s54
      %s56 = sshll.u32 [#allocation9], 4
      %s57 = int_to_ptr.vmem [resolvable:$true] %s56
      %62 = dma.hbm_to_vmem [thread:$0]  %s6, 6144, %s57, [#allocation8], 384, 384, 24
    $region29: #{tpu_custom_call.1} parent=1 // pred_fallthru
      _
    // Predicated region
    $region30: #{tpu_custom_call.1} parent=1 // pred_check
      _
    $region31: #{tpu_custom_call.1} parent=1 // pred_check_branch
      %64 = sbr.rel (0) target = $region33
    $region32: #{tpu_custom_call.1} parent=1 // pred_region
      _
    $region33: #{tpu_custom_call.1} parent=1 // pred_fallthru
      _
    // Predicated region
    $region34: #{tpu_custom_call.1} parent=1 // pred_check
      _
    $region35: #{tpu_custom_call.1} parent=1 // pred_check_branch
      %66 = sbr.rel (0) target = $region37
    $region36: #{tpu_custom_call.1} parent=1 // pred_region
      _
    $region37: #{tpu_custom_call.1} parent=1 // pred_fallthru
      _
    // Predicated region
    $region38: #{tpu_custom_call.1} parent=1 // pred_check
      _
    $region39: #{tpu_custom_call.1} parent=1 // pred_check_branch
      %68 = sbr.rel (0) target = $region41
    $region40: #{tpu_custom_call.1} parent=1 // pred_region
      _
    $region41: #{tpu_custom_call.1} parent=1 // pred_fallthru
      _
    // Predicated region
    $region42: #{tpu_custom_call.1} parent=1 // pred_check
      _
    $region43: #{tpu_custom_call.1} parent=1 // pred_check_branch
      %70 = sbr.rel (0) target = $region45
    $region44: #{tpu_custom_call.1} parent=1 // pred_region
      _
    $region45: #{tpu_custom_call.1} parent=1 // pred_fallthru
      _
    // Predicated region
    $region46: #{tpu_custom_call.1} parent=1 // pred_check
      _
    $region47: #{tpu_custom_call.1} parent=1 // pred_check_branch
      %72 = sbr.rel (0) target = $region49
    $region48: #{tpu_custom_call.1} parent=1 // pred_region
      %73 = dma.done [#allocation5], 6144
    $region49: #{tpu_custom_call.1} parent=1 // pred_fallthru
      _
    // Predicated region
    $region50: #{tpu_custom_call.1} parent=1 // pred_check
      _
    $region51: #{tpu_custom_call.1} parent=1 // pred_check_branch
      %75 = sbr.rel (0) target = $region53
    $region52: #{tpu_custom_call.1} parent=1 // pred_region
      %76 = dma.done [#allocation8], 6144
    $region53: #{tpu_custom_call.1} parent=1 // pred_fallthru
      _
    // Predicated region
    $region54: #{tpu_custom_call.1} parent=1 // pred_check
      _
    $region55: #{tpu_custom_call.1} parent=1 // pred_check_branch
      %78 = sbr.rel (0) target = $region57
    $region56: #{tpu_custom_call.1} parent=1 // pred_region
      %79 = dma.done [#allocation8], 6144
    $region57: #{tpu_custom_call.1} parent=1 // pred_fallthru
      _
    %v80 = vld [vmem:[%s1] sm:$0xff]
    %v81 = vld [vmem:[%s1 + $0x8] sm:$0xff]
    %v82 = vld [vmem:[%s1 + $0x10] sm:$0xff]
    %v83 = vld [vmem:[#allocation4] sm:$0xff]
    %v84 = vld [vmem:[#allocation4 + $0x8] sm:$0xff]
    %v85 = vld [vmem:[#allocation4 + $0x10] sm:$0xff]
    %v86 = vld [vmem:[#allocation4 + $0x18] sm:$0xff]
    %v87 = vld [vmem:[#allocation4 + $0x20] sm:$0xff]
    %v88 = vld [vmem:[#allocation4 + $0x28] sm:$0xff]
    %v89 = vld [vmem:[#allocation4 + $0x30] sm:$0xff]
    %v90 = vld [vmem:[#allocation4 + $0x38] sm:$0xff]
    %v91 = vld [vmem:[#allocation4 + $0x40] sm:$0xff]
    %v92 = vld [vmem:[#allocation4 + $0x48] sm:$0xff]
    %v93 = vld [vmem:[#allocation4 + $0x50] sm:$0xff]
    %v94 = vld [vmem:[#allocation4 + $0x58] sm:$0xff]
    %v95 = vld [vmem:[#allocation4 + $0x60] sm:$0xff]
    %v96 = vld [vmem:[#allocation4 + $0x68] sm:$0xff]
    %v97 = vld [vmem:[#allocation4 + $0x70] sm:$0xff]
    %v98 = vld [vmem:[#allocation4 + $0x78] sm:$0xff]
    %v99 = vld [vmem:[#allocation4 + $0x80] sm:$0xff]
    %v100 = vld [vmem:[#allocation4 + $0x88] sm:$0xff]
    %v101 = vld [vmem:[#allocation4 + $0x90] sm:$0xff]
    %v102 = vld [vmem:[#allocation4 + $0x98] sm:$0xff]
    %v103 = vld [vmem:[#allocation4 + $0xa0] sm:$0xff]
    %v104 = vld [vmem:[#allocation4 + $0xa8] sm:$0xff]
    %v105 = vld [vmem:[#allocation4 + $0xb0] sm:$0xff]
    %v106 = vld [vmem:[#allocation4 + $0xb8] sm:$0xff]
    %v107 = vld [vmem:[#allocation4 + $0xc0] sm:$0xff]
    %v108 = vld [vmem:[#allocation4 + $0xc8] sm:$0xff]
    %v109 = vld [vmem:[#allocation4 + $0xd0] sm:$0xff]
    %v110 = vld [vmem:[#allocation4 + $0xd8] sm:$0xff]
    %v111 = vld [vmem:[#allocation4 + $0xe0] sm:$0xff]
    %v112 = vld [vmem:[#allocation4 + $0xe8] sm:$0xff]
    %v113 = vld [vmem:[#allocation4 + $0xf0] sm:$0xff]
    %v114 = vld [vmem:[#allocation4 + $0xf8] sm:$0xff]
    %v115 = vld [vmem:[#allocation4 + $0x100] sm:$0xff]
    %v116 = vld [vmem:[#allocation4 + $0x108] sm:$0xff]
    %v117 = vld [vmem:[#allocation4 + $0x110] sm:$0xff]
    %v118 = vld [vmem:[#allocation4 + $0x118] sm:$0xff]
    %v119 = vld [vmem:[#allocation4 + $0x120] sm:$0xff]
    %v120 = vld [vmem:[#allocation4 + $0x128] sm:$0xff]
    %v121 = vld [vmem:[#allocation4 + $0x130] sm:$0xff]
    %v122 = vld [vmem:[#allocation4 + $0x138] sm:$0xff]
    %v123 = vld [vmem:[#allocation4 + $0x140] sm:$0xff]
    %v124 = vld [vmem:[#allocation4 + $0x148] sm:$0xff]
    %v125 = vld [vmem:[#allocation4 + $0x150] sm:$0xff]
    %v126 = vld [vmem:[#allocation4 + $0x158] sm:$0xff]
    %v127 = vld [vmem:[#allocation4 + $0x160] sm:$0xff]
    %v128 = vld [vmem:[#allocation4 + $0x168] sm:$0xff]
    %v129 = vld [vmem:[#allocation4 + $0x170] sm:$0xff]
    %v130 = vld [vmem:[#allocation4 + $0x178] sm:$0xff]
    %v131 = vld [vmem:[%s3] sm:$0x7]
    %v132 = vld [vmem:[%s4] sm:$0x1]
    %v134 = vlaneseq
    %v135 = vshrl.u32 %v134, 7
    %v136 = vsub.s32 0, %v135
    %v137 = vrot.slane %v132, %v136
    %v139 = vld [vmem:[%s0] sm:$0xff]
    %v140 = vld [vmem:[%s0 + $0x8] sm:$0xff]
    %v141 = vld [vmem:[%s0 + $0x10] sm:$0xff]
    %v142 = vld [vmem:[%s0 + $0x18] sm:$0xff]
    %v143 = vld [vmem:[%s0 + $0x20] sm:$0xff]
    %v144 = vld [vmem:[%s0 + $0x28] sm:$0xff]
    %v145 = vld [vmem:[%s0 + $0x30] sm:$0xff]
    %v146 = vld [vmem:[%s0 + $0x38] sm:$0xff]
    %v148 = vlaneseq
    %v149 = vshrl.u32 %v148, 7
    %v150 = vsub.s32 0, %v149
    %v151 = vrot.slane %v131, %v150
    %v152 = vlaneseq
    %v153 = vshrl.u32 %v152, 7
    %v154 = vsub.s32 1, %v153
    %v155 = vrot.slane %v131, %v154
    %v156 = vlaneseq
    %v157 = vshrl.u32 %v156, 7
    %v158 = vsub.s32 2, %v157
    %v159 = vrot.slane %v131, %v158
    %vm163 = vcmask 64512
    %v165 = vsel %vm163, %v139, 0
    %v168 = vsel %vm163, %v140, 0
    %v171 = vsel %vm163, %v141, 0
    %v174 = vsel %vm163, %v142, 0
    %v177 = vsel %vm163, %v143, 0
    %v180 = vsel %vm163, %v144, 0
    %v183 = vsel %vm163, %v145, 0
    %v186 = vsel %vm163, %v146, 0
    %188 = vmatprep.subr.mxu0 0.0
    %189 = vmatpush1.msra.mxu0 0.0
    %190 = vmatprep.subr.mxu0 0.0
    %191 = vmatpush1.msra.mxu0 0.0
    %192 = vmatprep.subr.mxu0 0.0
    %193 = vmatpush1.msra.mxu0 0.0
    %194 = vmatprep.subr.mxu0 0.0
    %195 = vmatpush1.msra.mxu0 0.0
    %196 = vmatprep.subr.mxu0 0.0
    %197 = vmatpush1.msra.mxu0 0.0
    %198 = vmatprep.subr.mxu0 0.0
    %199 = vmatpush1.msra.mxu0 0.0
    %200 = vmatprep.subr.mxu0 0.0
    %201 = vmatpush1.msra.mxu0 0.0
    %202 = vmatprep.subr.mxu0 0.0
    %203 = vmatpush1.msra.mxu0 0.0
    %204 = vmatprep.subr.mxu0 0.0
    %205 = vmatpush1.msra.mxu0 0.0
    %206 = vmatprep.subr.mxu0 0.0
    %207 = vmatpush1.msra.mxu0 0.0
    %208 = vmatprep.subr.mxu0 0.0
    %209 = vmatpush1.msra.mxu0 0.0
    %210 = vmatprep.subr.mxu0 0.0
    %211 = vmatpush1.msra.mxu0 0.0
    %212 = vmatprep.subr.mxu0 0.0
    %213 = vmatpush1.msra.mxu0 0.0
    %214 = vmatprep.subr.mxu0 0.0
    %215 = vmatpush1.msra.mxu0 0.0
    %216 = vmatprep.subr.mxu0 0.0
    %217 = vmatpush1.msra.mxu0 0.0
    %218 = vmatprep.subr.mxu0 %v81
    %219 = vmatpush1.msra.mxu0 %v80
    %220 = vmatprep.subr.mxu0 0.0
    %221 = vmatpush2.msra.mxu0 0.0
    %222 = vmatprep.subr.mxu0 0.0
    %223 = vmatpush2.msra.mxu0 0.0
    %224 = vmatprep.subr.mxu0 0.0
    %225 = vmatpush2.msra.mxu0 0.0
    %226 = vmatprep.subr.mxu0 0.0
    %227 = vmatpush2.msra.mxu0 0.0
    %228 = vmatprep.subr.mxu0 0.0
    %229 = vmatpush2.msra.mxu0 0.0
    %230 = vmatprep.subr.mxu0 0.0
    %231 = vmatpush2.msra.mxu0 0.0
    %232 = vmatprep.subr.mxu0 0.0
    %233 = vmatpush2.msra.mxu0 0.0
    %234 = vmatprep.subr.mxu0 0.0
    %235 = vmatpush2.msra.mxu0 0.0
    %236 = vmatprep.subr.mxu0 0.0
    %237 = vmatpush2.msra.mxu0 0.0
    %238 = vmatprep.subr.mxu0 0.0
    %239 = vmatpush2.msra.mxu0 0.0
    %240 = vmatprep.subr.mxu0 0.0
    %241 = vmatpush2.msra.mxu0 0.0
    %242 = vmatprep.subr.mxu0 0.0
    %243 = vmatpush2.msra.mxu0 0.0
    %244 = vmatprep.subr.mxu0 0.0
    %245 = vmatpush2.msra.mxu0 0.0
    %246 = vmatprep.subr.mxu0 0.0
    %247 = vmatpush2.msra.mxu0 0.0
    %248 = vmatprep.subr.mxu0 0.0
    %249 = vmatpush2.msra.mxu0 0.0
    %250 = vmatprep.subr.mxu0 0.0
    %251 = vmatpush2.msra.mxu0 0.0
    %252 = vmatprep.mubr.f32.mxu0 0.0
    %253 = vmatmul.mubr.f32.gmra.mxu0 %v165
    %v254 = vpop.f32.mrf.mxu0
    %v255 = vadd.f32 %v151, %v254
    %v256 = vpop.f32.mrf.mxu0
    %v257 = vadd.f32 %v155, %v256
    %258 = vmatprep.mubr.f32.mxu0 0.0
    %259 = vmatmul.mubr.f32.gmra.mxu0 %v168
    %v260 = vpop.f32.mrf.mxu0
    %v261 = vadd.f32 %v151, %v260
    %v262 = vpop.f32.mrf.mxu0
    %v263 = vadd.f32 %v155, %v262
    %264 = vmatprep.mubr.f32.mxu0 0.0
    %265 = vmatmul.mubr.f32.gmra.mxu0 %v171
    %v266 = vpop.f32.mrf.mxu0
    %v267 = vadd.f32 %v151, %v266
    %v268 = vpop.f32.mrf.mxu0
    %v269 = vadd.f32 %v155, %v268
    %270 = vmatprep.mubr.f32.mxu0 0.0
    %271 = vmatmul.mubr.f32.gmra.mxu0 %v174
    %v272 = vpop.f32.mrf.mxu0
    %v273 = vadd.f32 %v151, %v272
    %v274 = vpop.f32.mrf.mxu0
    %v275 = vadd.f32 %v155, %v274
    %276 = vmatprep.mubr.f32.mxu0 0.0
    %277 = vmatmul.mubr.f32.gmra.mxu0 %v177
    %v278 = vpop.f32.mrf.mxu0
    %v279 = vadd.f32 %v151, %v278
    %v280 = vpop.f32.mrf.mxu0
    %v281 = vadd.f32 %v155, %v280
    %282 = vmatprep.mubr.f32.mxu0 0.0
    %283 = vmatmul.mubr.f32.gmra.mxu0 %v180
    %v284 = vpop.f32.mrf.mxu0
    %v285 = vadd.f32 %v151, %v284
    %v286 = vpop.f32.mrf.mxu0
    %v287 = vadd.f32 %v155, %v286
    %288 = vmatprep.mubr.f32.mxu0 0.0
    %289 = vmatmul.mubr.f32.gmra.mxu0 %v183
    %v290 = vpop.f32.mrf.mxu0
    %v291 = vadd.f32 %v151, %v290
    %v292 = vpop.f32.mrf.mxu0
    %v293 = vadd.f32 %v155, %v292
    %294 = vmatprep.mubr.f32.mxu0 0.0
    %295 = vmatmul.mubr.f32.gmra.mxu0 %v186
    %v296 = vpop.f32.mrf.mxu0
    %v297 = vadd.f32 %v151, %v296
    %v298 = vpop.f32.mrf.mxu0
    %v299 = vadd.f32 %v155, %v298
    %300 = vdwg.mxu0
    %301 = vmatprep.subr.mxu0 0.0
    %302 = vmatpush1.msra.mxu0 0.0
    %303 = vmatprep.subr.mxu0 0.0
    %304 = vmatpush1.msra.mxu0 0.0
    %305 = vmatprep.subr.mxu0 0.0
    %306 = vmatpush1.msra.mxu0 0.0
    %307 = vmatprep.subr.mxu0 0.0
    %308 = vmatpush1.msra.mxu0 0.0
    %309 = vmatprep.subr.mxu0 0.0
    %310 = vmatpush1.msra.mxu0 0.0
    %311 = vmatprep.subr.mxu0 0.0
    %312 = vmatpush1.msra.mxu0 0.0
    %313 = vmatprep.subr.mxu0 0.0
    %314 = vmatpush1.msra.mxu0 0.0
    %315 = vmatprep.subr.mxu0 0.0
    %316 = vmatpush1.msra.mxu0 0.0
    %317 = vmatprep.subr.mxu0 0.0
    %318 = vmatpush1.msra.mxu0 0.0
    %319 = vmatprep.subr.mxu0 0.0
    %320 = vmatpush1.msra.mxu0 0.0
    %321 = vmatprep.subr.mxu0 0.0
    %322 = vmatpush1.msra.mxu0 0.0
    %323 = vmatprep.subr.mxu0 0.0
    %324 = vmatpush1.msra.mxu0 0.0
    %325 = vmatprep.subr.mxu0 0.0
    %326 = vmatpush1.msra.mxu0 0.0
    %327 = vmatprep.subr.mxu0 0.0
    %328 = vmatpush1.msra.mxu0 0.0
    %329 = vmatprep.subr.mxu0 0.0
    %330 = vmatpush1.msra.mxu0 0.0
    %331 = vmatprep.subr.mxu0 0.0
    %332 = vmatpush1.msra.mxu0 %v82
    %333 = vmatprep.subr.mxu0 0.0
    %334 = vmatpush2.msra.mxu0 0.0
    %335 = vmatprep.subr.mxu0 0.0
    %336 = vmatpush2.msra.mxu0 0.0
    %337 = vmatprep.subr.mxu0 0.0
    %338 = vmatpush2.msra.mxu0 0.0
    %339 = vmatprep.subr.mxu0 0.0
    %340 = vmatpush2.msra.mxu0 0.0
    %341 = vmatprep.subr.mxu0 0.0
    %342 = vmatpush2.msra.mxu0 0.0
    %343 = vmatprep.subr.mxu0 0.0
    %344 = vmatpush2.msra.mxu0 0.0
    %345 = vmatprep.subr.mxu0 0.0
    %346 = vmatpush2.msra.mxu0 0.0
    %347 = vmatprep.subr.mxu0 0.0
    %348 = vmatpush2.msra.mxu0 0.0
    %349 = vmatprep.subr.mxu0 0.0
    %350 = vmatpush2.msra.mxu0 0.0
    %351 = vmatprep.subr.mxu0 0.0
    %352 = vmatpush2.msra.mxu0 0.0
    %353 = vmatprep.subr.mxu0 0.0
    %354 = vmatpush2.msra.mxu0 0.0
    %355 = vmatprep.subr.mxu0 0.0
    %356 = vmatpush2.msra.mxu0 0.0
    %357 = vmatprep.subr.mxu0 0.0
    %358 = vmatpush2.msra.mxu0 0.0
    %359 = vmatprep.subr.mxu0 0.0
    %360 = vmatpush2.msra.mxu0 0.0
    %361 = vmatprep.subr.mxu0 0.0
    %362 = vmatpush2.msra.mxu0 0.0
    %363 = vmatprep.subr.mxu0 0.0
    %364 = vmatpush2.msra.mxu0 0.0
    %365 = vmatprep.mubr.f32.mxu0 0.0
    %366 = vmatmul.mubr.f32.gmra.mxu0 %v165
    %v367 = vpop.f32.mrf.mxu0
    %v368 = vadd.f32 %v159, %v367
    %v369 = vpop.f32.mrf.mxu0
    %370 = vmatprep.mubr.f32.mxu0 0.0
    %371 = vmatmul.mubr.f32.gmra.mxu0 %v168
    %v372 = vpop.f32.mrf.mxu0
    %v373 = vadd.f32 %v159, %v372
    %v374 = vpop.f32.mrf.mxu0
    %375 = vmatprep.mubr.f32.mxu0 0.0
    %376 = vmatmul.mubr.f32.gmra.mxu0 %v171
    %v377 = vpop.f32.mrf.mxu0
    %v378 = vadd.f32 %v159, %v377
    %v379 = vpop.f32.mrf.mxu0
    %380 = vmatprep.mubr.f32.mxu0 0.0
    %381 = vmatmul.mubr.f32.gmra.mxu0 %v174
    %v382 = vpop.f32.mrf.mxu0
    %v383 = vadd.f32 %v159, %v382
    %v384 = vpop.f32.mrf.mxu0
    %385 = vmatprep.mubr.f32.mxu0 0.0
    %386 = vmatmul.mubr.f32.gmra.mxu0 %v177
    %v387 = vpop.f32.mrf.mxu0
    %v388 = vadd.f32 %v159, %v387
    %v389 = vpop.f32.mrf.mxu0
    %390 = vmatprep.mubr.f32.mxu0 0.0
    %391 = vmatmul.mubr.f32.gmra.mxu0 %v180
    %v392 = vpop.f32.mrf.mxu0
    %v393 = vadd.f32 %v159, %v392
    %v394 = vpop.f32.mrf.mxu0
    %395 = vmatprep.mubr.f32.mxu0 0.0
    %396 = vmatmul.mubr.f32.gmra.mxu0 %v183
    %v397 = vpop.f32.mrf.mxu0
    %v398 = vadd.f32 %v159, %v397
    %v399 = vpop.f32.mrf.mxu0
    %400 = vmatprep.mubr.f32.mxu0 0.0
    %401 = vmatmul.mubr.f32.gmra.mxu0 %v186
    %v402 = vpop.f32.mrf.mxu0
    %v403 = vadd.f32 %v159, %v402
    %v404 = vpop.f32.mrf.mxu0
    %405 = vdwg.mxu0
    %406 = vst [vmem:[#allocation2] sm:$0xff] %v255
    %407 = vst [vmem:[#allocation2 + $0x8] sm:$0xff] %v257
    %408 = vst [vmem:[#allocation2 + $0x10] sm:$0xff] %v368
    %409 = vst [vmem:[#allocation2 + $0x18] sm:$0xff] %v261
    %410 = vst [vmem:[#allocation2 + $0x20] sm:$0xff] %v263
    %411 = vst [vmem:[#allocation2 + $0x28] sm:$0xff] %v373
    %412 = vst [vmem:[#allocation2 + $0x30] sm:$0xff] %v267
    %413 = vst [vmem:[#allocation2 + $0x38] sm:$0xff] %v269
    %414 = vst [vmem:[#allocation2 + $0x40] sm:$0xff] %v378
    %415 = vst [vmem:[#allocation2 + $0x48] sm:$0xff] %v273
    %416 = vst [vmem:[#allocation2 + $0x50] sm:$0xff] %v275
    %417 = vst [vmem:[#allocation2 + $0x58] sm:$0xff] %v383
    %418 = vst [vmem:[#allocation2 + $0x60] sm:$0xff] %v279
    %419 = vst [vmem:[#allocation2 + $0x68] sm:$0xff] %v281
    %420 = vst [vmem:[#allocation2 + $0x70] sm:$0xff] %v388
    %421 = vst [vmem:[#allocation2 + $0x78] sm:$0xff] %v285
    %422 = vst [vmem:[#allocation2 + $0x80] sm:$0xff] %v287
    %423 = vst [vmem:[#allocation2 + $0x88] sm:$0xff] %v393
    %424 = vst [vmem:[#allocation2 + $0x90] sm:$0xff] %v291
    %425 = vst [vmem:[#allocation2 + $0x98] sm:$0xff] %v293
    %426 = vst [vmem:[#allocation2 + $0xa0] sm:$0xff] %v398
    %427 = vst [vmem:[#allocation2 + $0xa8] sm:$0xff] %v297
    %428 = vst [vmem:[#allocation2 + $0xb0] sm:$0xff] %v299
    %429 = vst [vmem:[#allocation2 + $0xb8] sm:$0xff] %v403
    %s430 = smul.u32 0, 3
    %s431 = smul.addr %s430, 8
    %s432 = scalar_lea.vmem [#allocation2], %s431
    %v433 = vld [vmem:[%s432] sm:$0xff]
    %v434 = vld [vmem:[%s432 + $0x8] sm:$0xff]
    %v435 = vld [vmem:[%s432 + $0x10] sm:$0xff]
    %436 = vmatprep.subr.mxu0 %v129
    %437 = vmatpush1.msra.mxu0 %v128
    %438 = vmatprep.subr.mxu0 %v126
    %439 = vmatpush1.msra.mxu0 %v125
    %440 = vmatprep.subr.mxu0 %v123
    %441 = vmatpush1.msra.mxu0 %v122
    %442 = vmatprep.subr.mxu0 %v120
    %443 = vmatpush1.msra.mxu0 %v119
    %444 = vmatprep.subr.mxu0 %v117
    %445 = vmatpush1.msra.mxu0 %v116
    %446 = vmatprep.subr.mxu0 %v114
    %447 = vmatpush1.msra.mxu0 %v113
    %448 = vmatprep.subr.mxu0 %v111
    %449 = vmatpush1.msra.mxu0 %v110
    %450 = vmatprep.subr.mxu0 %v108
    %451 = vmatpush1.msra.mxu0 %v107
    %452 = vmatprep.subr.mxu0 %v105
    %453 = vmatpush1.msra.mxu0 %v104
    %454 = vmatprep.subr.mxu0 %v102
    %455 = vmatpush1.msra.mxu0 %v101
    %456 = vmatprep.subr.mxu0 %v99
    %457 = vmatpush1.msra.mxu0 %v98
    %458 = vmatprep.subr.mxu0 %v96
    %459 = vmatpush1.msra.mxu0 %v95
    %460 = vmatprep.subr.mxu0 %v93
    %461 = vmatpush1.msra.mxu0 %v92
    %462 = vmatprep.subr.mxu0 %v90
    %463 = vmatpush1.msra.mxu0 %v89
    %464 = vmatprep.subr.mxu0 %v87
    %465 = vmatpush1.msra.mxu0 %v86
    %466 = vmatprep.subr.mxu0 %v84
    %467 = vmatpush1.msra.mxu0 %v83
    %468 = vmatprep.subr.mxu0 0.0
    %469 = vmatpush2.msra.mxu0 0.0
    %470 = vmatprep.subr.mxu0 0.0
    %471 = vmatpush2.msra.mxu0 0.0
    %472 = vmatprep.subr.mxu0 0.0
    %473 = vmatpush2.msra.mxu0 0.0
    %474 = vmatprep.subr.mxu0 0.0
    %475 = vmatpush2.msra.mxu0 0.0
    %476 = vmatprep.subr.mxu0 0.0
    %477 = vmatpush2.msra.mxu0 0.0
    %478 = vmatprep.subr.mxu0 0.0
    %479 = vmatpush2.msra.mxu0 0.0
    %480 = vmatprep.subr.mxu0 0.0
    %481 = vmatpush2.msra.mxu0 0.0
    %482 = vmatprep.subr.mxu0 0.0
    %483 = vmatpush2.msra.mxu0 0.0
    %484 = vmatprep.subr.mxu0 0.0
    %485 = vmatpush2.msra.mxu0 0.0
    %486 = vmatprep.subr.mxu0 0.0
    %487 = vmatpush2.msra.mxu0 0.0
    %488 = vmatprep.subr.mxu0 0.0
    %489 = vmatpush2.msra.mxu0 0.0
    %490 = vmatprep.subr.mxu0 0.0
    %491 = vmatpush2.msra.mxu0 0.0
    %492 = vmatprep.subr.mxu0 0.0
    %493 = vmatpush2.msra.mxu0 0.0
    %494 = vmatprep.subr.mxu0 0.0
    %495 = vmatpush2.msra.mxu0 0.0
    %496 = vmatprep.subr.mxu0 0.0
    %497 = vmatpush2.msra.mxu0 0.0
    %498 = vmatprep.subr.mxu0 0.0
    %499 = vmatpush2.msra.mxu0 0.0
    %500 = vmatprep.mubr.f32.mxu0 0.0
    %501 = vmatmul.mubr.f32.gmra.mxu0 0.0
    %v502 = vpop.f32.mrf.mxu0
    %v503 = vadd.f32 0.0, %v502
    %v504 = vpop.f32.mrf.mxu0
    %v505 = vadd.f32 0.0, %v504
    %506 = vdwg.mxu0
    %507 = vmatprep.subr.mxu0 0.0
    %508 = vmatpush1.msra.mxu0 %v130
    %509 = vmatprep.subr.mxu0 0.0
    %510 = vmatpush1.msra.mxu0 %v127
    %511 = vmatprep.subr.mxu0 0.0
    %512 = vmatpush1.msra.mxu0 %v124
    %513 = vmatprep.subr.mxu0 0.0
    %514 = vmatpush1.msra.mxu0 %v121
    %515 = vmatprep.subr.mxu0 0.0
    %516 = vmatpush1.msra.mxu0 %v118
    %517 = vmatprep.subr.mxu0 0.0
    %518 = vmatpush1.msra.mxu0 %v115
    %519 = vmatprep.subr.mxu0 0.0
    %520 = vmatpush1.msra.mxu0 %v112
    %521 = vmatprep.subr.mxu0 0.0
    %522 = vmatpush1.msra.mxu0 %v109
    %523 = vmatprep.subr.mxu0 0.0
    %524 = vmatpush1.msra.mxu0 %v106
    %525 = vmatprep.subr.mxu0 0.0
    %526 = vmatpush1.msra.mxu0 %v103
    %527 = vmatprep.subr.mxu0 0.0
    %528 = vmatpush1.msra.mxu0 %v100
    %529 = vmatprep.subr.mxu0 0.0
    %530 = vmatpush1.msra.mxu0 %v97
    %531 = vmatprep.subr.mxu0 0.0
    %532 = vmatpush1.msra.mxu0 %v94
    %533 = vmatprep.subr.mxu0 0.0
    %534 = vmatpush1.msra.mxu0 %v91
    %535 = vmatprep.subr.mxu0 0.0
    %536 = vmatpush1.msra.mxu0 %v88
    %537 = vmatprep.subr.mxu0 0.0
    %538 = vmatpush1.msra.mxu0 %v85
    %539 = vmatprep.subr.mxu0 0.0
    %540 = vmatpush2.msra.mxu0 0.0
    %541 = vmatprep.subr.mxu0 0.0
    %542 = vmatpush2.msra.mxu0 0.0
    %543 = vmatprep.subr.mxu0 0.0
    %544 = vmatpush2.msra.mxu0 0.0
    %545 = vmatprep.subr.mxu0 0.0
    %546 = vmatpush2.msra.mxu0 0.0
    %547 = vmatprep.subr.mxu0 0.0
    %548 = vmatpush2.msra.mxu0 0.0
    %549 = vmatprep.subr.mxu0 0.0
    %550 = vmatpush2.msra.mxu0 0.0
    %551 = vmatprep.subr.mxu0 0.0
    %552 = vmatpush2.msra.mxu0 0.0
    %553 = vmatprep.subr.mxu0 0.0
    %554 = vmatpush2.msra.mxu0 0.0
    %555 = vmatprep.subr.mxu0 0.0
    %556 = vmatpush2.msra.mxu0 0.0
    %557 = vmatprep.subr.mxu0 0.0
    %558 = vmatpush2.msra.mxu0 0.0
    %559 = vmatprep.subr.mxu0 0.0
    %560 = vmatpush2.msra.mxu0 0.0
    %561 = vmatprep.subr.mxu0 0.0
    %562 = vmatpush2.msra.mxu0 0.0
    %563 = vmatprep.subr.mxu0 0.0
    %564 = vmatpush2.msra.mxu0 0.0
    %565 = vmatprep.subr.mxu0 0.0
    %566 = vmatpush2.msra.mxu0 0.0
    %567 = vmatprep.subr.mxu0 0.0
    %568 = vmatpush2.msra.mxu0 0.0
    %569 = vmatprep.subr.mxu0 0.0
    %570 = vmatpush2.msra.mxu0 0.0
    %571 = vmatprep.mubr.f32.mxu0 0.0
    %572 = vmatmul.mubr.f32.gmra.mxu0 0.0
    %v573 = vpop.f32.mrf.mxu0
    %v574 = vadd.f32 0.0, %v573
    %v575 = vpop.f32.mrf.mxu0
    %576 = vdwg.mxu0
    %v577 = vadd.f32 %v433, %v503
    %v578 = vxor.u32 %v577, 2147483648
    %v579 = vmul.f32 %v578, 1.442695
    %v580 = vpow.pop %v579
    %v581 = vadd.f32 %v580, 1.0
    %v582 = vrcp.pop %v581
    %v583 = vmul.f32 1.0, %v582
    %v584 = vadd.f32 %v434, %v505
    %v585 = vxor.u32 %v584, 2147483648
    %v586 = vmul.f32 %v585, 1.442695
    %v587 = vpow.pop %v586
    %v588 = vadd.f32 %v587, 1.0
    %v589 = vrcp.pop %v588
    %v590 = vmul.f32 1.0, %v589
    %v591 = vadd.f32 %v574, %v137
    %v592 = vmul.f32 %v583, %v591
    %v593 = vadd.f32 %v435, %v592
    %v594 = vtanh.pop %v593
    %v595 = vsub.f32 1.0, %v590
    %v596 = vmul.f32 %v595, %v594
    %v597 = vmul.f32 %v590, 0.0
    %v598 = vadd.f32 %v596, %v597
    %599 = vst [vmem:[#allocation3] sm:$0xff] %v598
    %s600 = smul.u32 1, 3
    %s601 = smul.addr %s600, 8
    %s602 = scalar_lea.vmem [#allocation2], %s601
    %v603 = vld [vmem:[%s602] sm:$0xff]
    %v604 = vld [vmem:[%s602 + $0x8] sm:$0xff]
    %v605 = vld [vmem:[%s602 + $0x10] sm:$0xff]
    %606 = vmatprep.subr.mxu0 %v129
    %607 = vmatpush1.msra.mxu0 %v128
    %608 = vmatprep.subr.mxu0 %v126
    %609 = vmatpush1.msra.mxu0 %v125
    %610 = vmatprep.subr.mxu0 %v123
    %611 = vmatpush1.msra.mxu0 %v122
    %612 = vmatprep.subr.mxu0 %v120
    %613 = vmatpush1.msra.mxu0 %v119
    %614 = vmatprep.subr.mxu0 %v117
    %615 = vmatpush1.msra.mxu0 %v116
    %616 = vmatprep.subr.mxu0 %v114
    %617 = vmatpush1.msra.mxu0 %v113
    %618 = vmatprep.subr.mxu0 %v111
    %619 = vmatpush1.msra.mxu0 %v110
    %620 = vmatprep.subr.mxu0 %v108
    %621 = vmatpush1.msra.mxu0 %v107
    %622 = vmatprep.subr.mxu0 %v105
    %623 = vmatpush1.msra.mxu0 %v104
    %624 = vmatprep.subr.mxu0 %v102
    %625 = vmatpush1.msra.mxu0 %v101
    %626 = vmatprep.subr.mxu0 %v99
    %627 = vmatpush1.msra.mxu0 %v98
    %628 = vmatprep.subr.mxu0 %v96
    %629 = vmatpush1.msra.mxu0 %v95
    %630 = vmatprep.subr.mxu0 %v93
    %631 = vmatpush1.msra.mxu0 %v92
    %632 = vmatprep.subr.mxu0 %v90
    %633 = vmatpush1.msra.mxu0 %v89
    %634 = vmatprep.subr.mxu0 %v87
    %635 = vmatpush1.msra.mxu0 %v86
    %636 = vmatprep.subr.mxu0 %v84
    %637 = vmatpush1.msra.mxu0 %v83
    %638 = vmatprep.subr.mxu0 0.0
    %639 = vmatpush2.msra.mxu0 0.0
    %640 = vmatprep.subr.mxu0 0.0
    %641 = vmatpush2.msra.mxu0 0.0
    %642 = vmatprep.subr.mxu0 0.0
    %643 = vmatpush2.msra.mxu0 0.0
    %644 = vmatprep.subr.mxu0 0.0
    %645 = vmatpush2.msra.mxu0 0.0
    %646 = vmatprep.subr.mxu0 0.0
    %647 = vmatpush2.msra.mxu0 0.0
    %648 = vmatprep.subr.mxu0 0.0
    %649 = vmatpush2.msra.mxu0 0.0
    %650 = vmatprep.subr.mxu0 0.0
    %651 = vmatpush2.msra.mxu0 0.0
    %652 = vmatprep.subr.mxu0 0.0
    %653 = vmatpush2.msra.mxu0 0.0
    %654 = vmatprep.subr.mxu0 0.0
    %655 = vmatpush2.msra.mxu0 0.0
    %656 = vmatprep.subr.mxu0 0.0
    %657 = vmatpush2.msra.mxu0 0.0
    %658 = vmatprep.subr.mxu0 0.0
    %659 = vmatpush2.msra.mxu0 0.0
    %660 = vmatprep.subr.mxu0 0.0
    %661 = vmatpush2.msra.mxu0 0.0
    %662 = vmatprep.subr.mxu0 0.0
    %663 = vmatpush2.msra.mxu0 0.0
    %664 = vmatprep.subr.mxu0 0.0
    %665 = vmatpush2.msra.mxu0 0.0
    %666 = vmatprep.subr.mxu0 0.0
    %667 = vmatpush2.msra.mxu0 0.0
    %668 = vmatprep.subr.mxu0 0.0
    %669 = vmatpush2.msra.mxu0 0.0
    %670 = vmatprep.mubr.f32.mxu0 0.0
    %671 = vmatmul.mubr.f32.gmra.mxu0 %v598
    %v672 = vpop.f32.mrf.mxu0
    %v673 = vadd.f32 0.0, %v672
    %v674 = vpop.f32.mrf.mxu0
    %v675 = vadd.f32 0.0, %v674
    %676 = vdwg.mxu0
    %677 = vmatprep.subr.mxu0 0.0
    %678 = vmatpush1.msra.mxu0 %v130
    %679 = vmatprep.subr.mxu0 0.0
    %680 = vmatpush1.msra.mxu0 %v127
    %681 = vmatprep.subr.mxu0 0.0
    %682 = vmatpush1.msra.mxu0 %v124
    %683 = vmatprep.subr.mxu0 0.0
    %684 = vmatpush1.msra.mxu0 %v121
    %685 = vmatprep.subr.mxu0 0.0
    %686 = vmatpush1.msra.mxu0 %v118
    %687 = vmatprep.subr.mxu0 0.0
    %688 = vmatpush1.msra.mxu0 %v115
    %689 = vmatprep.subr.mxu0 0.0
    %690 = vmatpush1.msra.mxu0 %v112
    %691 = vmatprep.subr.mxu0 0.0
    %692 = vmatpush1.msra.mxu0 %v109
    %693 = vmatprep.subr.mxu0 0.0
    %694 = vmatpush1.msra.mxu0 %v106
    %695 = vmatprep.subr.mxu0 0.0
    %696 = vmatpush1.msra.mxu0 %v103
    %697 = vmatprep.subr.mxu0 0.0
    %698 = vmatpush1.msra.mxu0 %v100
    %699 = vmatprep.subr.mxu0 0.0
    %700 = vmatpush1.msra.mxu0 %v97
    %701 = vmatprep.subr.mxu0 0.0
    %702 = vmatpush1.msra.mxu0 %v94
    %703 = vmatprep.subr.mxu0 0.0
    %704 = vmatpush1.msra.mxu0 %v91
    %705 = vmatprep.subr.mxu0 0.0
    %706 = vmatpush1.msra.mxu0 %v88
    %707 = vmatprep.subr.mxu0 0.0
    %708 = vmatpush1.msra.mxu0 %v85
    %709 = vmatprep.subr.mxu0 0.0
    %710 = vmatpush2.msra.mxu0 0.0
    %711 = vmatprep.subr.mxu0 0.0
    %712 = vmatpush2.msra.mxu0 0.0
    %713 = vmatprep.subr.mxu0 0.0
    %714 = vmatpush2.msra.mxu0 0.0
    %715 = vmatprep.subr.mxu0 0.0
    %716 = vmatpush2.msra.mxu0 0.0
    %717 = vmatprep.subr.mxu0 0.0
    %718 = vmatpush2.msra.mxu0 0.0
    %719 = vmatprep.subr.mxu0 0.0
    %720 = vmatpush2.msra.mxu0 0.0
    %721 = vmatprep.subr.mxu0 0.0
    %722 = vmatpush2.msra.mxu0 0.0
    %723 = vmatprep.subr.mxu0 0.0
    %724 = vmatpush2.msra.mxu0 0.0
    %725 = vmatprep.subr.mxu0 0.0
    %726 = vmatpush2.msra.mxu0 0.0
    %727 = vmatprep.subr.mxu0 0.0
    %728 = vmatpush2.msra.mxu0 0.0
    %729 = vmatprep.subr.mxu0 0.0
    %730 = vmatpush2.msra.mxu0 0.0
    %731 = vmatprep.subr.mxu0 0.0
    %732 = vmatpush2.msra.mxu0 0.0
    %733 = vmatprep.subr.mxu0 0.0
    %734 = vmatpush2.msra.mxu0 0.0
    %735 = vmatprep.subr.mxu0 0.0
    %736 = vmatpush2.msra.mxu0 0.0
    %737 = vmatprep.subr.mxu0 0.0
    %738 = vmatpush2.msra.mxu0 0.0
    %739 = vmatprep.subr.mxu0 0.0
    %740 = vmatpush2.msra.mxu0 0.0
    %741 = vmatprep.mubr.f32.mxu0 0.0
    %742 = vmatmul.mubr.f32.gmra.mxu0 %v598
    %v743 = vpop.f32.mrf.mxu0
    %v744 = vadd.f32 0.0, %v743
    %v745 = vpop.f32.mrf.mxu0
    %746 = vdwg.mxu0
    %v747 = vadd.f32 %v603, %v673
    %v748 = vxor.u32 %v747, 2147483648
    %v749 = vmul.f32 %v748, 1.442695
    %v750 = vpow.pop %v749
    %v751 = vadd.f32 %v750, 1.0
    %v752 = vrcp.pop %v751
    %v753 = vmul.f32 1.0, %v752
    %v754 = vadd.f32 %v604, %v675
    %v755 = vxor.u32 %v754, 2147483648
    %v756 = vmul.f32 %v755, 1.442695
    %v757 = vpow.pop %v756
    %v758 = vadd.f32 %v757, 1.0
    %v759 = vrcp.pop %v758
    %v760 = vmul.f32 1.0, %v759
    %v761 = vadd.f32 %v744, %v137
    %v762 = vmul.f32 %v753, %v761
    %v763 = vadd.f32 %v605, %v762
    %v764 = vtanh.pop %v763
    %v765 = vsub.f32 1.0, %v760
    %v766 = vmul.f32 %v765, %v764
    %v767 = vmul.f32 %v760, %v598
    %v768 = vadd.f32 %v766, %v767
    %s769 = scalar_lea.vmem [#allocation3], 8
    %770 = vst [vmem:[%s769] sm:$0xff] %v768
    %s771 = smul.u32 2, 3
    %s772 = smul.addr %s771, 8
    %s773 = scalar_lea.vmem [#allocation2], %s772
    %v774 = vld [vmem:[%s773] sm:$0xff]
    %v775 = vld [vmem:[%s773 + $0x8] sm:$0xff]
    %v776 = vld [vmem:[%s773 + $0x10] sm:$0xff]
    %777 = vmatprep.subr.mxu0 %v129
    %778 = vmatpush1.msra.mxu0 %v128
    %779 = vmatprep.subr.mxu0 %v126
    %780 = vmatpush1.msra.mxu0 %v125
    %781 = vmatprep.subr.mxu0 %v123
    %782 = vmatpush1.msra.mxu0 %v122
    %783 = vmatprep.subr.mxu0 %v120
    %784 = vmatpush1.msra.mxu0 %v119
    %785 = vmatprep.subr.mxu0 %v117
    %786 = vmatpush1.msra.mxu0 %v116
    %787 = vmatprep.subr.mxu0 %v114
    %788 = vmatpush1.msra.mxu0 %v113
    %789 = vmatprep.subr.mxu0 %v111
    %790 = vmatpush1.msra.mxu0 %v110
    %791 = vmatprep.subr.mxu0 %v108
    %792 = vmatpush1.msra.mxu0 %v107
    %793 = vmatprep.subr.mxu0 %v105
    %794 = vmatpush1.msra.mxu0 %v104
    %795 = vmatprep.subr.mxu0 %v102
    %796 = vmatpush1.msra.mxu0 %v101
    %797 = vmatprep.subr.mxu0 %v99
    %798 = vmatpush1.msra.mxu0 %v98
    %799 = vmatprep.subr.mxu0 %v96
    %800 = vmatpush1.msra.mxu0 %v95
    %801 = vmatprep.subr.mxu0 %v93
    %802 = vmatpush1.msra.mxu0 %v92
    %803 = vmatprep.subr.mxu0 %v90
    %804 = vmatpush1.msra.mxu0 %v89
    %805 = vmatprep.subr.mxu0 %v87
    %806 = vmatpush1.msra.mxu0 %v86
    %807 = vmatprep.subr.mxu0 %v84
    %808 = vmatpush1.msra.mxu0 %v83
    %809 = vmatprep.subr.mxu0 0.0
    %810 = vmatpush2.msra.mxu0 0.0
    %811 = vmatprep.subr.mxu0 0.0
    %812 = vmatpush2.msra.mxu0 0.0
    %813 = vmatprep.subr.mxu0 0.0
    %814 = vmatpush2.msra.mxu0 0.0
    %815 = vmatprep.subr.mxu0 0.0
    %816 = vmatpush2.msra.mxu0 0.0
    %817 = vmatprep.subr.mxu0 0.0
    %818 = vmatpush2.msra.mxu0 0.0
    %819 = vmatprep.subr.mxu0 0.0
    %820 = vmatpush2.msra.mxu0 0.0
    %821 = vmatprep.subr.mxu0 0.0
    %822 = vmatpush2.msra.mxu0 0.0
    %823 = vmatprep.subr.mxu0 0.0
    %824 = vmatpush2.msra.mxu0 0.0
    %825 = vmatprep.subr.mxu0 0.0
    %826 = vmatpush2.msra.mxu0 0.0
    %827 = vmatprep.subr.mxu0 0.0
    %828 = vmatpush2.msra.mxu0 0.0
    %829 = vmatprep.subr.mxu0 0.0
    %830 = vmatpush2.msra.mxu0 0.0
    %831 = vmatprep.subr.mxu0 0.0
    %832 = vmatpush2.msra.mxu0 0.0
    %833 = vmatprep.subr.mxu0 0.0
    %834 = vmatpush2.msra.mxu0 0.0
    %835 = vmatprep.subr.mxu0 0.0
    %836 = vmatpush2.msra.mxu0 0.0
    %837 = vmatprep.subr.mxu0 0.0
    %838 = vmatpush2.msra.mxu0 0.0
    %839 = vmatprep.subr.mxu0 0.0
    %840 = vmatpush2.msra.mxu0 0.0
    %841 = vmatprep.mubr.f32.mxu0 0.0
    %842 = vmatmul.mubr.f32.gmra.mxu0 %v768
    %v843 = vpop.f32.mrf.mxu0
    %v844 = vadd.f32 0.0, %v843
    %v845 = vpop.f32.mrf.mxu0
    %v846 = vadd.f32 0.0, %v845
    %847 = vdwg.mxu0
    %848 = vmatprep.subr.mxu0 0.0
    %849 = vmatpush1.msra.mxu0 %v130
    %850 = vmatprep.subr.mxu0 0.0
    %851 = vmatpush1.msra.mxu0 %v127
    %852 = vmatprep.subr.mxu0 0.0
    %853 = vmatpush1.msra.mxu0 %v124
    %854 = vmatprep.subr.mxu0 0.0
    %855 = vmatpush1.msra.mxu0 %v121
    %856 = vmatprep.subr.mxu0 0.0
    %857 = vmatpush1.msra.mxu0 %v118
    %858 = vmatprep.subr.mxu0 0.0
    %859 = vmatpush1.msra.mxu0 %v115
    %860 = vmatprep.subr.mxu0 0.0
    %861 = vmatpush1.msra.mxu0 %v112
    %862 = vmatprep.subr.mxu0 0.0
    %863 = vmatpush1.msra.mxu0 %v109
    %864 = vmatprep.subr.mxu0 0.0
    %865 = vmatpush1.msra.mxu0 %v106
    %866 = vmatprep.subr.mxu0 0.0
    %867 = vmatpush1.msra.mxu0 %v103
    %868 = vmatprep.subr.mxu0 0.0
    %869 = vmatpush1.msra.mxu0 %v100
    %870 = vmatprep.subr.mxu0 0.0
    %871 = vmatpush1.msra.mxu0 %v97
    %872 = vmatprep.subr.mxu0 0.0
    %873 = vmatpush1.msra.mxu0 %v94
    %874 = vmatprep.subr.mxu0 0.0
    %875 = vmatpush1.msra.mxu0 %v91
    %876 = vmatprep.subr.mxu0 0.0
    %877 = vmatpush1.msra.mxu0 %v88
    %878 = vmatprep.subr.mxu0 0.0
    %879 = vmatpush1.msra.mxu0 %v85
    %880 = vmatprep.subr.mxu0 0.0
    %881 = vmatpush2.msra.mxu0 0.0
    %882 = vmatprep.subr.mxu0 0.0
    %883 = vmatpush2.msra.mxu0 0.0
    %884 = vmatprep.subr.mxu0 0.0
    %885 = vmatpush2.msra.mxu0 0.0
    %886 = vmatprep.subr.mxu0 0.0
    %887 = vmatpush2.msra.mxu0 0.0
    %888 = vmatprep.subr.mxu0 0.0
    %889 = vmatpush2.msra.mxu0 0.0
    %890 = vmatprep.subr.mxu0 0.0
    %891 = vmatpush2.msra.mxu0 0.0
    %892 = vmatprep.subr.mxu0 0.0
    %893 = vmatpush2.msra.mxu0 0.0
    %894 = vmatprep.subr.mxu0 0.0
    %895 = vmatpush2.msra.mxu0 0.0
    %896 = vmatprep.subr.mxu0 0.0
    %897 = vmatpush2.msra.mxu0 0.0
    %898 = vmatprep.subr.mxu0 0.0
    %899 = vmatpush2.msra.mxu0 0.0
    %900 = vmatprep.subr.mxu0 0.0
    %901 = vmatpush2.msra.mxu0 0.0
    %902 = vmatprep.subr.mxu0 0.0
    %903 = vmatpush2.msra.mxu0 0.0
    %904 = vmatprep.subr.mxu0 0.0
    %905 = vmatpush2.msra.mxu0 0.0
    %906 = vmatprep.subr.mxu0 0.0
    %907 = vmatpush2.msra.mxu0 0.0
    %908 = vmatprep.subr.mxu0 0.0
    %909 = vmatpush2.msra.mxu0 0.0
    %910 = vmatprep.subr.mxu0 0.0
    %911 = vmatpush2.msra.mxu0 0.0
    %912 = vmatprep.mubr.f32.mxu0 0.0
    %913 = vmatmul.mubr.f32.gmra.mxu0 %v768
    %v914 = vpop.f32.mrf.mxu0
    %v915 = vadd.f32 0.0, %v914
    %v916 = vpop.f32.mrf.mxu0
    %917 = vdwg.mxu0
    %v918 = vadd.f32 %v774, %v844
    %v919 = vxor.u32 %v918, 2147483648
    %v920 = vmul.f32 %v919, 1.442695
    %v921 = vpow.pop %v920
    %v922 = vadd.f32 %v921, 1.0
    %v923 = vrcp.pop %v922
    %v924 = vmul.f32 1.0, %v923
    %v925 = vadd.f32 %v775, %v846
    %v926 = vxor.u32 %v925, 2147483648
    %v927 = vmul.f32 %v926, 1.442695
    %v928 = vpow.pop %v927
    %v929 = vadd.f32 %v928, 1.0
    %v930 = vrcp.pop %v929
    %v931 = vmul.f32 1.0, %v930
    %v932 = vadd.f32 %v915, %v137
    %v933 = vmul.f32 %v924, %v932
    %v934 = vadd.f32 %v776, %v933
    %v935 = vtanh.pop %v934
    %v936 = vsub.f32 1.0, %v931
    %v937 = vmul.f32 %v936, %v935
    %v938 = vmul.f32 %v931, %v768
    %v939 = vadd.f32 %v937, %v938
    %s940 = scalar_lea.vmem [#allocation3], 16
    %941 = vst [vmem:[%s940] sm:$0xff] %v939
    %s942 = smul.u32 3, 3
    %s943 = smul.addr %s942, 8
    %s944 = scalar_lea.vmem [#allocation2], %s943
    %v945 = vld [vmem:[%s944] sm:$0xff]
    %v946 = vld [vmem:[%s944 + $0x8] sm:$0xff]
    %v947 = vld [vmem:[%s944 + $0x10] sm:$0xff]
    %948 = vmatprep.subr.mxu0 %v129
    %949 = vmatpush1.msra.mxu0 %v128
    %950 = vmatprep.subr.mxu0 %v126
    %951 = vmatpush1.msra.mxu0 %v125
    %952 = vmatprep.subr.mxu0 %v123
    %953 = vmatpush1.msra.mxu0 %v122
    %954 = vmatprep.subr.mxu0 %v120
    %955 = vmatpush1.msra.mxu0 %v119
    %956 = vmatprep.subr.mxu0 %v117
    %957 = vmatpush1.msra.mxu0 %v116
    %958 = vmatprep.subr.mxu0 %v114
    %959 = vmatpush1.msra.mxu0 %v113
    %960 = vmatprep.subr.mxu0 %v111
    %961 = vmatpush1.msra.mxu0 %v110
    %962 = vmatprep.subr.mxu0 %v108
    %963 = vmatpush1.msra.mxu0 %v107
    %964 = vmatprep.subr.mxu0 %v105
    %965 = vmatpush1.msra.mxu0 %v104
    %966 = vmatprep.subr.mxu0 %v102
    %967 = vmatpush1.msra.mxu0 %v101
    %968 = vmatprep.subr.mxu0 %v99
    %969 = vmatpush1.msra.mxu0 %v98
    %970 = vmatprep.subr.mxu0 %v96
    %971 = vmatpush1.msra.mxu0 %v95
    %972 = vmatprep.subr.mxu0 %v93
    %973 = vmatpush1.msra.mxu0 %v92
    %974 = vmatprep.subr.mxu0 %v90
    %975 = vmatpush1.msra.mxu0 %v89
    %976 = vmatprep.subr.mxu0 %v87
    %977 = vmatpush1.msra.mxu0 %v86
    %978 = vmatprep.subr.mxu0 %v84
    %979 = vmatpush1.msra.mxu0 %v83
    %980 = vmatprep.subr.mxu0 0.0
    %981 = vmatpush2.msra.mxu0 0.0
    %982 = vmatprep.subr.mxu0 0.0
    %983 = vmatpush2.msra.mxu0 0.0
    %984 = vmatprep.subr.mxu0 0.0
    %985 = vmatpush2.msra.mxu0 0.0
    %986 = vmatprep.subr.mxu0 0.0
    %987 = vmatpush2.msra.mxu0 0.0
    %988 = vmatprep.subr.mxu0 0.0
    %989 = vmatpush2.msra.mxu0 0.0
    %990 = vmatprep.subr.mxu0 0.0
    %991 = vmatpush2.msra.mxu0 0.0
    %992 = vmatprep.subr.mxu0 0.0
    %993 = vmatpush2.msra.mxu0 0.0
    %994 = vmatprep.subr.mxu0 0.0
    %995 = vmatpush2.msra.mxu0 0.0
    %996 = vmatprep.subr.mxu0 0.0
    %997 = vmatpush2.msra.mxu0 0.0
    %998 = vmatprep.subr.mxu0 0.0
    %999 = vmatpush2.msra.mxu0 0.0
    %1000 = vmatprep.subr.mxu0 0.0
    %1001 = vmatpush2.msra.mxu0 0.0
    %1002 = vmatprep.subr.mxu0 0.0
    %1003 = vmatpush2.msra.mxu0 0.0
    %1004 = vmatprep.subr.mxu0 0.0
    %1005 = vmatpush2.msra.mxu0 0.0
    %1006 = vmatprep.subr.mxu0 0.0
    %1007 = vmatpush2.msra.mxu0 0.0
    %1008 = vmatprep.subr.mxu0 0.0
    %1009 = vmatpush2.msra.mxu0 0.0
    %1010 = vmatprep.subr.mxu0 0.0
    %1011 = vmatpush2.msra.mxu0 0.0
    %1012 = vmatprep.mubr.f32.mxu0 0.0
    %1013 = vmatmul.mubr.f32.gmra.mxu0 %v939
    %v1014 = vpop.f32.mrf.mxu0
    %v1015 = vadd.f32 0.0, %v1014
    %v1016 = vpop.f32.mrf.mxu0
    %v1017 = vadd.f32 0.0, %v1016
    %1018 = vdwg.mxu0
    %1019 = vmatprep.subr.mxu0 0.0
    %1020 = vmatpush1.msra.mxu0 %v130
    %1021 = vmatprep.subr.mxu0 0.0
    %1022 = vmatpush1.msra.mxu0 %v127
    %1023 = vmatprep.subr.mxu0 0.0
    %1024 = vmatpush1.msra.mxu0 %v124
    %1025 = vmatprep.subr.mxu0 0.0
    %1026 = vmatpush1.msra.mxu0 %v121
    %1027 = vmatprep.subr.mxu0 0.0
    %1028 = vmatpush1.msra.mxu0 %v118
    %1029 = vmatprep.subr.mxu0 0.0
    %1030 = vmatpush1.msra.mxu0 %v115
    %1031 = vmatprep.subr.mxu0 0.0
    %1032 = vmatpush1.msra.mxu0 %v112
    %1033 = vmatprep.subr.mxu0 0.0
    %1034 = vmatpush1.msra.mxu0 %v109
    %1035 = vmatprep.subr.mxu0 0.0
    %1036 = vmatpush1.msra.mxu0 %v106
    %1037 = vmatprep.subr.mxu0 0.0
    %1038 = vmatpush1.msra.mxu0 %v103
    %1039 = vmatprep.subr.mxu0 0.0
    %1040 = vmatpush1.msra.mxu0 %v100
    %1041 = vmatprep.subr.mxu0 0.0
    %1042 = vmatpush1.msra.mxu0 %v97
    %1043 = vmatprep.subr.mxu0 0.0
    %1044 = vmatpush1.msra.mxu0 %v94
    %1045 = vmatprep.subr.mxu0 0.0
    %1046 = vmatpush1.msra.mxu0 %v91
    %1047 = vmatprep.subr.mxu0 0.0
    %1048 = vmatpush1.msra.mxu0 %v88
    %1049 = vmatprep.subr.mxu0 0.0
    %1050 = vmatpush1.msra.mxu0 %v85
    %1051 = vmatprep.subr.mxu0 0.0
    %1052 = vmatpush2.msra.mxu0 0.0
    %1053 = vmatprep.subr.mxu0 0.0
    %1054 = vmatpush2.msra.mxu0 0.0
    %1055 = vmatprep.subr.mxu0 0.0
    %1056 = vmatpush2.msra.mxu0 0.0
    %1057 = vmatprep.subr.mxu0 0.0
    %1058 = vmatpush2.msra.mxu0 0.0
    %1059 = vmatprep.subr.mxu0 0.0
    %1060 = vmatpush2.msra.mxu0 0.0
    %1061 = vmatprep.subr.mxu0 0.0
    %1062 = vmatpush2.msra.mxu0 0.0
    %1063 = vmatprep.subr.mxu0 0.0
    %1064 = vmatpush2.msra.mxu0 0.0
    %1065 = vmatprep.subr.mxu0 0.0
    %1066 = vmatpush2.msra.mxu0 0.0
    %1067 = vmatprep.subr.mxu0 0.0
    %1068 = vmatpush2.msra.mxu0 0.0
    %1069 = vmatprep.subr.mxu0 0.0
    %1070 = vmatpush2.msra.mxu0 0.0
    %1071 = vmatprep.subr.mxu0 0.0
    %1072 = vmatpush2.msra.mxu0 0.0
    %1073 = vmatprep.subr.mxu0 0.0
    %1074 = vmatpush2.msra.mxu0 0.0
    %1075 = vmatprep.subr.mxu0 0.0
    %1076 = vmatpush2.msra.mxu0 0.0
    %1077 = vmatprep.subr.mxu0 0.0
    %1078 = vmatpush2.msra.mxu0 0.0
    %1079 = vmatprep.subr.mxu0 0.0
    %1080 = vmatpush2.msra.mxu0 0.0
    %1081 = vmatprep.subr.mxu0 0.0
    %1082 = vmatpush2.msra.mxu0 0.0
    %1083 = vmatprep.mubr.f32.mxu0 0.0
    %1084 = vmatmul.mubr.f32.gmra.mxu0 %v939
    %v1085 = vpop.f32.mrf.mxu0
    %v1086 = vadd.f32 0.0, %v1085
    %v1087 = vpop.f32.mrf.mxu0
    %1088 = vdwg.mxu0
    %v1089 = vadd.f32 %v945, %v1015
    %v1090 = vxor.u32 %v1089, 2147483648
    %v1091 = vmul.f32 %v1090, 1.442695
    %v1092 = vpow.pop %v1091
    %v1093 = vadd.f32 %v1092, 1.0
    %v1094 = vrcp.pop %v1093
    %v1095 = vmul.f32 1.0, %v1094
    %v1096 = vadd.f32 %v946, %v1017
    %v1097 = vxor.u32 %v1096, 2147483648
    %v1098 = vmul.f32 %v1097, 1.442695
    %v1099 = vpow.pop %v1098
    %v1100 = vadd.f32 %v1099, 1.0
    %v1101 = vrcp.pop %v1100
    %v1102 = vmul.f32 1.0, %v1101
    %v1103 = vadd.f32 %v1086, %v137
    %v1104 = vmul.f32 %v1095, %v1103
    %v1105 = vadd.f32 %v947, %v1104
    %v1106 = vtanh.pop %v1105
    %v1107 = vsub.f32 1.0, %v1102
    %v1108 = vmul.f32 %v1107, %v1106
    %v1109 = vmul.f32 %v1102, %v939
    %v1110 = vadd.f32 %v1108, %v1109
    %s1111 = scalar_lea.vmem [#allocation3], 24
    %1112 = vst [vmem:[%s1111] sm:$0xff] %v1110
    %s1113 = smul.u32 4, 3
    %s1114 = smul.addr %s1113, 8
    %s1115 = scalar_lea.vmem [#allocation2], %s1114
    %v1116 = vld [vmem:[%s1115] sm:$0xff]
    %v1117 = vld [vmem:[%s1115 + $0x8] sm:$0xff]
    %v1118 = vld [vmem:[%s1115 + $0x10] sm:$0xff]
    %1119 = vmatprep.subr.mxu0 %v129
    %1120 = vmatpush1.msra.mxu0 %v128
    %1121 = vmatprep.subr.mxu0 %v126
    %1122 = vmatpush1.msra.mxu0 %v125
    %1123 = vmatprep.subr.mxu0 %v123
    %1124 = vmatpush1.msra.mxu0 %v122
    %1125 = vmatprep.subr.mxu0 %v120
    %1126 = vmatpush1.msra.mxu0 %v119
    %1127 = vmatprep.subr.mxu0 %v117
    %1128 = vmatpush1.msra.mxu0 %v116
    %1129 = vmatprep.subr.mxu0 %v114
    %1130 = vmatpush1.msra.mxu0 %v113
    %1131 = vmatprep.subr.mxu0 %v111
    %1132 = vmatpush1.msra.mxu0 %v110
    %1133 = vmatprep.subr.mxu0 %v108
    %1134 = vmatpush1.msra.mxu0 %v107
    %1135 = vmatprep.subr.mxu0 %v105
    %1136 = vmatpush1.msra.mxu0 %v104
    %1137 = vmatprep.subr.mxu0 %v102
    %1138 = vmatpush1.msra.mxu0 %v101
    %1139 = vmatprep.subr.mxu0 %v99
    %1140 = vmatpush1.msra.mxu0 %v98
    %1141 = vmatprep.subr.mxu0 %v96
    %1142 = vmatpush1.msra.mxu0 %v95
    %1143 = vmatprep.subr.mxu0 %v93
    %1144 = vmatpush1.msra.mxu0 %v92
    %1145 = vmatprep.subr.mxu0 %v90
    %1146 = vmatpush1.msra.mxu0 %v89
    %1147 = vmatprep.subr.mxu0 %v87
    %1148 = vmatpush1.msra.mxu0 %v86
    %1149 = vmatprep.subr.mxu0 %v84
    %1150 = vmatpush1.msra.mxu0 %v83
    %1151 = vmatprep.subr.mxu0 0.0
    %1152 = vmatpush2.msra.mxu0 0.0
    %1153 = vmatprep.subr.mxu0 0.0
    %1154 = vmatpush2.msra.mxu0 0.0
    %1155 = vmatprep.subr.mxu0 0.0
    %1156 = vmatpush2.msra.mxu0 0.0
    %1157 = vmatprep.subr.mxu0 0.0
    %1158 = vmatpush2.msra.mxu0 0.0
    %1159 = vmatprep.subr.mxu0 0.0
    %1160 = vmatpush2.msra.mxu0 0.0
    %1161 = vmatprep.subr.mxu0 0.0
    %1162 = vmatpush2.msra.mxu0 0.0
    %1163 = vmatprep.subr.mxu0 0.0
    %1164 = vmatpush2.msra.mxu0 0.0
    %1165 = vmatprep.subr.mxu0 0.0
    %1166 = vmatpush2.msra.mxu0 0.0
    %1167 = vmatprep.subr.mxu0 0.0
    %1168 = vmatpush2.msra.mxu0 0.0
    %1169 = vmatprep.subr.mxu0 0.0
    %1170 = vmatpush2.msra.mxu0 0.0
    %1171 = vmatprep.subr.mxu0 0.0
    %1172 = vmatpush2.msra.mxu0 0.0
    %1173 = vmatprep.subr.mxu0 0.0
    %1174 = vmatpush2.msra.mxu0 0.0
    %1175 = vmatprep.subr.mxu0 0.0
    %1176 = vmatpush2.msra.mxu0 0.0
    %1177 = vmatprep.subr.mxu0 0.0
    %1178 = vmatpush2.msra.mxu0 0.0
    %1179 = vmatprep.subr.mxu0 0.0
    %1180 = vmatpush2.msra.mxu0 0.0
    %1181 = vmatprep.subr.mxu0 0.0
    %1182 = vmatpush2.msra.mxu0 0.0
    %1183 = vmatprep.mubr.f32.mxu0 0.0
    %1184 = vmatmul.mubr.f32.gmra.mxu0 %v1110
    %v1185 = vpop.f32.mrf.mxu0
    %v1186 = vadd.f32 0.0, %v1185
    %v1187 = vpop.f32.mrf.mxu0
    %v1188 = vadd.f32 0.0, %v1187
    %1189 = vdwg.mxu0
    %1190 = vmatprep.subr.mxu0 0.0
    %1191 = vmatpush1.msra.mxu0 %v130
    %1192 = vmatprep.subr.mxu0 0.0
    %1193 = vmatpush1.msra.mxu0 %v127
    %1194 = vmatprep.subr.mxu0 0.0
    %1195 = vmatpush1.msra.mxu0 %v124
    %1196 = vmatprep.subr.mxu0 0.0
    %1197 = vmatpush1.msra.mxu0 %v121
    %1198 = vmatprep.subr.mxu0 0.0
    %1199 = vmatpush1.msra.mxu0 %v118
    %1200 = vmatprep.subr.mxu0 0.0
    %1201 = vmatpush1.msra.mxu0 %v115
    %1202 = vmatprep.subr.mxu0 0.0
    %1203 = vmatpush1.msra.mxu0 %v112
    %1204 = vmatprep.subr.mxu0 0.0
    %1205 = vmatpush1.msra.mxu0 %v109
    %1206 = vmatprep.subr.mxu0 0.0
    %1207 = vmatpush1.msra.mxu0 %v106
    %1208 = vmatprep.subr.mxu0 0.0
    %1209 = vmatpush1.msra.mxu0 %v103
    %1210 = vmatprep.subr.mxu0 0.0
    %1211 = vmatpush1.msra.mxu0 %v100
    %1212 = vmatprep.subr.mxu0 0.0
    %1213 = vmatpush1.msra.mxu0 %v97
    %1214 = vmatprep.subr.mxu0 0.0
    %1215 = vmatpush1.msra.mxu0 %v94
    %1216 = vmatprep.subr.mxu0 0.0
    %1217 = vmatpush1.msra.mxu0 %v91
    %1218 = vmatprep.subr.mxu0 0.0
    %1219 = vmatpush1.msra.mxu0 %v88
    %1220 = vmatprep.subr.mxu0 0.0
    %1221 = vmatpush1.msra.mxu0 %v85
    %1222 = vmatprep.subr.mxu0 0.0
    %1223 = vmatpush2.msra.mxu0 0.0
    %1224 = vmatprep.subr.mxu0 0.0
    %1225 = vmatpush2.msra.mxu0 0.0
    %1226 = vmatprep.subr.mxu0 0.0
    %1227 = vmatpush2.msra.mxu0 0.0
    %1228 = vmatprep.subr.mxu0 0.0
    %1229 = vmatpush2.msra.mxu0 0.0
    %1230 = vmatprep.subr.mxu0 0.0
    %1231 = vmatpush2.msra.mxu0 0.0
    %1232 = vmatprep.subr.mxu0 0.0
    %1233 = vmatpush2.msra.mxu0 0.0
    %1234 = vmatprep.subr.mxu0 0.0
    %1235 = vmatpush2.msra.mxu0 0.0
    %1236 = vmatprep.subr.mxu0 0.0
    %1237 = vmatpush2.msra.mxu0 0.0
    %1238 = vmatprep.subr.mxu0 0.0
    %1239 = vmatpush2.msra.mxu0 0.0
    %1240 = vmatprep.subr.mxu0 0.0
    %1241 = vmatpush2.msra.mxu0 0.0
    %1242 = vmatprep.subr.mxu0 0.0
    %1243 = vmatpush2.msra.mxu0 0.0
    %1244 = vmatprep.subr.mxu0 0.0
    %1245 = vmatpush2.msra.mxu0 0.0
    %1246 = vmatprep.subr.mxu0 0.0
    %1247 = vmatpush2.msra.mxu0 0.0
    %1248 = vmatprep.subr.mxu0 0.0
    %1249 = vmatpush2.msra.mxu0 0.0
    %1250 = vmatprep.subr.mxu0 0.0
    %1251 = vmatpush2.msra.mxu0 0.0
    %1252 = vmatprep.subr.mxu0 0.0
    %1253 = vmatpush2.msra.mxu0 0.0
    %1254 = vmatprep.mubr.f32.mxu0 0.0
    %1255 = vmatmul.mubr.f32.gmra.mxu0 %v1110
    %v1256 = vpop.f32.mrf.mxu0
    %v1257 = vadd.f32 0.0, %v1256
    %v1258 = vpop.f32.mrf.mxu0
    %1259 = vdwg.mxu0
    %v1260 = vadd.f32 %v1116, %v1186
    %v1261 = vxor.u32 %v1260, 2147483648
    %v1262 = vmul.f32 %v1261, 1.442695
    %v1263 = vpow.pop %v1262
    %v1264 = vadd.f32 %v1263, 1.0
    %v1265 = vrcp.pop %v1264
    %v1266 = vmul.f32 1.0, %v1265
    %v1267 = vadd.f32 %v1117, %v1188
    %v1268 = vxor.u32 %v1267, 2147483648
    %v1269 = vmul.f32 %v1268, 1.442695
    %v1270 = vpow.pop %v1269
    %v1271 = vadd.f32 %v1270, 1.0
    %v1272 = vrcp.pop %v1271
    %v1273 = vmul.f32 1.0, %v1272
    %v1274 = vadd.f32 %v1257, %v137
    %v1275 = vmul.f32 %v1266, %v1274
    %v1276 = vadd.f32 %v1118, %v1275
    %v1277 = vtanh.pop %v1276
    %v1278 = vsub.f32 1.0, %v1273
    %v1279 = vmul.f32 %v1278, %v1277
    %v1280 = vmul.f32 %v1273, %v1110
    %v1281 = vadd.f32 %v1279, %v1280
    %s1282 = scalar_lea.vmem [#allocation3], 32
    %1283 = vst [vmem:[%s1282] sm:$0xff] %v1281
    %s1284 = smul.u32 5, 3
    %s1285 = smul.addr %s1284, 8
    %s1286 = scalar_lea.vmem [#allocation2], %s1285
    %v1287 = vld [vmem:[%s1286] sm:$0xff]
    %v1288 = vld [vmem:[%s1286 + $0x8] sm:$0xff]
    %v1289 = vld [vmem:[%s1286 + $0x10] sm:$0xff]
    %1290 = vmatprep.subr.mxu0 %v129
    %1291 = vmatpush1.msra.mxu0 %v128
    %1292 = vmatprep.subr.mxu0 %v126
    %1293 = vmatpush1.msra.mxu0 %v125
    %1294 = vmatprep.subr.mxu0 %v123
    %1295 = vmatpush1.msra.mxu0 %v122
    %1296 = vmatprep.subr.mxu0 %v120
    %1297 = vmatpush1.msra.mxu0 %v119
    %1298 = vmatprep.subr.mxu0 %v117
    %1299 = vmatpush1.msra.mxu0 %v116
    %1300 = vmatprep.subr.mxu0 %v114
    %1301 = vmatpush1.msra.mxu0 %v113
    %1302 = vmatprep.subr.mxu0 %v111
    %1303 = vmatpush1.msra.mxu0 %v110
    %1304 = vmatprep.subr.mxu0 %v108
    %1305 = vmatpush1.msra.mxu0 %v107
    %1306 = vmatprep.subr.mxu0 %v105
    %1307 = vmatpush1.msra.mxu0 %v104
    %1308 = vmatprep.subr.mxu0 %v102
    %1309 = vmatpush1.msra.mxu0 %v101
    %1310 = vmatprep.subr.mxu0 %v99
    %1311 = vmatpush1.msra.mxu0 %v98
    %1312 = vmatprep.subr.mxu0 %v96
    %1313 = vmatpush1.msra.mxu0 %v95
    %1314 = vmatprep.subr.mxu0 %v93
    %1315 = vmatpush1.msra.mxu0 %v92
    %1316 = vmatprep.subr.mxu0 %v90
    %1317 = vmatpush1.msra.mxu0 %v89
    %1318 = vmatprep.subr.mxu0 %v87
    %1319 = vmatpush1.msra.mxu0 %v86
    %1320 = vmatprep.subr.mxu0 %v84
    %1321 = vmatpush1.msra.mxu0 %v83
    %1322 = vmatprep.subr.mxu0 0.0
    %1323 = vmatpush2.msra.mxu0 0.0
    %1324 = vmatprep.subr.mxu0 0.0
    %1325 = vmatpush2.msra.mxu0 0.0
    %1326 = vmatprep.subr.mxu0 0.0
    %1327 = vmatpush2.msra.mxu0 0.0
    %1328 = vmatprep.subr.mxu0 0.0
    %1329 = vmatpush2.msra.mxu0 0.0
    %1330 = vmatprep.subr.mxu0 0.0
    %1331 = vmatpush2.msra.mxu0 0.0
    %1332 = vmatprep.subr.mxu0 0.0
    %1333 = vmatpush2.msra.mxu0 0.0
    %1334 = vmatprep.subr.mxu0 0.0
    %1335 = vmatpush2.msra.mxu0 0.0
    %1336 = vmatprep.subr.mxu0 0.0
    %1337 = vmatpush2.msra.mxu0 0.0
    %1338 = vmatprep.subr.mxu0 0.0
    %1339 = vmatpush2.msra.mxu0 0.0
    %1340 = vmatprep.subr.mxu0 0.0
    %1341 = vmatpush2.msra.mxu0 0.0
    %1342 = vmatprep.subr.mxu0 0.0
    %1343 = vmatpush2.msra.mxu0 0.0
    %1344 = vmatprep.subr.mxu0 0.0
    %1345 = vmatpush2.msra.mxu0 0.0
    %1346 = vmatprep.subr.mxu0 0.0
    %1347 = vmatpush2.msra.mxu0 0.0
    %1348 = vmatprep.subr.mxu0 0.0
    %1349 = vmatpush2.msra.mxu0 0.0
    %1350 = vmatprep.subr.mxu0 0.0
    %1351 = vmatpush2.msra.mxu0 0.0
    %1352 = vmatprep.subr.mxu0 0.0
    %1353 = vmatpush2.msra.mxu0 0.0
    %1354 = vmatprep.mubr.f32.mxu0 0.0
    %1355 = vmatmul.mubr.f32.gmra.mxu0 %v1281
    %v1356 = vpop.f32.mrf.mxu0
    %v1357 = vadd.f32 0.0, %v1356
    %v1358 = vpop.f32.mrf.mxu0
    %v1359 = vadd.f32 0.0, %v1358
    %1360 = vdwg.mxu0
    %1361 = vmatprep.subr.mxu0 0.0
    %1362 = vmatpush1.msra.mxu0 %v130
    %1363 = vmatprep.subr.mxu0 0.0
    %1364 = vmatpush1.msra.mxu0 %v127
    %1365 = vmatprep.subr.mxu0 0.0
    %1366 = vmatpush1.msra.mxu0 %v124
    %1367 = vmatprep.subr.mxu0 0.0
    %1368 = vmatpush1.msra.mxu0 %v121
    %1369 = vmatprep.subr.mxu0 0.0
    %1370 = vmatpush1.msra.mxu0 %v118
    %1371 = vmatprep.subr.mxu0 0.0
    %1372 = vmatpush1.msra.mxu0 %v115
    %1373 = vmatprep.subr.mxu0 0.0
    %1374 = vmatpush1.msra.mxu0 %v112
    %1375 = vmatprep.subr.mxu0 0.0
    %1376 = vmatpush1.msra.mxu0 %v109
    %1377 = vmatprep.subr.mxu0 0.0
    %1378 = vmatpush1.msra.mxu0 %v106
    %1379 = vmatprep.subr.mxu0 0.0
    %1380 = vmatpush1.msra.mxu0 %v103
    %1381 = vmatprep.subr.mxu0 0.0
    %1382 = vmatpush1.msra.mxu0 %v100
    %1383 = vmatprep.subr.mxu0 0.0
    %1384 = vmatpush1.msra.mxu0 %v97
    %1385 = vmatprep.subr.mxu0 0.0
    %1386 = vmatpush1.msra.mxu0 %v94
    %1387 = vmatprep.subr.mxu0 0.0
    %1388 = vmatpush1.msra.mxu0 %v91
    %1389 = vmatprep.subr.mxu0 0.0
    %1390 = vmatpush1.msra.mxu0 %v88
    %1391 = vmatprep.subr.mxu0 0.0
    %1392 = vmatpush1.msra.mxu0 %v85
    %1393 = vmatprep.subr.mxu0 0.0
    %1394 = vmatpush2.msra.mxu0 0.0
    %1395 = vmatprep.subr.mxu0 0.0
    %1396 = vmatpush2.msra.mxu0 0.0
    %1397 = vmatprep.subr.mxu0 0.0
    %1398 = vmatpush2.msra.mxu0 0.0
    %1399 = vmatprep.subr.mxu0 0.0
    %1400 = vmatpush2.msra.mxu0 0.0
    %1401 = vmatprep.subr.mxu0 0.0
    %1402 = vmatpush2.msra.mxu0 0.0
    %1403 = vmatprep.subr.mxu0 0.0
    %1404 = vmatpush2.msra.mxu0 0.0
    %1405 = vmatprep.subr.mxu0 0.0
    %1406 = vmatpush2.msra.mxu0 0.0
    %1407 = vmatprep.subr.mxu0 0.0
    %1408 = vmatpush2.msra.mxu0 0.0
    %1409 = vmatprep.subr.mxu0 0.0
    %1410 = vmatpush2.msra.mxu0 0.0
    %1411 = vmatprep.subr.mxu0 0.0
    %1412 = vmatpush2.msra.mxu0 0.0
    %1413 = vmatprep.subr.mxu0 0.0
    %1414 = vmatpush2.msra.mxu0 0.0
    %1415 = vmatprep.subr.mxu0 0.0
    %1416 = vmatpush2.msra.mxu0 0.0
    %1417 = vmatprep.subr.mxu0 0.0
    %1418 = vmatpush2.msra.mxu0 0.0
    %1419 = vmatprep.subr.mxu0 0.0
    %1420 = vmatpush2.msra.mxu0 0.0
    %1421 = vmatprep.subr.mxu0 0.0
    %1422 = vmatpush2.msra.mxu0 0.0
    %1423 = vmatprep.subr.mxu0 0.0
    %1424 = vmatpush2.msra.mxu0 0.0
    %1425 = vmatprep.mubr.f32.mxu0 0.0
    %1426 = vmatmul.mubr.f32.gmra.mxu0 %v1281
    %v1427 = vpop.f32.mrf.mxu0
    %v1428 = vadd.f32 0.0, %v1427
    %v1429 = vpop.f32.mrf.mxu0
    %1430 = vdwg.mxu0
    %v1431 = vadd.f32 %v1287, %v1357
    %v1432 = vxor.u32 %v1431, 2147483648
    %v1433 = vmul.f32 %v1432, 1.442695
    %v1434 = vpow.pop %v1433
    %v1435 = vadd.f32 %v1434, 1.0
    %v1436 = vrcp.pop %v1435
    %v1437 = vmul.f32 1.0, %v1436
    %v1438 = vadd.f32 %v1288, %v1359
    %v1439 = vxor.u32 %v1438, 2147483648
    %v1440 = vmul.f32 %v1439, 1.442695
    %v1441 = vpow.pop %v1440
    %v1442 = vadd.f32 %v1441, 1.0
    %v1443 = vrcp.pop %v1442
    %v1444 = vmul.f32 1.0, %v1443
    %v1445 = vadd.f32 %v1428, %v137
    %v1446 = vmul.f32 %v1437, %v1445
    %v1447 = vadd.f32 %v1289, %v1446
    %v1448 = vtanh.pop %v1447
    %v1449 = vsub.f32 1.0, %v1444
    %v1450 = vmul.f32 %v1449, %v1448
    %v1451 = vmul.f32 %v1444, %v1281
    %v1452 = vadd.f32 %v1450, %v1451
    %s1453 = scalar_lea.vmem [#allocation3], 40
    %1454 = vst [vmem:[%s1453] sm:$0xff] %v1452
    %s1455 = smul.u32 6, 3
    %s1456 = smul.addr %s1455, 8
    %s1457 = scalar_lea.vmem [#allocation2], %s1456
    %v1458 = vld [vmem:[%s1457] sm:$0xff]
    %v1459 = vld [vmem:[%s1457 + $0x8] sm:$0xff]
    %v1460 = vld [vmem:[%s1457 + $0x10] sm:$0xff]
    %1461 = vmatprep.subr.mxu0 %v129
    %1462 = vmatpush1.msra.mxu0 %v128
    %1463 = vmatprep.subr.mxu0 %v126
    %1464 = vmatpush1.msra.mxu0 %v125
    %1465 = vmatprep.subr.mxu0 %v123
    %1466 = vmatpush1.msra.mxu0 %v122
    %1467 = vmatprep.subr.mxu0 %v120
    %1468 = vmatpush1.msra.mxu0 %v119
    %1469 = vmatprep.subr.mxu0 %v117
    %1470 = vmatpush1.msra.mxu0 %v116
    %1471 = vmatprep.subr.mxu0 %v114
    %1472 = vmatpush1.msra.mxu0 %v113
    %1473 = vmatprep.subr.mxu0 %v111
    %1474 = vmatpush1.msra.mxu0 %v110
    %1475 = vmatprep.subr.mxu0 %v108
    %1476 = vmatpush1.msra.mxu0 %v107
    %1477 = vmatprep.subr.mxu0 %v105
    %1478 = vmatpush1.msra.mxu0 %v104
    %1479 = vmatprep.subr.mxu0 %v102
    %1480 = vmatpush1.msra.mxu0 %v101
    %1481 = vmatprep.subr.mxu0 %v99
    %1482 = vmatpush1.msra.mxu0 %v98
    %1483 = vmatprep.subr.mxu0 %v96
    %1484 = vmatpush1.msra.mxu0 %v95
    %1485 = vmatprep.subr.mxu0 %v93
    %1486 = vmatpush1.msra.mxu0 %v92
    %1487 = vmatprep.subr.mxu0 %v90
    %1488 = vmatpush1.msra.mxu0 %v89
    %1489 = vmatprep.subr.mxu0 %v87
    %1490 = vmatpush1.msra.mxu0 %v86
    %1491 = vmatprep.subr.mxu0 %v84
    %1492 = vmatpush1.msra.mxu0 %v83
    %1493 = vmatprep.subr.mxu0 0.0
    %1494 = vmatpush2.msra.mxu0 0.0
    %1495 = vmatprep.subr.mxu0 0.0
    %1496 = vmatpush2.msra.mxu0 0.0
    %1497 = vmatprep.subr.mxu0 0.0
    %1498 = vmatpush2.msra.mxu0 0.0
    %1499 = vmatprep.subr.mxu0 0.0
    %1500 = vmatpush2.msra.mxu0 0.0
    %1501 = vmatprep.subr.mxu0 0.0
    %1502 = vmatpush2.msra.mxu0 0.0
    %1503 = vmatprep.subr.mxu0 0.0
    %1504 = vmatpush2.msra.mxu0 0.0
    %1505 = vmatprep.subr.mxu0 0.0
    %1506 = vmatpush2.msra.mxu0 0.0
    %1507 = vmatprep.subr.mxu0 0.0
    %1508 = vmatpush2.msra.mxu0 0.0
    %1509 = vmatprep.subr.mxu0 0.0
    %1510 = vmatpush2.msra.mxu0 0.0
    %1511 = vmatprep.subr.mxu0 0.0
    %1512 = vmatpush2.msra.mxu0 0.0
    %1513 = vmatprep.subr.mxu0 0.0
    %1514 = vmatpush2.msra.mxu0 0.0
    %1515 = vmatprep.subr.mxu0 0.0
    %1516 = vmatpush2.msra.mxu0 0.0
    %1517 = vmatprep.subr.mxu0 0.0
    %1518 = vmatpush2.msra.mxu0 0.0
    %1519 = vmatprep.subr.mxu0 0.0
    %1520 = vmatpush2.msra.mxu0 0.0
    %1521 = vmatprep.subr.mxu0 0.0
    %1522 = vmatpush2.msra.mxu0 0.0
    %1523 = vmatprep.subr.mxu0 0.0
    %1524 = vmatpush2.msra.mxu0 0.0
    %1525 = vmatprep.mubr.f32.mxu0 0.0
    %1526 = vmatmul.mubr.f32.gmra.mxu0 %v1452
    %v1527 = vpop.f32.mrf.mxu0
    %v1528 = vadd.f32 0.0, %v1527
    %v1529 = vpop.f32.mrf.mxu0
    %v1530 = vadd.f32 0.0, %v1529
    %1531 = vdwg.mxu0
    %1532 = vmatprep.subr.mxu0 0.0
    %1533 = vmatpush1.msra.mxu0 %v130
    %1534 = vmatprep.subr.mxu0 0.0
    %1535 = vmatpush1.msra.mxu0 %v127
    %1536 = vmatprep.subr.mxu0 0.0
    %1537 = vmatpush1.msra.mxu0 %v124
    %1538 = vmatprep.subr.mxu0 0.0
    %1539 = vmatpush1.msra.mxu0 %v121
    %1540 = vmatprep.subr.mxu0 0.0
    %1541 = vmatpush1.msra.mxu0 %v118
    %1542 = vmatprep.subr.mxu0 0.0
    %1543 = vmatpush1.msra.mxu0 %v115
    %1544 = vmatprep.subr.mxu0 0.0
    %1545 = vmatpush1.msra.mxu0 %v112
    %1546 = vmatprep.subr.mxu0 0.0
    %1547 = vmatpush1.msra.mxu0 %v109
    %1548 = vmatprep.subr.mxu0 0.0
    %1549 = vmatpush1.msra.mxu0 %v106
    %1550 = vmatprep.subr.mxu0 0.0
    %1551 = vmatpush1.msra.mxu0 %v103
    %1552 = vmatprep.subr.mxu0 0.0
    %1553 = vmatpush1.msra.mxu0 %v100
    %1554 = vmatprep.subr.mxu0 0.0
    %1555 = vmatpush1.msra.mxu0 %v97
    %1556 = vmatprep.subr.mxu0 0.0
    %1557 = vmatpush1.msra.mxu0 %v94
    %1558 = vmatprep.subr.mxu0 0.0
    %1559 = vmatpush1.msra.mxu0 %v91
    %1560 = vmatprep.subr.mxu0 0.0
    %1561 = vmatpush1.msra.mxu0 %v88
    %1562 = vmatprep.subr.mxu0 0.0
    %1563 = vmatpush1.msra.mxu0 %v85
    %1564 = vmatprep.subr.mxu0 0.0
    %1565 = vmatpush2.msra.mxu0 0.0
    %1566 = vmatprep.subr.mxu0 0.0
    %1567 = vmatpush2.msra.mxu0 0.0
    %1568 = vmatprep.subr.mxu0 0.0
    %1569 = vmatpush2.msra.mxu0 0.0
    %1570 = vmatprep.subr.mxu0 0.0
    %1571 = vmatpush2.msra.mxu0 0.0
    %1572 = vmatprep.subr.mxu0 0.0
    %1573 = vmatpush2.msra.mxu0 0.0
    %1574 = vmatprep.subr.mxu0 0.0
    %1575 = vmatpush2.msra.mxu0 0.0
    %1576 = vmatprep.subr.mxu0 0.0
    %1577 = vmatpush2.msra.mxu0 0.0
    %1578 = vmatprep.subr.mxu0 0.0
    %1579 = vmatpush2.msra.mxu0 0.0
    %1580 = vmatprep.subr.mxu0 0.0
    %1581 = vmatpush2.msra.mxu0 0.0
    %1582 = vmatprep.subr.mxu0 0.0
    %1583 = vmatpush2.msra.mxu0 0.0
    %1584 = vmatprep.subr.mxu0 0.0
    %1585 = vmatpush2.msra.mxu0 0.0
    %1586 = vmatprep.subr.mxu0 0.0
    %1587 = vmatpush2.msra.mxu0 0.0
    %1588 = vmatprep.subr.mxu0 0.0
    %1589 = vmatpush2.msra.mxu0 0.0
    %1590 = vmatprep.subr.mxu0 0.0
    %1591 = vmatpush2.msra.mxu0 0.0
    %1592 = vmatprep.subr.mxu0 0.0
    %1593 = vmatpush2.msra.mxu0 0.0
    %1594 = vmatprep.subr.mxu0 0.0
    %1595 = vmatpush2.msra.mxu0 0.0
    %1596 = vmatprep.mubr.f32.mxu0 0.0
    %1597 = vmatmul.mubr.f32.gmra.mxu0 %v1452
    %v1598 = vpop.f32.mrf.mxu0
    %v1599 = vadd.f32 0.0, %v1598
    %v1600 = vpop.f32.mrf.mxu0
    %1601 = vdwg.mxu0
    %v1602 = vadd.f32 %v1458, %v1528
    %v1603 = vxor.u32 %v1602, 2147483648
    %v1604 = vmul.f32 %v1603, 1.442695
    %v1605 = vpow.pop %v1604
    %v1606 = vadd.f32 %v1605, 1.0
    %v1607 = vrcp.pop %v1606
    %v1608 = vmul.f32 1.0, %v1607
    %v1609 = vadd.f32 %v1459, %v1530
    %v1610 = vxor.u32 %v1609, 2147483648
    %v1611 = vmul.f32 %v1610, 1.442695
    %v1612 = vpow.pop %v1611
    %v1613 = vadd.f32 %v1612, 1.0
    %v1614 = vrcp.pop %v1613
    %v1615 = vmul.f32 1.0, %v1614
    %v1616 = vadd.f32 %v1599, %v137
    %v1617 = vmul.f32 %v1608, %v1616
    %v1618 = vadd.f32 %v1460, %v1617
    %v1619 = vtanh.pop %v1618
    %v1620 = vsub.f32 1.0, %v1615
    %v1621 = vmul.f32 %v1620, %v1619
    %v1622 = vmul.f32 %v1615, %v1452
    %v1623 = vadd.f32 %v1621, %v1622
    %s1624 = scalar_lea.vmem [#allocation3], 48
    %1625 = vst [vmem:[%s1624] sm:$0xff] %v1623
    %s1626 = smul.u32 7, 3
    %s1627 = smul.addr %s1626, 8
    %s1628 = scalar_lea.vmem [#allocation2], %s1627
    %v1629 = vld [vmem:[%s1628] sm:$0xff]
    %v1630 = vld [vmem:[%s1628 + $0x8] sm:$0xff]
    %v1631 = vld [vmem:[%s1628 + $0x10] sm:$0xff]
    %1632 = vmatprep.subr.mxu0 %v129
    %1633 = vmatpush1.msra.mxu0 %v128
    %1634 = vmatprep.subr.mxu0 %v126
    %1635 = vmatpush1.msra.mxu0 %v125
    %1636 = vmatprep.subr.mxu0 %v123
    %1637 = vmatpush1.msra.mxu0 %v122
    %1638 = vmatprep.subr.mxu0 %v120
    %1639 = vmatpush1.msra.mxu0 %v119
    %1640 = vmatprep.subr.mxu0 %v117
    %1641 = vmatpush1.msra.mxu0 %v116
    %1642 = vmatprep.subr.mxu0 %v114
    %1643 = vmatpush1.msra.mxu0 %v113
    %1644 = vmatprep.subr.mxu0 %v111
    %1645 = vmatpush1.msra.mxu0 %v110
    %1646 = vmatprep.subr.mxu0 %v108
    %1647 = vmatpush1.msra.mxu0 %v107
    %1648 = vmatprep.subr.mxu0 %v105
    %1649 = vmatpush1.msra.mxu0 %v104
    %1650 = vmatprep.subr.mxu0 %v102
    %1651 = vmatpush1.msra.mxu0 %v101
    %1652 = vmatprep.subr.mxu0 %v99
    %1653 = vmatpush1.msra.mxu0 %v98
    %1654 = vmatprep.subr.mxu0 %v96
    %1655 = vmatpush1.msra.mxu0 %v95
    %1656 = vmatprep.subr.mxu0 %v93
    %1657 = vmatpush1.msra.mxu0 %v92
    %1658 = vmatprep.subr.mxu0 %v90
    %1659 = vmatpush1.msra.mxu0 %v89
    %1660 = vmatprep.subr.mxu0 %v87
    %1661 = vmatpush1.msra.mxu0 %v86
    %1662 = vmatprep.subr.mxu0 %v84
    %1663 = vmatpush1.msra.mxu0 %v83
    %1664 = vmatprep.subr.mxu0 0.0
    %1665 = vmatpush2.msra.mxu0 0.0
    %1666 = vmatprep.subr.mxu0 0.0
    %1667 = vmatpush2.msra.mxu0 0.0
    %1668 = vmatprep.subr.mxu0 0.0
    %1669 = vmatpush2.msra.mxu0 0.0
    %1670 = vmatprep.subr.mxu0 0.0
    %1671 = vmatpush2.msra.mxu0 0.0
    %1672 = vmatprep.subr.mxu0 0.0
    %1673 = vmatpush2.msra.mxu0 0.0
    %1674 = vmatprep.subr.mxu0 0.0
    %1675 = vmatpush2.msra.mxu0 0.0
    %1676 = vmatprep.subr.mxu0 0.0
    %1677 = vmatpush2.msra.mxu0 0.0
    %1678 = vmatprep.subr.mxu0 0.0
    %1679 = vmatpush2.msra.mxu0 0.0
    %1680 = vmatprep.subr.mxu0 0.0
    %1681 = vmatpush2.msra.mxu0 0.0
    %1682 = vmatprep.subr.mxu0 0.0
    %1683 = vmatpush2.msra.mxu0 0.0
    %1684 = vmatprep.subr.mxu0 0.0
    %1685 = vmatpush2.msra.mxu0 0.0
    %1686 = vmatprep.subr.mxu0 0.0
    %1687 = vmatpush2.msra.mxu0 0.0
    %1688 = vmatprep.subr.mxu0 0.0
    %1689 = vmatpush2.msra.mxu0 0.0
    %1690 = vmatprep.subr.mxu0 0.0
    %1691 = vmatpush2.msra.mxu0 0.0
    %1692 = vmatprep.subr.mxu0 0.0
    %1693 = vmatpush2.msra.mxu0 0.0
    %1694 = vmatprep.subr.mxu0 0.0
    %1695 = vmatpush2.msra.mxu0 0.0
    %1696 = vmatprep.mubr.f32.mxu0 0.0
    %1697 = vmatmul.mubr.f32.gmra.mxu0 %v1623
    %v1698 = vpop.f32.mrf.mxu0
    %v1699 = vadd.f32 0.0, %v1698
    %v1700 = vpop.f32.mrf.mxu0
    %v1701 = vadd.f32 0.0, %v1700
    %1702 = vdwg.mxu0
    %1703 = vmatprep.subr.mxu0 0.0
    %1704 = vmatpush1.msra.mxu0 %v130
    %1705 = vmatprep.subr.mxu0 0.0
    %1706 = vmatpush1.msra.mxu0 %v127
    %1707 = vmatprep.subr.mxu0 0.0
    %1708 = vmatpush1.msra.mxu0 %v124
    %1709 = vmatprep.subr.mxu0 0.0
    %1710 = vmatpush1.msra.mxu0 %v121
    %1711 = vmatprep.subr.mxu0 0.0
    %1712 = vmatpush1.msra.mxu0 %v118
    %1713 = vmatprep.subr.mxu0 0.0
    %1714 = vmatpush1.msra.mxu0 %v115
    %1715 = vmatprep.subr.mxu0 0.0
    %1716 = vmatpush1.msra.mxu0 %v112
    %1717 = vmatprep.subr.mxu0 0.0
    %1718 = vmatpush1.msra.mxu0 %v109
    %1719 = vmatprep.subr.mxu0 0.0
    %1720 = vmatpush1.msra.mxu0 %v106
    %1721 = vmatprep.subr.mxu0 0.0
    %1722 = vmatpush1.msra.mxu0 %v103
    %1723 = vmatprep.subr.mxu0 0.0
    %1724 = vmatpush1.msra.mxu0 %v100
    %1725 = vmatprep.subr.mxu0 0.0
    %1726 = vmatpush1.msra.mxu0 %v97
    %1727 = vmatprep.subr.mxu0 0.0
    %1728 = vmatpush1.msra.mxu0 %v94
    %1729 = vmatprep.subr.mxu0 0.0
    %1730 = vmatpush1.msra.mxu0 %v91
    %1731 = vmatprep.subr.mxu0 0.0
    %1732 = vmatpush1.msra.mxu0 %v88
    %1733 = vmatprep.subr.mxu0 0.0
    %1734 = vmatpush1.msra.mxu0 %v85
    %1735 = vmatprep.subr.mxu0 0.0
    %1736 = vmatpush2.msra.mxu0 0.0
    %1737 = vmatprep.subr.mxu0 0.0
    %1738 = vmatpush2.msra.mxu0 0.0
    %1739 = vmatprep.subr.mxu0 0.0
    %1740 = vmatpush2.msra.mxu0 0.0
    %1741 = vmatprep.subr.mxu0 0.0
    %1742 = vmatpush2.msra.mxu0 0.0
    %1743 = vmatprep.subr.mxu0 0.0
    %1744 = vmatpush2.msra.mxu0 0.0
    %1745 = vmatprep.subr.mxu0 0.0
    %1746 = vmatpush2.msra.mxu0 0.0
    %1747 = vmatprep.subr.mxu0 0.0
    %1748 = vmatpush2.msra.mxu0 0.0
    %1749 = vmatprep.subr.mxu0 0.0
    %1750 = vmatpush2.msra.mxu0 0.0
    %1751 = vmatprep.subr.mxu0 0.0
    %1752 = vmatpush2.msra.mxu0 0.0
    %1753 = vmatprep.subr.mxu0 0.0
    %1754 = vmatpush2.msra.mxu0 0.0
    %1755 = vmatprep.subr.mxu0 0.0
    %1756 = vmatpush2.msra.mxu0 0.0
    %1757 = vmatprep.subr.mxu0 0.0
    %1758 = vmatpush2.msra.mxu0 0.0
    %1759 = vmatprep.subr.mxu0 0.0
    %1760 = vmatpush2.msra.mxu0 0.0
    %1761 = vmatprep.subr.mxu0 0.0
    %1762 = vmatpush2.msra.mxu0 0.0
    %1763 = vmatprep.subr.mxu0 0.0
    %1764 = vmatpush2.msra.mxu0 0.0
    %1765 = vmatprep.subr.mxu0 0.0
    %1766 = vmatpush2.msra.mxu0 0.0
    %1767 = vmatprep.mubr.f32.mxu0 0.0
    %1768 = vmatmul.mubr.f32.gmra.mxu0 %v1623
    %v1769 = vpop.f32.mrf.mxu0
    %v1770 = vadd.f32 0.0, %v1769
    %v1771 = vpop.f32.mrf.mxu0
    %1772 = vdwg.mxu0
    %v1773 = vadd.f32 %v1629, %v1699
    %v1774 = vxor.u32 %v1773, 2147483648
    %v1775 = vmul.f32 %v1774, 1.442695
    %v1776 = vpow.pop %v1775
    %v1777 = vadd.f32 %v1776, 1.0
    %v1778 = vrcp.pop %v1777
    %v1779 = vmul.f32 1.0, %v1778
    %v1780 = vadd.f32 %v1630, %v1701
    %v1781 = vxor.u32 %v1780, 2147483648
    %v1782 = vmul.f32 %v1781, 1.442695
    %v1783 = vpow.pop %v1782
    %v1784 = vadd.f32 %v1783, 1.0
    %v1785 = vrcp.pop %v1784
    %v1786 = vmul.f32 1.0, %v1785
    %v1787 = vadd.f32 %v1770, %v137
    %v1788 = vmul.f32 %v1779, %v1787
    %v1789 = vadd.f32 %v1631, %v1788
    %v1790 = vtanh.pop %v1789
    %v1791 = vsub.f32 1.0, %v1786
    %v1792 = vmul.f32 %v1791, %v1790
    %v1793 = vmul.f32 %v1786, %v1623
    %v1794 = vadd.f32 %v1792, %v1793
    %s1795 = scalar_lea.vmem [#allocation3], 56
    %1796 = vst [vmem:[%s1795] sm:$0xff] %v1794
    %v1797 = vld [vmem:[#allocation7] sm:$0xff]
    %v1798 = vld [vmem:[#allocation7 + $0x8] sm:$0xff]
    %v1799 = vld [vmem:[#allocation7 + $0x10] sm:$0xff]
    %v1800 = vld [vmem:[#allocation7 + $0x18] sm:$0xff]
    %v1801 = vld [vmem:[#allocation7 + $0x20] sm:$0xff]
    %v1802 = vld [vmem:[#allocation7 + $0x28] sm:$0xff]
    %v1803 = vld [vmem:[#allocation7 + $0x30] sm:$0xff]
    %v1804 = vld [vmem:[#allocation7 + $0x38] sm:$0xff]
    %v1805 = vld [vmem:[#allocation7 + $0x40] sm:$0xff]
    %v1806 = vld [vmem:[#allocation7 + $0x48] sm:$0xff]
    %v1807 = vld [vmem:[#allocation7 + $0x50] sm:$0xff]
    %v1808 = vld [vmem:[#allocation7 + $0x58] sm:$0xff]
    %v1809 = vld [vmem:[#allocation7 + $0x60] sm:$0xff]
    %v1810 = vld [vmem:[#allocation7 + $0x68] sm:$0xff]
    %v1811 = vld [vmem:[#allocation7 + $0x70] sm:$0xff]
    %v1812 = vld [vmem:[#allocation7 + $0x78] sm:$0xff]
    %v1813 = vld [vmem:[#allocation7 + $0x80] sm:$0xff]
    %v1814 = vld [vmem:[#allocation7 + $0x88] sm:$0xff]
    %v1815 = vld [vmem:[#allocation7 + $0x90] sm:$0xff]
    %v1816 = vld [vmem:[#allocation7 + $0x98] sm:$0xff]
    %v1817 = vld [vmem:[#allocation7 + $0xa0] sm:$0xff]
    %v1818 = vld [vmem:[#allocation7 + $0xa8] sm:$0xff]
    %v1819 = vld [vmem:[#allocation7 + $0xb0] sm:$0xff]
    %v1820 = vld [vmem:[#allocation7 + $0xb8] sm:$0xff]
    %v1821 = vld [vmem:[#allocation7 + $0xc0] sm:$0xff]
    %v1822 = vld [vmem:[#allocation7 + $0xc8] sm:$0xff]
    %v1823 = vld [vmem:[#allocation7 + $0xd0] sm:$0xff]
    %v1824 = vld [vmem:[#allocation7 + $0xd8] sm:$0xff]
    %v1825 = vld [vmem:[#allocation7 + $0xe0] sm:$0xff]
    %v1826 = vld [vmem:[#allocation7 + $0xe8] sm:$0xff]
    %v1827 = vld [vmem:[#allocation7 + $0xf0] sm:$0xff]
    %v1828 = vld [vmem:[#allocation7 + $0xf8] sm:$0xff]
    %v1829 = vld [vmem:[#allocation7 + $0x100] sm:$0xff]
    %v1830 = vld [vmem:[#allocation7 + $0x108] sm:$0xff]
    %v1831 = vld [vmem:[#allocation7 + $0x110] sm:$0xff]
    %v1832 = vld [vmem:[#allocation7 + $0x118] sm:$0xff]
    %v1833 = vld [vmem:[#allocation7 + $0x120] sm:$0xff]
    %v1834 = vld [vmem:[#allocation7 + $0x128] sm:$0xff]
    %v1835 = vld [vmem:[#allocation7 + $0x130] sm:$0xff]
    %v1836 = vld [vmem:[#allocation7 + $0x138] sm:$0xff]
    %v1837 = vld [vmem:[#allocation7 + $0x140] sm:$0xff]
    %v1838 = vld [vmem:[#allocation7 + $0x148] sm:$0xff]
    %v1839 = vld [vmem:[#allocation7 + $0x150] sm:$0xff]
    %v1840 = vld [vmem:[#allocation7 + $0x158] sm:$0xff]
    %v1841 = vld [vmem:[#allocation7 + $0x160] sm:$0xff]
    %v1842 = vld [vmem:[#allocation7 + $0x168] sm:$0xff]
    %v1843 = vld [vmem:[#allocation7 + $0x170] sm:$0xff]
    %v1844 = vld [vmem:[#allocation7 + $0x178] sm:$0xff]
    %v1845 = vld [vmem:[#allocation9] sm:$0xff]
    %v1846 = vld [vmem:[#allocation9 + $0x8] sm:$0xff]
    %v1847 = vld [vmem:[#allocation9 + $0x10] sm:$0xff]
    %v1848 = vld [vmem:[#allocation9 + $0x18] sm:$0xff]
    %v1849 = vld [vmem:[#allocation9 + $0x20] sm:$0xff]
    %v1850 = vld [vmem:[#allocation9 + $0x28] sm:$0xff]
    %v1851 = vld [vmem:[#allocation9 + $0x30] sm:$0xff]
    %v1852 = vld [vmem:[#allocation9 + $0x38] sm:$0xff]
    %v1853 = vld [vmem:[#allocation9 + $0x40] sm:$0xff]
    %v1854 = vld [vmem:[#allocation9 + $0x48] sm:$0xff]
    %v1855 = vld [vmem:[#allocation9 + $0x50] sm:$0xff]
    %v1856 = vld [vmem:[#allocation9 + $0x58] sm:$0xff]
    %v1857 = vld [vmem:[#allocation9 + $0x60] sm:$0xff]
    %v1858 = vld [vmem:[#allocation9 + $0x68] sm:$0xff]
    %v1859 = vld [vmem:[#allocation9 + $0x70] sm:$0xff]
    %v1860 = vld [vmem:[#allocation9 + $0x78] sm:$0xff]
    %v1861 = vld [vmem:[#allocation9 + $0x80] sm:$0xff]
    %v1862 = vld [vmem:[#allocation9 + $0x88] sm:$0xff]
    %v1863 = vld [vmem:[#allocation9 + $0x90] sm:$0xff]
    %v1864 = vld [vmem:[#allocation9 + $0x98] sm:$0xff]
    %v1865 = vld [vmem:[#allocation9 + $0xa0] sm:$0xff]
    %v1866 = vld [vmem:[#allocation9 + $0xa8] sm:$0xff]
    %v1867 = vld [vmem:[#allocation9 + $0xb0] sm:$0xff]
    %v1868 = vld [vmem:[#allocation9 + $0xb8] sm:$0xff]
    %v1869 = vld [vmem:[#allocation9 + $0xc0] sm:$0xff]
    %v1870 = vld [vmem:[#allocation9 + $0xc8] sm:$0xff]
    %v1871 = vld [vmem:[#allocation9 + $0xd0] sm:$0xff]
    %v1872 = vld [vmem:[#allocation9 + $0xd8] sm:$0xff]
    %v1873 = vld [vmem:[#allocation9 + $0xe0] sm:$0xff]
    %v1874 = vld [vmem:[#allocation9 + $0xe8] sm:$0xff]
    %v1875 = vld [vmem:[#allocation9 + $0xf0] sm:$0xff]
    %v1876 = vld [vmem:[#allocation9 + $0xf8] sm:$0xff]
    %v1877 = vld [vmem:[#allocation9 + $0x100] sm:$0xff]
    %v1878 = vld [vmem:[#allocation9 + $0x108] sm:$0xff]
    %v1879 = vld [vmem:[#allocation9 + $0x110] sm:$0xff]
    %v1880 = vld [vmem:[#allocation9 + $0x118] sm:$0xff]
    %v1881 = vld [vmem:[#allocation9 + $0x120] sm:$0xff]
    %v1882 = vld [vmem:[#allocation9 + $0x128] sm:$0xff]
    %v1883 = vld [vmem:[#allocation9 + $0x130] sm:$0xff]
    %v1884 = vld [vmem:[#allocation9 + $0x138] sm:$0xff]
    %v1885 = vld [vmem:[#allocation9 + $0x140] sm:$0xff]
    %v1886 = vld [vmem:[#allocation9 + $0x148] sm:$0xff]
    %v1887 = vld [vmem:[#allocation9 + $0x150] sm:$0xff]
    %v1888 = vld [vmem:[#allocation9 + $0x158] sm:$0xff]
    %v1889 = vld [vmem:[#allocation9 + $0x160] sm:$0xff]
    %v1890 = vld [vmem:[#allocation9 + $0x168] sm:$0xff]
    %v1891 = vld [vmem:[#allocation9 + $0x170] sm:$0xff]
    %v1892 = vld [vmem:[#allocation9 + $0x178] sm:$0xff]
    %v1893 = vld [vmem:[%s7] sm:$0x7]
    %v1894 = vld [vmem:[%s8] sm:$0x1]
    %v1896 = vlaneseq
    %v1897 = vshrl.u32 %v1896, 7
    %v1898 = vsub.s32 0, %v1897
    %v1899 = vrot.slane %v1894, %v1898
    %v1901 = vld [vmem:[#allocation3] sm:$0xff]
    %v1902 = vld [vmem:[#allocation3 + $0x8] sm:$0xff]
    %v1903 = vld [vmem:[#allocation3 + $0x10] sm:$0xff]
    %v1904 = vld [vmem:[#allocation3 + $0x18] sm:$0xff]
    %v1905 = vld [vmem:[#allocation3 + $0x20] sm:$0xff]
    %v1906 = vld [vmem:[#allocation3 + $0x28] sm:$0xff]
    %v1907 = vld [vmem:[#allocation3 + $0x30] sm:$0xff]
    %v1908 = vld [vmem:[#allocation3 + $0x38] sm:$0xff]
    %v1910 = vlaneseq
    %v1911 = vshrl.u32 %v1910, 7
    %v1912 = vsub.s32 0, %v1911
    %v1913 = vrot.slane %v1893, %v1912
    %v1914 = vlaneseq
    %v1915 = vshrl.u32 %v1914, 7
    %v1916 = vsub.s32 1, %v1915
    %v1917 = vrot.slane %v1893, %v1916
    %v1918 = vlaneseq
    %v1919 = vshrl.u32 %v1918, 7
    %v1920 = vsub.s32 2, %v1919
    %v1921 = vrot.slane %v1893, %v1920
    %1925 = vmatprep.subr.mxu0 %v1843
    %1926 = vmatpush1.msra.mxu0 %v1842
    %1927 = vmatprep.subr.mxu0 %v1840
    %1928 = vmatpush1.msra.mxu0 %v1839
    %1929 = vmatprep.subr.mxu0 %v1837
    %1930 = vmatpush1.msra.mxu0 %v1836
    %1931 = vmatprep.subr.mxu0 %v1834
    %1932 = vmatpush1.msra.mxu0 %v1833
    %1933 = vmatprep.subr.mxu0 %v1831
    %1934 = vmatpush1.msra.mxu0 %v1830
    %1935 = vmatprep.subr.mxu0 %v1828
    %1936 = vmatpush1.msra.mxu0 %v1827
    %1937 = vmatprep.subr.mxu0 %v1825
    %1938 = vmatpush1.msra.mxu0 %v1824
    %1939 = vmatprep.subr.mxu0 %v1822
    %1940 = vmatpush1.msra.mxu0 %v1821
    %1941 = vmatprep.subr.mxu0 %v1819
    %1942 = vmatpush1.msra.mxu0 %v1818
    %1943 = vmatprep.subr.mxu0 %v1816
    %1944 = vmatpush1.msra.mxu0 %v1815
    %1945 = vmatprep.subr.mxu0 %v1813
    %1946 = vmatpush1.msra.mxu0 %v1812
    %1947 = vmatprep.subr.mxu0 %v1810
    %1948 = vmatpush1.msra.mxu0 %v1809
    %1949 = vmatprep.subr.mxu0 %v1807
    %1950 = vmatpush1.msra.mxu0 %v1806
    %1951 = vmatprep.subr.mxu0 %v1804
    %1952 = vmatpush1.msra.mxu0 %v1803
    %1953 = vmatprep.subr.mxu0 %v1801
    %1954 = vmatpush1.msra.mxu0 %v1800
    %1955 = vmatprep.subr.mxu0 %v1798
    %1956 = vmatpush1.msra.mxu0 %v1797
    %1957 = vmatprep.subr.mxu0 0.0
    %1958 = vmatpush2.msra.mxu0 0.0
    %1959 = vmatprep.subr.mxu0 0.0
    %1960 = vmatpush2.msra.mxu0 0.0
    %1961 = vmatprep.subr.mxu0 0.0
    %1962 = vmatpush2.msra.mxu0 0.0
    %1963 = vmatprep.subr.mxu0 0.0
    %1964 = vmatpush2.msra.mxu0 0.0
    %1965 = vmatprep.subr.mxu0 0.0
    %1966 = vmatpush2.msra.mxu0 0.0
    %1967 = vmatprep.subr.mxu0 0.0
    %1968 = vmatpush2.msra.mxu0 0.0
    %1969 = vmatprep.subr.mxu0 0.0
    %1970 = vmatpush2.msra.mxu0 0.0
    %1971 = vmatprep.subr.mxu0 0.0
    %1972 = vmatpush2.msra.mxu0 0.0
    %1973 = vmatprep.subr.mxu0 0.0
    %1974 = vmatpush2.msra.mxu0 0.0
    %1975 = vmatprep.subr.mxu0 0.0
    %1976 = vmatpush2.msra.mxu0 0.0
    %1977 = vmatprep.subr.mxu0 0.0
    %1978 = vmatpush2.msra.mxu0 0.0
    %1979 = vmatprep.subr.mxu0 0.0
    %1980 = vmatpush2.msra.mxu0 0.0
    %1981 = vmatprep.subr.mxu0 0.0
    %1982 = vmatpush2.msra.mxu0 0.0
    %1983 = vmatprep.subr.mxu0 0.0
    %1984 = vmatpush2.msra.mxu0 0.0
    %1985 = vmatprep.subr.mxu0 0.0
    %1986 = vmatpush2.msra.mxu0 0.0
    %1987 = vmatprep.subr.mxu0 0.0
    %1988 = vmatpush2.msra.mxu0 0.0
    %1989 = vmatprep.mubr.f32.mxu0 0.0
    %1990 = vmatmul.mubr.f32.gmra.mxu0 %v1901
    %v1991 = vpop.f32.mrf.mxu0
    %v1992 = vadd.f32 %v1913, %v1991
    %v1993 = vpop.f32.mrf.mxu0
    %v1994 = vadd.f32 %v1917, %v1993
    %1995 = vmatprep.mubr.f32.mxu0 0.0
    %1996 = vmatmul.mubr.f32.gmra.mxu0 %v1902
    %v1997 = vpop.f32.mrf.mxu0
    %v1998 = vadd.f32 %v1913, %v1997
    %v1999 = vpop.f32.mrf.mxu0
    %v2000 = vadd.f32 %v1917, %v1999
    %2001 = vmatprep.mubr.f32.mxu0 0.0
    %2002 = vmatmul.mubr.f32.gmra.mxu0 %v1903
    %v2003 = vpop.f32.mrf.mxu0
    %v2004 = vadd.f32 %v1913, %v2003
    %v2005 = vpop.f32.mrf.mxu0
    %v2006 = vadd.f32 %v1917, %v2005
    %2007 = vmatprep.mubr.f32.mxu0 0.0
    %2008 = vmatmul.mubr.f32.gmra.mxu0 %v1904
    %v2009 = vpop.f32.mrf.mxu0
    %v2010 = vadd.f32 %v1913, %v2009
    %v2011 = vpop.f32.mrf.mxu0
    %v2012 = vadd.f32 %v1917, %v2011
    %2013 = vmatprep.mubr.f32.mxu0 0.0
    %2014 = vmatmul.mubr.f32.gmra.mxu0 %v1905
    %v2015 = vpop.f32.mrf.mxu0
    %v2016 = vadd.f32 %v1913, %v2015
    %v2017 = vpop.f32.mrf.mxu0
    %v2018 = vadd.f32 %v1917, %v2017
    %2019 = vmatprep.mubr.f32.mxu0 0.0
    %2020 = vmatmul.mubr.f32.gmra.mxu0 %v1906
    %v2021 = vpop.f32.mrf.mxu0
    %v2022 = vadd.f32 %v1913, %v2021
    %v2023 = vpop.f32.mrf.mxu0
    %v2024 = vadd.f32 %v1917, %v2023
    %2025 = vmatprep.mubr.f32.mxu0 0.0
    %2026 = vmatmul.mubr.f32.gmra.mxu0 %v1907
    %v2027 = vpop.f32.mrf.mxu0
    %v2028 = vadd.f32 %v1913, %v2027
    %v2029 = vpop.f32.mrf.mxu0
    %v2030 = vadd.f32 %v1917, %v2029
    %2031 = vmatprep.mubr.f32.mxu0 0.0
    %2032 = vmatmul.mubr.f32.gmra.mxu0 %v1908
    %v2033 = vpop.f32.mrf.mxu0
    %v2034 = vadd.f32 %v1913, %v2033
    %v2035 = vpop.f32.mrf.mxu0
    %v2036 = vadd.f32 %v1917, %v2035
    %2037 = vdwg.mxu0
    %2038 = vmatprep.subr.mxu0 0.0
    %2039 = vmatpush1.msra.mxu0 %v1844
    %2040 = vmatprep.subr.mxu0 0.0
    %2041 = vmatpush1.msra.mxu0 %v1841
    %2042 = vmatprep.subr.mxu0 0.0
    %2043 = vmatpush1.msra.mxu0 %v1838
    %2044 = vmatprep.subr.mxu0 0.0
    %2045 = vmatpush1.msra.mxu0 %v1835
    %2046 = vmatprep.subr.mxu0 0.0
    %2047 = vmatpush1.msra.mxu0 %v1832
    %2048 = vmatprep.subr.mxu0 0.0
    %2049 = vmatpush1.msra.mxu0 %v1829
    %2050 = vmatprep.subr.mxu0 0.0
    %2051 = vmatpush1.msra.mxu0 %v1826
    %2052 = vmatprep.subr.mxu0 0.0
    %2053 = vmatpush1.msra.mxu0 %v1823
    %2054 = vmatprep.subr.mxu0 0.0
    %2055 = vmatpush1.msra.mxu0 %v1820
    %2056 = vmatprep.subr.mxu0 0.0
    %2057 = vmatpush1.msra.mxu0 %v1817
    %2058 = vmatprep.subr.mxu0 0.0
    %2059 = vmatpush1.msra.mxu0 %v1814
    %2060 = vmatprep.subr.mxu0 0.0
    %2061 = vmatpush1.msra.mxu0 %v1811
    %2062 = vmatprep.subr.mxu0 0.0
    %2063 = vmatpush1.msra.mxu0 %v1808
    %2064 = vmatprep.subr.mxu0 0.0
    %2065 = vmatpush1.msra.mxu0 %v1805
    %2066 = vmatprep.subr.mxu0 0.0
    %2067 = vmatpush1.msra.mxu0 %v1802
    %2068 = vmatprep.subr.mxu0 0.0
    %2069 = vmatpush1.msra.mxu0 %v1799
    %2070 = vmatprep.subr.mxu0 0.0
    %2071 = vmatpush2.msra.mxu0 0.0
    %2072 = vmatprep.subr.mxu0 0.0
    %2073 = vmatpush2.msra.mxu0 0.0
    %2074 = vmatprep.subr.mxu0 0.0
    %2075 = vmatpush2.msra.mxu0 0.0
    %2076 = vmatprep.subr.mxu0 0.0
    %2077 = vmatpush2.msra.mxu0 0.0
    %2078 = vmatprep.subr.mxu0 0.0
    %2079 = vmatpush2.msra.mxu0 0.0
    %2080 = vmatprep.subr.mxu0 0.0
    %2081 = vmatpush2.msra.mxu0 0.0
    %2082 = vmatprep.subr.mxu0 0.0
    %2083 = vmatpush2.msra.mxu0 0.0
    %2084 = vmatprep.subr.mxu0 0.0
    %2085 = vmatpush2.msra.mxu0 0.0
    %2086 = vmatprep.subr.mxu0 0.0
    %2087 = vmatpush2.msra.mxu0 0.0
    %2088 = vmatprep.subr.mxu0 0.0
    %2089 = vmatpush2.msra.mxu0 0.0
    %2090 = vmatprep.subr.mxu0 0.0
    %2091 = vmatpush2.msra.mxu0 0.0
    %2092 = vmatprep.subr.mxu0 0.0
    %2093 = vmatpush2.msra.mxu0 0.0
    %2094 = vmatprep.subr.mxu0 0.0
    %2095 = vmatpush2.msra.mxu0 0.0
    %2096 = vmatprep.subr.mxu0 0.0
    %2097 = vmatpush2.msra.mxu0 0.0
    %2098 = vmatprep.subr.mxu0 0.0
    %2099 = vmatpush2.msra.mxu0 0.0
    %2100 = vmatprep.subr.mxu0 0.0
    %2101 = vmatpush2.msra.mxu0 0.0
    %2102 = vmatprep.mubr.f32.mxu0 0.0
    %2103 = vmatmul.mubr.f32.gmra.mxu0 %v1901
    %v2104 = vpop.f32.mrf.mxu0
    %v2105 = vadd.f32 %v1921, %v2104
    %v2106 = vpop.f32.mrf.mxu0
    %2107 = vmatprep.mubr.f32.mxu0 0.0
    %2108 = vmatmul.mubr.f32.gmra.mxu0 %v1902
    %v2109 = vpop.f32.mrf.mxu0
    %v2110 = vadd.f32 %v1921, %v2109
    %v2111 = vpop.f32.mrf.mxu0
    %2112 = vmatprep.mubr.f32.mxu0 0.0
    %2113 = vmatmul.mubr.f32.gmra.mxu0 %v1903
    %v2114 = vpop.f32.mrf.mxu0
    %v2115 = vadd.f32 %v1921, %v2114
    %v2116 = vpop.f32.mrf.mxu0
    %2117 = vmatprep.mubr.f32.mxu0 0.0
    %2118 = vmatmul.mubr.f32.gmra.mxu0 %v1904
    %v2119 = vpop.f32.mrf.mxu0
    %v2120 = vadd.f32 %v1921, %v2119
    %v2121 = vpop.f32.mrf.mxu0
    %2122 = vmatprep.mubr.f32.mxu0 0.0
    %2123 = vmatmul.mubr.f32.gmra.mxu0 %v1905
    %v2124 = vpop.f32.mrf.mxu0
    %v2125 = vadd.f32 %v1921, %v2124
    %v2126 = vpop.f32.mrf.mxu0
    %2127 = vmatprep.mubr.f32.mxu0 0.0
    %2128 = vmatmul.mubr.f32.gmra.mxu0 %v1906
    %v2129 = vpop.f32.mrf.mxu0
    %v2130 = vadd.f32 %v1921, %v2129
    %v2131 = vpop.f32.mrf.mxu0
    %2132 = vmatprep.mubr.f32.mxu0 0.0
    %2133 = vmatmul.mubr.f32.gmra.mxu0 %v1907
    %v2134 = vpop.f32.mrf.mxu0
    %v2135 = vadd.f32 %v1921, %v2134
    %v2136 = vpop.f32.mrf.mxu0
    %2137 = vmatprep.mubr.f32.mxu0 0.0
    %2138 = vmatmul.mubr.f32.gmra.mxu0 %v1908
    %v2139 = vpop.f32.mrf.mxu0
    %v2140 = vadd.f32 %v1921, %v2139
    %v2141 = vpop.f32.mrf.mxu0
    %2142 = vdwg.mxu0
    %2143 = vst [vmem:[#allocation2] sm:$0xff] %v1992
    %2144 = vst [vmem:[#allocation2 + $0x8] sm:$0xff] %v1994
    %2145 = vst [vmem:[#allocation2 + $0x10] sm:$0xff] %v2105
    %2146 = vst [vmem:[#allocation2 + $0x18] sm:$0xff] %v1998
    %2147 = vst [vmem:[#allocation2 + $0x20] sm:$0xff] %v2000
    %2148 = vst [vmem:[#allocation2 + $0x28] sm:$0xff] %v2110
    %2149 = vst [vmem:[#allocation2 + $0x30] sm:$0xff] %v2004
    %2150 = vst [vmem:[#allocation2 + $0x38] sm:$0xff] %v2006
    %2151 = vst [vmem:[#allocation2 + $0x40] sm:$0xff] %v2115
    %2152 = vst [vmem:[#allocation2 + $0x48] sm:$0xff] %v2010
    %2153 = vst [vmem:[#allocation2 + $0x50] sm:$0xff] %v2012
    %2154 = vst [vmem:[#allocation2 + $0x58] sm:$0xff] %v2120
    %2155 = vst [vmem:[#allocation2 + $0x60] sm:$0xff] %v2016
    %2156 = vst [vmem:[#allocation2 + $0x68] sm:$0xff] %v2018
    %2157 = vst [vmem:[#allocation2 + $0x70] sm:$0xff] %v2125
    %2158 = vst [vmem:[#allocation2 + $0x78] sm:$0xff] %v2022
    %2159 = vst [vmem:[#allocation2 + $0x80] sm:$0xff] %v2024
    %2160 = vst [vmem:[#allocation2 + $0x88] sm:$0xff] %v2130
    %2161 = vst [vmem:[#allocation2 + $0x90] sm:$0xff] %v2028
    %2162 = vst [vmem:[#allocation2 + $0x98] sm:$0xff] %v2030
    %2163 = vst [vmem:[#allocation2 + $0xa0] sm:$0xff] %v2135
    %2164 = vst [vmem:[#allocation2 + $0xa8] sm:$0xff] %v2034
    %2165 = vst [vmem:[#allocation2 + $0xb0] sm:$0xff] %v2036
    %2166 = vst [vmem:[#allocation2 + $0xb8] sm:$0xff] %v2140
    %v2167 = vld [vmem:[%s432] sm:$0xff]
    %v2168 = vld [vmem:[%s432 + $0x8] sm:$0xff]
    %v2169 = vld [vmem:[%s432 + $0x10] sm:$0xff]
    %2170 = vmatprep.subr.mxu0 %v1891
    %2171 = vmatpush1.msra.mxu0 %v1890
    %2172 = vmatprep.subr.mxu0 %v1888
    %2173 = vmatpush1.msra.mxu0 %v1887
    %2174 = vmatprep.subr.mxu0 %v1885
    %2175 = vmatpush1.msra.mxu0 %v1884
    %2176 = vmatprep.subr.mxu0 %v1882
    %2177 = vmatpush1.msra.mxu0 %v1881
    %2178 = vmatprep.subr.mxu0 %v1879
    %2179 = vmatpush1.msra.mxu0 %v1878
    %2180 = vmatprep.subr.mxu0 %v1876
    %2181 = vmatpush1.msra.mxu0 %v1875
    %2182 = vmatprep.subr.mxu0 %v1873
    %2183 = vmatpush1.msra.mxu0 %v1872
    %2184 = vmatprep.subr.mxu0 %v1870
    %2185 = vmatpush1.msra.mxu0 %v1869
    %2186 = vmatprep.subr.mxu0 %v1867
    %2187 = vmatpush1.msra.mxu0 %v1866
    %2188 = vmatprep.subr.mxu0 %v1864
    %2189 = vmatpush1.msra.mxu0 %v1863
    %2190 = vmatprep.subr.mxu0 %v1861
    %2191 = vmatpush1.msra.mxu0 %v1860
    %2192 = vmatprep.subr.mxu0 %v1858
    %2193 = vmatpush1.msra.mxu0 %v1857
    %2194 = vmatprep.subr.mxu0 %v1855
    %2195 = vmatpush1.msra.mxu0 %v1854
    %2196 = vmatprep.subr.mxu0 %v1852
    %2197 = vmatpush1.msra.mxu0 %v1851
    %2198 = vmatprep.subr.mxu0 %v1849
    %2199 = vmatpush1.msra.mxu0 %v1848
    %2200 = vmatprep.subr.mxu0 %v1846
    %2201 = vmatpush1.msra.mxu0 %v1845
    %2202 = vmatprep.subr.mxu0 0.0
    %2203 = vmatpush2.msra.mxu0 0.0
    %2204 = vmatprep.subr.mxu0 0.0
    %2205 = vmatpush2.msra.mxu0 0.0
    %2206 = vmatprep.subr.mxu0 0.0
    %2207 = vmatpush2.msra.mxu0 0.0
    %2208 = vmatprep.subr.mxu0 0.0
    %2209 = vmatpush2.msra.mxu0 0.0
    %2210 = vmatprep.subr.mxu0 0.0
    %2211 = vmatpush2.msra.mxu0 0.0
    %2212 = vmatprep.subr.mxu0 0.0
    %2213 = vmatpush2.msra.mxu0 0.0
    %2214 = vmatprep.subr.mxu0 0.0
    %2215 = vmatpush2.msra.mxu0 0.0
    %2216 = vmatprep.subr.mxu0 0.0
    %2217 = vmatpush2.msra.mxu0 0.0
    %2218 = vmatprep.subr.mxu0 0.0
    %2219 = vmatpush2.msra.mxu0 0.0
    %2220 = vmatprep.subr.mxu0 0.0
    %2221 = vmatpush2.msra.mxu0 0.0
    %2222 = vmatprep.subr.mxu0 0.0
    %2223 = vmatpush2.msra.mxu0 0.0
    %2224 = vmatprep.subr.mxu0 0.0
    %2225 = vmatpush2.msra.mxu0 0.0
    %2226 = vmatprep.subr.mxu0 0.0
    %2227 = vmatpush2.msra.mxu0 0.0
    %2228 = vmatprep.subr.mxu0 0.0
    %2229 = vmatpush2.msra.mxu0 0.0
    %2230 = vmatprep.subr.mxu0 0.0
    %2231 = vmatpush2.msra.mxu0 0.0
    %2232 = vmatprep.subr.mxu0 0.0
    %2233 = vmatpush2.msra.mxu0 0.0
    %2234 = vmatprep.mubr.f32.mxu0 0.0
    %2235 = vmatmul.mubr.f32.gmra.mxu0 0.0
    %v2236 = vpop.f32.mrf.mxu0
    %v2237 = vadd.f32 0.0, %v2236
    %v2238 = vpop.f32.mrf.mxu0
    %v2239 = vadd.f32 0.0, %v2238
    %2240 = vdwg.mxu0
    %2241 = vmatprep.subr.mxu0 0.0
    %2242 = vmatpush1.msra.mxu0 %v1892
    %2243 = vmatprep.subr.mxu0 0.0
    %2244 = vmatpush1.msra.mxu0 %v1889
    %2245 = vmatprep.subr.mxu0 0.0
    %2246 = vmatpush1.msra.mxu0 %v1886
    %2247 = vmatprep.subr.mxu0 0.0
    %2248 = vmatpush1.msra.mxu0 %v1883
    %2249 = vmatprep.subr.mxu0 0.0
    %2250 = vmatpush1.msra.mxu0 %v1880
    %2251 = vmatprep.subr.mxu0 0.0
    %2252 = vmatpush1.msra.mxu0 %v1877
    %2253 = vmatprep.subr.mxu0 0.0
    %2254 = vmatpush1.msra.mxu0 %v1874
    %2255 = vmatprep.subr.mxu0 0.0
    %2256 = vmatpush1.msra.mxu0 %v1871
    %2257 = vmatprep.subr.mxu0 0.0
    %2258 = vmatpush1.msra.mxu0 %v1868
    %2259 = vmatprep.subr.mxu0 0.0
    %2260 = vmatpush1.msra.mxu0 %v1865
    %2261 = vmatprep.subr.mxu0 0.0
    %2262 = vmatpush1.msra.mxu0 %v1862
    %2263 = vmatprep.subr.mxu0 0.0
    %2264 = vmatpush1.msra.mxu0 %v1859
    %2265 = vmatprep.subr.mxu0 0.0
    %2266 = vmatpush1.msra.mxu0 %v1856
    %2267 = vmatprep.subr.mxu0 0.0
    %2268 = vmatpush1.msra.mxu0 %v1853
    %2269 = vmatprep.subr.mxu0 0.0
    %2270 = vmatpush1.msra.mxu0 %v1850
    %2271 = vmatprep.subr.mxu0 0.0
    %2272 = vmatpush1.msra.mxu0 %v1847
    %2273 = vmatprep.subr.mxu0 0.0
    %2274 = vmatpush2.msra.mxu0 0.0
    %2275 = vmatprep.subr.mxu0 0.0
    %2276 = vmatpush2.msra.mxu0 0.0
    %2277 = vmatprep.subr.mxu0 0.0
    %2278 = vmatpush2.msra.mxu0 0.0
    %2279 = vmatprep.subr.mxu0 0.0
    %2280 = vmatpush2.msra.mxu0 0.0
    %2281 = vmatprep.subr.mxu0 0.0
    %2282 = vmatpush2.msra.mxu0 0.0
    %2283 = vmatprep.subr.mxu0 0.0
    %2284 = vmatpush2.msra.mxu0 0.0
    %2285 = vmatprep.subr.mxu0 0.0
    %2286 = vmatpush2.msra.mxu0 0.0
    %2287 = vmatprep.subr.mxu0 0.0
    %2288 = vmatpush2.msra.mxu0 0.0
    %2289 = vmatprep.subr.mxu0 0.0
    %2290 = vmatpush2.msra.mxu0 0.0
    %2291 = vmatprep.subr.mxu0 0.0
    %2292 = vmatpush2.msra.mxu0 0.0
    %2293 = vmatprep.subr.mxu0 0.0
    %2294 = vmatpush2.msra.mxu0 0.0
    %2295 = vmatprep.subr.mxu0 0.0
    %2296 = vmatpush2.msra.mxu0 0.0
    %2297 = vmatprep.subr.mxu0 0.0
    %2298 = vmatpush2.msra.mxu0 0.0
    %2299 = vmatprep.subr.mxu0 0.0
    %2300 = vmatpush2.msra.mxu0 0.0
    %2301 = vmatprep.subr.mxu0 0.0
    %2302 = vmatpush2.msra.mxu0 0.0
    %2303 = vmatprep.subr.mxu0 0.0
    %2304 = vmatpush2.msra.mxu0 0.0
    %2305 = vmatprep.mubr.f32.mxu0 0.0
    %2306 = vmatmul.mubr.f32.gmra.mxu0 0.0
    %v2307 = vpop.f32.mrf.mxu0
    %v2308 = vadd.f32 0.0, %v2307
    %v2309 = vpop.f32.mrf.mxu0
    %2310 = vdwg.mxu0
    %v2311 = vadd.f32 %v2167, %v2237
    %v2312 = vxor.u32 %v2311, 2147483648
    %v2313 = vmul.f32 %v2312, 1.442695
    %v2314 = vpow.pop %v2313
    %v2315 = vadd.f32 %v2314, 1.0
    %v2316 = vrcp.pop %v2315
    %v2317 = vmul.f32 1.0, %v2316
    %v2318 = vadd.f32 %v2168, %v2239
    %v2319 = vxor.u32 %v2318, 2147483648
    %v2320 = vmul.f32 %v2319, 1.442695
    %v2321 = vpow.pop %v2320
    %v2322 = vadd.f32 %v2321, 1.0
    %v2323 = vrcp.pop %v2322
    %v2324 = vmul.f32 1.0, %v2323
    %v2325 = vadd.f32 %v2308, %v1899
    %v2326 = vmul.f32 %v2317, %v2325
    %v2327 = vadd.f32 %v2169, %v2326
    %v2328 = vtanh.pop %v2327
    %v2329 = vsub.f32 1.0, %v2324
    %v2330 = vmul.f32 %v2329, %v2328
    %v2331 = vmul.f32 %v2324, 0.0
    %v2332 = vadd.f32 %v2330, %v2331
    %v2333 = vld [vmem:[%s602] sm:$0xff]
    %v2334 = vld [vmem:[%s602 + $0x8] sm:$0xff]
    %v2335 = vld [vmem:[%s602 + $0x10] sm:$0xff]
    %2336 = vmatprep.subr.mxu0 %v1891
    %2337 = vmatpush1.msra.mxu0 %v1890
    %2338 = vmatprep.subr.mxu0 %v1888
    %2339 = vmatpush1.msra.mxu0 %v1887
    %2340 = vmatprep.subr.mxu0 %v1885
    %2341 = vmatpush1.msra.mxu0 %v1884
    %2342 = vmatprep.subr.mxu0 %v1882
    %2343 = vmatpush1.msra.mxu0 %v1881
    %2344 = vmatprep.subr.mxu0 %v1879
    %2345 = vmatpush1.msra.mxu0 %v1878
    %2346 = vmatprep.subr.mxu0 %v1876
    %2347 = vmatpush1.msra.mxu0 %v1875
    %2348 = vmatprep.subr.mxu0 %v1873
    %2349 = vmatpush1.msra.mxu0 %v1872
    %2350 = vmatprep.subr.mxu0 %v1870
    %2351 = vmatpush1.msra.mxu0 %v1869
    %2352 = vmatprep.subr.mxu0 %v1867
    %2353 = vmatpush1.msra.mxu0 %v1866
    %2354 = vmatprep.subr.mxu0 %v1864
    %2355 = vmatpush1.msra.mxu0 %v1863
    %2356 = vmatprep.subr.mxu0 %v1861
    %2357 = vmatpush1.msra.mxu0 %v1860
    %2358 = vmatprep.subr.mxu0 %v1858
    %2359 = vmatpush1.msra.mxu0 %v1857
    %2360 = vmatprep.subr.mxu0 %v1855
    %2361 = vmatpush1.msra.mxu0 %v1854
    %2362 = vmatprep.subr.mxu0 %v1852
    %2363 = vmatpush1.msra.mxu0 %v1851
    %2364 = vmatprep.subr.mxu0 %v1849
    %2365 = vmatpush1.msra.mxu0 %v1848
    %2366 = vmatprep.subr.mxu0 %v1846
    %2367 = vmatpush1.msra.mxu0 %v1845
    %2368 = vmatprep.subr.mxu0 0.0
    %2369 = vmatpush2.msra.mxu0 0.0
    %2370 = vmatprep.subr.mxu0 0.0
    %2371 = vmatpush2.msra.mxu0 0.0
    %2372 = vmatprep.subr.mxu0 0.0
    %2373 = vmatpush2.msra.mxu0 0.0
    %2374 = vmatprep.subr.mxu0 0.0
    %2375 = vmatpush2.msra.mxu0 0.0
    %2376 = vmatprep.subr.mxu0 0.0
    %2377 = vmatpush2.msra.mxu0 0.0
    %2378 = vmatprep.subr.mxu0 0.0
    %2379 = vmatpush2.msra.mxu0 0.0
    %2380 = vmatprep.subr.mxu0 0.0
    %2381 = vmatpush2.msra.mxu0 0.0
    %2382 = vmatprep.subr.mxu0 0.0
    %2383 = vmatpush2.msra.mxu0 0.0
    %2384 = vmatprep.subr.mxu0 0.0
    %2385 = vmatpush2.msra.mxu0 0.0
    %2386 = vmatprep.subr.mxu0 0.0
    %2387 = vmatpush2.msra.mxu0 0.0
    %2388 = vmatprep.subr.mxu0 0.0
    %2389 = vmatpush2.msra.mxu0 0.0
    %2390 = vmatprep.subr.mxu0 0.0
    %2391 = vmatpush2.msra.mxu0 0.0
    %2392 = vmatprep.subr.mxu0 0.0
    %2393 = vmatpush2.msra.mxu0 0.0
    %2394 = vmatprep.subr.mxu0 0.0
    %2395 = vmatpush2.msra.mxu0 0.0
    %2396 = vmatprep.subr.mxu0 0.0
    %2397 = vmatpush2.msra.mxu0 0.0
    %2398 = vmatprep.subr.mxu0 0.0
    %2399 = vmatpush2.msra.mxu0 0.0
    %2400 = vmatprep.mubr.f32.mxu0 0.0
    %2401 = vmatmul.mubr.f32.gmra.mxu0 %v2332
    %v2402 = vpop.f32.mrf.mxu0
    %v2403 = vadd.f32 0.0, %v2402
    %v2404 = vpop.f32.mrf.mxu0
    %v2405 = vadd.f32 0.0, %v2404
    %2406 = vdwg.mxu0
    %2407 = vmatprep.subr.mxu0 0.0
    %2408 = vmatpush1.msra.mxu0 %v1892
    %2409 = vmatprep.subr.mxu0 0.0
    %2410 = vmatpush1.msra.mxu0 %v1889
    %2411 = vmatprep.subr.mxu0 0.0
    %2412 = vmatpush1.msra.mxu0 %v1886
    %2413 = vmatprep.subr.mxu0 0.0
    %2414 = vmatpush1.msra.mxu0 %v1883
    %2415 = vmatprep.subr.mxu0 0.0
    %2416 = vmatpush1.msra.mxu0 %v1880
    %2417 = vmatprep.subr.mxu0 0.0
    %2418 = vmatpush1.msra.mxu0 %v1877
    %2419 = vmatprep.subr.mxu0 0.0
    %2420 = vmatpush1.msra.mxu0 %v1874
    %2421 = vmatprep.subr.mxu0 0.0
    %2422 = vmatpush1.msra.mxu0 %v1871
    %2423 = vmatprep.subr.mxu0 0.0
    %2424 = vmatpush1.msra.mxu0 %v1868
    %2425 = vmatprep.subr.mxu0 0.0
    %2426 = vmatpush1.msra.mxu0 %v1865
    %2427 = vmatprep.subr.mxu0 0.0
    %2428 = vmatpush1.msra.mxu0 %v1862
    %2429 = vmatprep.subr.mxu0 0.0
    %2430 = vmatpush1.msra.mxu0 %v1859
    %2431 = vmatprep.subr.mxu0 0.0
    %2432 = vmatpush1.msra.mxu0 %v1856
    %2433 = vmatprep.subr.mxu0 0.0
    %2434 = vmatpush1.msra.mxu0 %v1853
    %2435 = vmatprep.subr.mxu0 0.0
    %2436 = vmatpush1.msra.mxu0 %v1850
    %2437 = vmatprep.subr.mxu0 0.0
    %2438 = vmatpush1.msra.mxu0 %v1847
    %2439 = vmatprep.subr.mxu0 0.0
    %2440 = vmatpush2.msra.mxu0 0.0
    %2441 = vmatprep.subr.mxu0 0.0
    %2442 = vmatpush2.msra.mxu0 0.0
    %2443 = vmatprep.subr.mxu0 0.0
    %2444 = vmatpush2.msra.mxu0 0.0
    %2445 = vmatprep.subr.mxu0 0.0
    %2446 = vmatpush2.msra.mxu0 0.0
    %2447 = vmatprep.subr.mxu0 0.0
    %2448 = vmatpush2.msra.mxu0 0.0
    %2449 = vmatprep.subr.mxu0 0.0
    %2450 = vmatpush2.msra.mxu0 0.0
    %2451 = vmatprep.subr.mxu0 0.0
    %2452 = vmatpush2.msra.mxu0 0.0
    %2453 = vmatprep.subr.mxu0 0.0
    %2454 = vmatpush2.msra.mxu0 0.0
    %2455 = vmatprep.subr.mxu0 0.0
    %2456 = vmatpush2.msra.mxu0 0.0
    %2457 = vmatprep.subr.mxu0 0.0
    %2458 = vmatpush2.msra.mxu0 0.0
    %2459 = vmatprep.subr.mxu0 0.0
    %2460 = vmatpush2.msra.mxu0 0.0
    %2461 = vmatprep.subr.mxu0 0.0
    %2462 = vmatpush2.msra.mxu0 0.0
    %2463 = vmatprep.subr.mxu0 0.0
    %2464 = vmatpush2.msra.mxu0 0.0
    %2465 = vmatprep.subr.mxu0 0.0
    %2466 = vmatpush2.msra.mxu0 0.0
    %2467 = vmatprep.subr.mxu0 0.0
    %2468 = vmatpush2.msra.mxu0 0.0
    %2469 = vmatprep.subr.mxu0 0.0
    %2470 = vmatpush2.msra.mxu0 0.0
    %2471 = vmatprep.mubr.f32.mxu0 0.0
    %2472 = vmatmul.mubr.f32.gmra.mxu0 %v2332
    %v2473 = vpop.f32.mrf.mxu0
    %v2474 = vadd.f32 0.0, %v2473
    %v2475 = vpop.f32.mrf.mxu0
    %2476 = vdwg.mxu0
    %v2477 = vadd.f32 %v2333, %v2403
    %v2478 = vxor.u32 %v2477, 2147483648
    %v2479 = vmul.f32 %v2478, 1.442695
    %v2480 = vpow.pop %v2479
    %v2481 = vadd.f32 %v2480, 1.0
    %v2482 = vrcp.pop %v2481
    %v2483 = vmul.f32 1.0, %v2482
    %v2484 = vadd.f32 %v2334, %v2405
    %v2485 = vxor.u32 %v2484, 2147483648
    %v2486 = vmul.f32 %v2485, 1.442695
    %v2487 = vpow.pop %v2486
    %v2488 = vadd.f32 %v2487, 1.0
    %v2489 = vrcp.pop %v2488
    %v2490 = vmul.f32 1.0, %v2489
    %v2491 = vadd.f32 %v2474, %v1899
    %v2492 = vmul.f32 %v2483, %v2491
    %v2493 = vadd.f32 %v2335, %v2492
    %v2494 = vtanh.pop %v2493
    %v2495 = vsub.f32 1.0, %v2490
    %v2496 = vmul.f32 %v2495, %v2494
    %v2497 = vmul.f32 %v2490, %v2332
    %v2498 = vadd.f32 %v2496, %v2497
    %v2499 = vld [vmem:[%s773] sm:$0xff]
    %v2500 = vld [vmem:[%s773 + $0x8] sm:$0xff]
    %v2501 = vld [vmem:[%s773 + $0x10] sm:$0xff]
    %2502 = vmatprep.subr.mxu0 %v1891
    %2503 = vmatpush1.msra.mxu0 %v1890
    %2504 = vmatprep.subr.mxu0 %v1888
    %2505 = vmatpush1.msra.mxu0 %v1887
    %2506 = vmatprep.subr.mxu0 %v1885
    %2507 = vmatpush1.msra.mxu0 %v1884
    %2508 = vmatprep.subr.mxu0 %v1882
    %2509 = vmatpush1.msra.mxu0 %v1881
    %2510 = vmatprep.subr.mxu0 %v1879
    %2511 = vmatpush1.msra.mxu0 %v1878
    %2512 = vmatprep.subr.mxu0 %v1876
    %2513 = vmatpush1.msra.mxu0 %v1875
    %2514 = vmatprep.subr.mxu0 %v1873
    %2515 = vmatpush1.msra.mxu0 %v1872
    %2516 = vmatprep.subr.mxu0 %v1870
    %2517 = vmatpush1.msra.mxu0 %v1869
    %2518 = vmatprep.subr.mxu0 %v1867
    %2519 = vmatpush1.msra.mxu0 %v1866
    %2520 = vmatprep.subr.mxu0 %v1864
    %2521 = vmatpush1.msra.mxu0 %v1863
    %2522 = vmatprep.subr.mxu0 %v1861
    %2523 = vmatpush1.msra.mxu0 %v1860
    %2524 = vmatprep.subr.mxu0 %v1858
    %2525 = vmatpush1.msra.mxu0 %v1857
    %2526 = vmatprep.subr.mxu0 %v1855
    %2527 = vmatpush1.msra.mxu0 %v1854
    %2528 = vmatprep.subr.mxu0 %v1852
    %2529 = vmatpush1.msra.mxu0 %v1851
    %2530 = vmatprep.subr.mxu0 %v1849
    %2531 = vmatpush1.msra.mxu0 %v1848
    %2532 = vmatprep.subr.mxu0 %v1846
    %2533 = vmatpush1.msra.mxu0 %v1845
    %2534 = vmatprep.subr.mxu0 0.0
    %2535 = vmatpush2.msra.mxu0 0.0
    %2536 = vmatprep.subr.mxu0 0.0
    %2537 = vmatpush2.msra.mxu0 0.0
    %2538 = vmatprep.subr.mxu0 0.0
    %2539 = vmatpush2.msra.mxu0 0.0
    %2540 = vmatprep.subr.mxu0 0.0
    %2541 = vmatpush2.msra.mxu0 0.0
    %2542 = vmatprep.subr.mxu0 0.0
    %2543 = vmatpush2.msra.mxu0 0.0
    %2544 = vmatprep.subr.mxu0 0.0
    %2545 = vmatpush2.msra.mxu0 0.0
    %2546 = vmatprep.subr.mxu0 0.0
    %2547 = vmatpush2.msra.mxu0 0.0
    %2548 = vmatprep.subr.mxu0 0.0
    %2549 = vmatpush2.msra.mxu0 0.0
    %2550 = vmatprep.subr.mxu0 0.0
    %2551 = vmatpush2.msra.mxu0 0.0
    %2552 = vmatprep.subr.mxu0 0.0
    %2553 = vmatpush2.msra.mxu0 0.0
    %2554 = vmatprep.subr.mxu0 0.0
    %2555 = vmatpush2.msra.mxu0 0.0
    %2556 = vmatprep.subr.mxu0 0.0
    %2557 = vmatpush2.msra.mxu0 0.0
    %2558 = vmatprep.subr.mxu0 0.0
    %2559 = vmatpush2.msra.mxu0 0.0
    %2560 = vmatprep.subr.mxu0 0.0
    %2561 = vmatpush2.msra.mxu0 0.0
    %2562 = vmatprep.subr.mxu0 0.0
    %2563 = vmatpush2.msra.mxu0 0.0
    %2564 = vmatprep.subr.mxu0 0.0
    %2565 = vmatpush2.msra.mxu0 0.0
    %2566 = vmatprep.mubr.f32.mxu0 0.0
    %2567 = vmatmul.mubr.f32.gmra.mxu0 %v2498
    %v2568 = vpop.f32.mrf.mxu0
    %v2569 = vadd.f32 0.0, %v2568
    %v2570 = vpop.f32.mrf.mxu0
    %v2571 = vadd.f32 0.0, %v2570
    %2572 = vdwg.mxu0
    %2573 = vmatprep.subr.mxu0 0.0
    %2574 = vmatpush1.msra.mxu0 %v1892
    %2575 = vmatprep.subr.mxu0 0.0
    %2576 = vmatpush1.msra.mxu0 %v1889
    %2577 = vmatprep.subr.mxu0 0.0
    %2578 = vmatpush1.msra.mxu0 %v1886
    %2579 = vmatprep.subr.mxu0 0.0
    %2580 = vmatpush1.msra.mxu0 %v1883
    %2581 = vmatprep.subr.mxu0 0.0
    %2582 = vmatpush1.msra.mxu0 %v1880
    %2583 = vmatprep.subr.mxu0 0.0
    %2584 = vmatpush1.msra.mxu0 %v1877
    %2585 = vmatprep.subr.mxu0 0.0
    %2586 = vmatpush1.msra.mxu0 %v1874
    %2587 = vmatprep.subr.mxu0 0.0
    %2588 = vmatpush1.msra.mxu0 %v1871
    %2589 = vmatprep.subr.mxu0 0.0
    %2590 = vmatpush1.msra.mxu0 %v1868
    %2591 = vmatprep.subr.mxu0 0.0
    %2592 = vmatpush1.msra.mxu0 %v1865
    %2593 = vmatprep.subr.mxu0 0.0
    %2594 = vmatpush1.msra.mxu0 %v1862
    %2595 = vmatprep.subr.mxu0 0.0
    %2596 = vmatpush1.msra.mxu0 %v1859
    %2597 = vmatprep.subr.mxu0 0.0
    %2598 = vmatpush1.msra.mxu0 %v1856
    %2599 = vmatprep.subr.mxu0 0.0
    %2600 = vmatpush1.msra.mxu0 %v1853
    %2601 = vmatprep.subr.mxu0 0.0
    %2602 = vmatpush1.msra.mxu0 %v1850
    %2603 = vmatprep.subr.mxu0 0.0
    %2604 = vmatpush1.msra.mxu0 %v1847
    %2605 = vmatprep.subr.mxu0 0.0
    %2606 = vmatpush2.msra.mxu0 0.0
    %2607 = vmatprep.subr.mxu0 0.0
    %2608 = vmatpush2.msra.mxu0 0.0
    %2609 = vmatprep.subr.mxu0 0.0
    %2610 = vmatpush2.msra.mxu0 0.0
    %2611 = vmatprep.subr.mxu0 0.0
    %2612 = vmatpush2.msra.mxu0 0.0
    %2613 = vmatprep.subr.mxu0 0.0
    %2614 = vmatpush2.msra.mxu0 0.0
    %2615 = vmatprep.subr.mxu0 0.0
    %2616 = vmatpush2.msra.mxu0 0.0
    %2617 = vmatprep.subr.mxu0 0.0
    %2618 = vmatpush2.msra.mxu0 0.0
    %2619 = vmatprep.subr.mxu0 0.0
    %2620 = vmatpush2.msra.mxu0 0.0
    %2621 = vmatprep.subr.mxu0 0.0
    %2622 = vmatpush2.msra.mxu0 0.0
    %2623 = vmatprep.subr.mxu0 0.0
    %2624 = vmatpush2.msra.mxu0 0.0
    %2625 = vmatprep.subr.mxu0 0.0
    %2626 = vmatpush2.msra.mxu0 0.0
    %2627 = vmatprep.subr.mxu0 0.0
    %2628 = vmatpush2.msra.mxu0 0.0
    %2629 = vmatprep.subr.mxu0 0.0
    %2630 = vmatpush2.msra.mxu0 0.0
    %2631 = vmatprep.subr.mxu0 0.0
    %2632 = vmatpush2.msra.mxu0 0.0
    %2633 = vmatprep.subr.mxu0 0.0
    %2634 = vmatpush2.msra.mxu0 0.0
    %2635 = vmatprep.subr.mxu0 0.0
    %2636 = vmatpush2.msra.mxu0 0.0
    %2637 = vmatprep.mubr.f32.mxu0 0.0
    %2638 = vmatmul.mubr.f32.gmra.mxu0 %v2498
    %v2639 = vpop.f32.mrf.mxu0
    %v2640 = vadd.f32 0.0, %v2639
    %v2641 = vpop.f32.mrf.mxu0
    %2642 = vdwg.mxu0
    %v2643 = vadd.f32 %v2499, %v2569
    %v2644 = vxor.u32 %v2643, 2147483648
    %v2645 = vmul.f32 %v2644, 1.442695
    %v2646 = vpow.pop %v2645
    %v2647 = vadd.f32 %v2646, 1.0
    %v2648 = vrcp.pop %v2647
    %v2649 = vmul.f32 1.0, %v2648
    %v2650 = vadd.f32 %v2500, %v2571
    %v2651 = vxor.u32 %v2650, 2147483648
    %v2652 = vmul.f32 %v2651, 1.442695
    %v2653 = vpow.pop %v2652
    %v2654 = vadd.f32 %v2653, 1.0
    %v2655 = vrcp.pop %v2654
    %v2656 = vmul.f32 1.0, %v2655
    %v2657 = vadd.f32 %v2640, %v1899
    %v2658 = vmul.f32 %v2649, %v2657
    %v2659 = vadd.f32 %v2501, %v2658
    %v2660 = vtanh.pop %v2659
    %v2661 = vsub.f32 1.0, %v2656
    %v2662 = vmul.f32 %v2661, %v2660
    %v2663 = vmul.f32 %v2656, %v2498
    %v2664 = vadd.f32 %v2662, %v2663
    %v2665 = vld [vmem:[%s944] sm:$0xff]
    %v2666 = vld [vmem:[%s944 + $0x8] sm:$0xff]
    %v2667 = vld [vmem:[%s944 + $0x10] sm:$0xff]
    %2668 = vmatprep.subr.mxu0 %v1891
    %2669 = vmatpush1.msra.mxu0 %v1890
    %2670 = vmatprep.subr.mxu0 %v1888
    %2671 = vmatpush1.msra.mxu0 %v1887
    %2672 = vmatprep.subr.mxu0 %v1885
    %2673 = vmatpush1.msra.mxu0 %v1884
    %2674 = vmatprep.subr.mxu0 %v1882
    %2675 = vmatpush1.msra.mxu0 %v1881
    %2676 = vmatprep.subr.mxu0 %v1879
    %2677 = vmatpush1.msra.mxu0 %v1878
    %2678 = vmatprep.subr.mxu0 %v1876
    %2679 = vmatpush1.msra.mxu0 %v1875
    %2680 = vmatprep.subr.mxu0 %v1873
    %2681 = vmatpush1.msra.mxu0 %v1872
    %2682 = vmatprep.subr.mxu0 %v1870
    %2683 = vmatpush1.msra.mxu0 %v1869
    %2684 = vmatprep.subr.mxu0 %v1867
    %2685 = vmatpush1.msra.mxu0 %v1866
    %2686 = vmatprep.subr.mxu0 %v1864
    %2687 = vmatpush1.msra.mxu0 %v1863
    %2688 = vmatprep.subr.mxu0 %v1861
    %2689 = vmatpush1.msra.mxu0 %v1860
    %2690 = vmatprep.subr.mxu0 %v1858
    %2691 = vmatpush1.msra.mxu0 %v1857
    %2692 = vmatprep.subr.mxu0 %v1855
    %2693 = vmatpush1.msra.mxu0 %v1854
    %2694 = vmatprep.subr.mxu0 %v1852
    %2695 = vmatpush1.msra.mxu0 %v1851
    %2696 = vmatprep.subr.mxu0 %v1849
    %2697 = vmatpush1.msra.mxu0 %v1848
    %2698 = vmatprep.subr.mxu0 %v1846
    %2699 = vmatpush1.msra.mxu0 %v1845
    %2700 = vmatprep.subr.mxu0 0.0
    %2701 = vmatpush2.msra.mxu0 0.0
    %2702 = vmatprep.subr.mxu0 0.0
    %2703 = vmatpush2.msra.mxu0 0.0
    %2704 = vmatprep.subr.mxu0 0.0
    %2705 = vmatpush2.msra.mxu0 0.0
    %2706 = vmatprep.subr.mxu0 0.0
    %2707 = vmatpush2.msra.mxu0 0.0
    %2708 = vmatprep.subr.mxu0 0.0
    %2709 = vmatpush2.msra.mxu0 0.0
    %2710 = vmatprep.subr.mxu0 0.0
    %2711 = vmatpush2.msra.mxu0 0.0
    %2712 = vmatprep.subr.mxu0 0.0
    %2713 = vmatpush2.msra.mxu0 0.0
    %2714 = vmatprep.subr.mxu0 0.0
    %2715 = vmatpush2.msra.mxu0 0.0
    %2716 = vmatprep.subr.mxu0 0.0
    %2717 = vmatpush2.msra.mxu0 0.0
    %2718 = vmatprep.subr.mxu0 0.0
    %2719 = vmatpush2.msra.mxu0 0.0
    %2720 = vmatprep.subr.mxu0 0.0
    %2721 = vmatpush2.msra.mxu0 0.0
    %2722 = vmatprep.subr.mxu0 0.0
    %2723 = vmatpush2.msra.mxu0 0.0
    %2724 = vmatprep.subr.mxu0 0.0
    %2725 = vmatpush2.msra.mxu0 0.0
    %2726 = vmatprep.subr.mxu0 0.0
    %2727 = vmatpush2.msra.mxu0 0.0
    %2728 = vmatprep.subr.mxu0 0.0
    %2729 = vmatpush2.msra.mxu0 0.0
    %2730 = vmatprep.subr.mxu0 0.0
    %2731 = vmatpush2.msra.mxu0 0.0
    %2732 = vmatprep.mubr.f32.mxu0 0.0
    %2733 = vmatmul.mubr.f32.gmra.mxu0 %v2664
    %v2734 = vpop.f32.mrf.mxu0
    %v2735 = vadd.f32 0.0, %v2734
    %v2736 = vpop.f32.mrf.mxu0
    %v2737 = vadd.f32 0.0, %v2736
    %2738 = vdwg.mxu0
    %2739 = vmatprep.subr.mxu0 0.0
    %2740 = vmatpush1.msra.mxu0 %v1892
    %2741 = vmatprep.subr.mxu0 0.0
    %2742 = vmatpush1.msra.mxu0 %v1889
    %2743 = vmatprep.subr.mxu0 0.0
    %2744 = vmatpush1.msra.mxu0 %v1886
    %2745 = vmatprep.subr.mxu0 0.0
    %2746 = vmatpush1.msra.mxu0 %v1883
    %2747 = vmatprep.subr.mxu0 0.0
    %2748 = vmatpush1.msra.mxu0 %v1880
    %2749 = vmatprep.subr.mxu0 0.0
    %2750 = vmatpush1.msra.mxu0 %v1877
    %2751 = vmatprep.subr.mxu0 0.0
    %2752 = vmatpush1.msra.mxu0 %v1874
    %2753 = vmatprep.subr.mxu0 0.0
    %2754 = vmatpush1.msra.mxu0 %v1871
    %2755 = vmatprep.subr.mxu0 0.0
    %2756 = vmatpush1.msra.mxu0 %v1868
    %2757 = vmatprep.subr.mxu0 0.0
    %2758 = vmatpush1.msra.mxu0 %v1865
    %2759 = vmatprep.subr.mxu0 0.0
    %2760 = vmatpush1.msra.mxu0 %v1862
    %2761 = vmatprep.subr.mxu0 0.0
    %2762 = vmatpush1.msra.mxu0 %v1859
    %2763 = vmatprep.subr.mxu0 0.0
    %2764 = vmatpush1.msra.mxu0 %v1856
    %2765 = vmatprep.subr.mxu0 0.0
    %2766 = vmatpush1.msra.mxu0 %v1853
    %2767 = vmatprep.subr.mxu0 0.0
    %2768 = vmatpush1.msra.mxu0 %v1850
    %2769 = vmatprep.subr.mxu0 0.0
    %2770 = vmatpush1.msra.mxu0 %v1847
    %2771 = vmatprep.subr.mxu0 0.0
    %2772 = vmatpush2.msra.mxu0 0.0
    %2773 = vmatprep.subr.mxu0 0.0
    %2774 = vmatpush2.msra.mxu0 0.0
    %2775 = vmatprep.subr.mxu0 0.0
    %2776 = vmatpush2.msra.mxu0 0.0
    %2777 = vmatprep.subr.mxu0 0.0
    %2778 = vmatpush2.msra.mxu0 0.0
    %2779 = vmatprep.subr.mxu0 0.0
    %2780 = vmatpush2.msra.mxu0 0.0
    %2781 = vmatprep.subr.mxu0 0.0
    %2782 = vmatpush2.msra.mxu0 0.0
    %2783 = vmatprep.subr.mxu0 0.0
    %2784 = vmatpush2.msra.mxu0 0.0
    %2785 = vmatprep.subr.mxu0 0.0
    %2786 = vmatpush2.msra.mxu0 0.0
    %2787 = vmatprep.subr.mxu0 0.0
    %2788 = vmatpush2.msra.mxu0 0.0
    %2789 = vmatprep.subr.mxu0 0.0
    %2790 = vmatpush2.msra.mxu0 0.0
    %2791 = vmatprep.subr.mxu0 0.0
    %2792 = vmatpush2.msra.mxu0 0.0
    %2793 = vmatprep.subr.mxu0 0.0
    %2794 = vmatpush2.msra.mxu0 0.0
    %2795 = vmatprep.subr.mxu0 0.0
    %2796 = vmatpush2.msra.mxu0 0.0
    %2797 = vmatprep.subr.mxu0 0.0
    %2798 = vmatpush2.msra.mxu0 0.0
    %2799 = vmatprep.subr.mxu0 0.0
    %2800 = vmatpush2.msra.mxu0 0.0
    %2801 = vmatprep.subr.mxu0 0.0
    %2802 = vmatpush2.msra.mxu0 0.0
    %2803 = vmatprep.mubr.f32.mxu0 0.0
    %2804 = vmatmul.mubr.f32.gmra.mxu0 %v2664
    %v2805 = vpop.f32.mrf.mxu0
    %v2806 = vadd.f32 0.0, %v2805
    %v2807 = vpop.f32.mrf.mxu0
    %2808 = vdwg.mxu0
    %v2809 = vadd.f32 %v2665, %v2735
    %v2810 = vxor.u32 %v2809, 2147483648
    %v2811 = vmul.f32 %v2810, 1.442695
    %v2812 = vpow.pop %v2811
    %v2813 = vadd.f32 %v2812, 1.0
    %v2814 = vrcp.pop %v2813
    %v2815 = vmul.f32 1.0, %v2814
    %v2816 = vadd.f32 %v2666, %v2737
    %v2817 = vxor.u32 %v2816, 2147483648
    %v2818 = vmul.f32 %v2817, 1.442695
    %v2819 = vpow.pop %v2818
    %v2820 = vadd.f32 %v2819, 1.0
    %v2821 = vrcp.pop %v2820
    %v2822 = vmul.f32 1.0, %v2821
    %v2823 = vadd.f32 %v2806, %v1899
    %v2824 = vmul.f32 %v2815, %v2823
    %v2825 = vadd.f32 %v2667, %v2824
    %v2826 = vtanh.pop %v2825
    %v2827 = vsub.f32 1.0, %v2822
    %v2828 = vmul.f32 %v2827, %v2826
    %v2829 = vmul.f32 %v2822, %v2664
    %v2830 = vadd.f32 %v2828, %v2829
    %v2831 = vld [vmem:[%s1115] sm:$0xff]
    %v2832 = vld [vmem:[%s1115 + $0x8] sm:$0xff]
    %v2833 = vld [vmem:[%s1115 + $0x10] sm:$0xff]
    %2834 = vmatprep.subr.mxu0 %v1891
    %2835 = vmatpush1.msra.mxu0 %v1890
    %2836 = vmatprep.subr.mxu0 %v1888
    %2837 = vmatpush1.msra.mxu0 %v1887
    %2838 = vmatprep.subr.mxu0 %v1885
    %2839 = vmatpush1.msra.mxu0 %v1884
    %2840 = vmatprep.subr.mxu0 %v1882
    %2841 = vmatpush1.msra.mxu0 %v1881
    %2842 = vmatprep.subr.mxu0 %v1879
    %2843 = vmatpush1.msra.mxu0 %v1878
    %2844 = vmatprep.subr.mxu0 %v1876
    %2845 = vmatpush1.msra.mxu0 %v1875
    %2846 = vmatprep.subr.mxu0 %v1873
    %2847 = vmatpush1.msra.mxu0 %v1872
    %2848 = vmatprep.subr.mxu0 %v1870
    %2849 = vmatpush1.msra.mxu0 %v1869
    %2850 = vmatprep.subr.mxu0 %v1867
    %2851 = vmatpush1.msra.mxu0 %v1866
    %2852 = vmatprep.subr.mxu0 %v1864
    %2853 = vmatpush1.msra.mxu0 %v1863
    %2854 = vmatprep.subr.mxu0 %v1861
    %2855 = vmatpush1.msra.mxu0 %v1860
    %2856 = vmatprep.subr.mxu0 %v1858
    %2857 = vmatpush1.msra.mxu0 %v1857
    %2858 = vmatprep.subr.mxu0 %v1855
    %2859 = vmatpush1.msra.mxu0 %v1854
    %2860 = vmatprep.subr.mxu0 %v1852
    %2861 = vmatpush1.msra.mxu0 %v1851
    %2862 = vmatprep.subr.mxu0 %v1849
    %2863 = vmatpush1.msra.mxu0 %v1848
    %2864 = vmatprep.subr.mxu0 %v1846
    %2865 = vmatpush1.msra.mxu0 %v1845
    %2866 = vmatprep.subr.mxu0 0.0
    %2867 = vmatpush2.msra.mxu0 0.0
    %2868 = vmatprep.subr.mxu0 0.0
    %2869 = vmatpush2.msra.mxu0 0.0
    %2870 = vmatprep.subr.mxu0 0.0
    %2871 = vmatpush2.msra.mxu0 0.0
    %2872 = vmatprep.subr.mxu0 0.0
    %2873 = vmatpush2.msra.mxu0 0.0
    %2874 = vmatprep.subr.mxu0 0.0
    %2875 = vmatpush2.msra.mxu0 0.0
    %2876 = vmatprep.subr.mxu0 0.0
    %2877 = vmatpush2.msra.mxu0 0.0
    %2878 = vmatprep.subr.mxu0 0.0
    %2879 = vmatpush2.msra.mxu0 0.0
    %2880 = vmatprep.subr.mxu0 0.0
    %2881 = vmatpush2.msra.mxu0 0.0
    %2882 = vmatprep.subr.mxu0 0.0
    %2883 = vmatpush2.msra.mxu0 0.0
    %2884 = vmatprep.subr.mxu0 0.0
    %2885 = vmatpush2.msra.mxu0 0.0
    %2886 = vmatprep.subr.mxu0 0.0
    %2887 = vmatpush2.msra.mxu0 0.0
    %2888 = vmatprep.subr.mxu0 0.0
    %2889 = vmatpush2.msra.mxu0 0.0
    %2890 = vmatprep.subr.mxu0 0.0
    %2891 = vmatpush2.msra.mxu0 0.0
    %2892 = vmatprep.subr.mxu0 0.0
    %2893 = vmatpush2.msra.mxu0 0.0
    %2894 = vmatprep.subr.mxu0 0.0
    %2895 = vmatpush2.msra.mxu0 0.0
    %2896 = vmatprep.subr.mxu0 0.0
    %2897 = vmatpush2.msra.mxu0 0.0
    %2898 = vmatprep.mubr.f32.mxu0 0.0
    %2899 = vmatmul.mubr.f32.gmra.mxu0 %v2830
    %v2900 = vpop.f32.mrf.mxu0
    %v2901 = vadd.f32 0.0, %v2900
    %v2902 = vpop.f32.mrf.mxu0
    %v2903 = vadd.f32 0.0, %v2902
    %2904 = vdwg.mxu0
    %2905 = vmatprep.subr.mxu0 0.0
    %2906 = vmatpush1.msra.mxu0 %v1892
    %2907 = vmatprep.subr.mxu0 0.0
    %2908 = vmatpush1.msra.mxu0 %v1889
    %2909 = vmatprep.subr.mxu0 0.0
    %2910 = vmatpush1.msra.mxu0 %v1886
    %2911 = vmatprep.subr.mxu0 0.0
    %2912 = vmatpush1.msra.mxu0 %v1883
    %2913 = vmatprep.subr.mxu0 0.0
    %2914 = vmatpush1.msra.mxu0 %v1880
    %2915 = vmatprep.subr.mxu0 0.0
    %2916 = vmatpush1.msra.mxu0 %v1877
    %2917 = vmatprep.subr.mxu0 0.0
    %2918 = vmatpush1.msra.mxu0 %v1874
    %2919 = vmatprep.subr.mxu0 0.0
    %2920 = vmatpush1.msra.mxu0 %v1871
    %2921 = vmatprep.subr.mxu0 0.0
    %2922 = vmatpush1.msra.mxu0 %v1868
    %2923 = vmatprep.subr.mxu0 0.0
    %2924 = vmatpush1.msra.mxu0 %v1865
    %2925 = vmatprep.subr.mxu0 0.0
    %2926 = vmatpush1.msra.mxu0 %v1862
    %2927 = vmatprep.subr.mxu0 0.0
    %2928 = vmatpush1.msra.mxu0 %v1859
    %2929 = vmatprep.subr.mxu0 0.0
    %2930 = vmatpush1.msra.mxu0 %v1856
    %2931 = vmatprep.subr.mxu0 0.0
    %2932 = vmatpush1.msra.mxu0 %v1853
    %2933 = vmatprep.subr.mxu0 0.0
    %2934 = vmatpush1.msra.mxu0 %v1850
    %2935 = vmatprep.subr.mxu0 0.0
    %2936 = vmatpush1.msra.mxu0 %v1847
    %2937 = vmatprep.subr.mxu0 0.0
    %2938 = vmatpush2.msra.mxu0 0.0
    %2939 = vmatprep.subr.mxu0 0.0
    %2940 = vmatpush2.msra.mxu0 0.0
    %2941 = vmatprep.subr.mxu0 0.0
    %2942 = vmatpush2.msra.mxu0 0.0
    %2943 = vmatprep.subr.mxu0 0.0
    %2944 = vmatpush2.msra.mxu0 0.0
    %2945 = vmatprep.subr.mxu0 0.0
    %2946 = vmatpush2.msra.mxu0 0.0
    %2947 = vmatprep.subr.mxu0 0.0
    %2948 = vmatpush2.msra.mxu0 0.0
    %2949 = vmatprep.subr.mxu0 0.0
    %2950 = vmatpush2.msra.mxu0 0.0
    %2951 = vmatprep.subr.mxu0 0.0
    %2952 = vmatpush2.msra.mxu0 0.0
    %2953 = vmatprep.subr.mxu0 0.0
    %2954 = vmatpush2.msra.mxu0 0.0
    %2955 = vmatprep.subr.mxu0 0.0
    %2956 = vmatpush2.msra.mxu0 0.0
    %2957 = vmatprep.subr.mxu0 0.0
    %2958 = vmatpush2.msra.mxu0 0.0
    %2959 = vmatprep.subr.mxu0 0.0
    %2960 = vmatpush2.msra.mxu0 0.0
    %2961 = vmatprep.subr.mxu0 0.0
    %2962 = vmatpush2.msra.mxu0 0.0
    %2963 = vmatprep.subr.mxu0 0.0
    %2964 = vmatpush2.msra.mxu0 0.0
    %2965 = vmatprep.subr.mxu0 0.0
    %2966 = vmatpush2.msra.mxu0 0.0
    %2967 = vmatprep.subr.mxu0 0.0
    %2968 = vmatpush2.msra.mxu0 0.0
    %2969 = vmatprep.mubr.f32.mxu0 0.0
    %2970 = vmatmul.mubr.f32.gmra.mxu0 %v2830
    %v2971 = vpop.f32.mrf.mxu0
    %v2972 = vadd.f32 0.0, %v2971
    %v2973 = vpop.f32.mrf.mxu0
    %2974 = vdwg.mxu0
    %v2975 = vadd.f32 %v2831, %v2901
    %v2976 = vxor.u32 %v2975, 2147483648
    %v2977 = vmul.f32 %v2976, 1.442695
    %v2978 = vpow.pop %v2977
    %v2979 = vadd.f32 %v2978, 1.0
    %v2980 = vrcp.pop %v2979
    %v2981 = vmul.f32 1.0, %v2980
    %v2982 = vadd.f32 %v2832, %v2903
    %v2983 = vxor.u32 %v2982, 2147483648
    %v2984 = vmul.f32 %v2983, 1.442695
    %v2985 = vpow.pop %v2984
    %v2986 = vadd.f32 %v2985, 1.0
    %v2987 = vrcp.pop %v2986
    %v2988 = vmul.f32 1.0, %v2987
    %v2989 = vadd.f32 %v2972, %v1899
    %v2990 = vmul.f32 %v2981, %v2989
    %v2991 = vadd.f32 %v2833, %v2990
    %v2992 = vtanh.pop %v2991
    %v2993 = vsub.f32 1.0, %v2988
    %v2994 = vmul.f32 %v2993, %v2992
    %v2995 = vmul.f32 %v2988, %v2830
    %v2996 = vadd.f32 %v2994, %v2995
    %v2997 = vld [vmem:[%s1286] sm:$0xff]
    %v2998 = vld [vmem:[%s1286 + $0x8] sm:$0xff]
    %v2999 = vld [vmem:[%s1286 + $0x10] sm:$0xff]
    %3000 = vmatprep.subr.mxu0 %v1891
    %3001 = vmatpush1.msra.mxu0 %v1890
    %3002 = vmatprep.subr.mxu0 %v1888
    %3003 = vmatpush1.msra.mxu0 %v1887
    %3004 = vmatprep.subr.mxu0 %v1885
    %3005 = vmatpush1.msra.mxu0 %v1884
    %3006 = vmatprep.subr.mxu0 %v1882
    %3007 = vmatpush1.msra.mxu0 %v1881
    %3008 = vmatprep.subr.mxu0 %v1879
    %3009 = vmatpush1.msra.mxu0 %v1878
    %3010 = vmatprep.subr.mxu0 %v1876
    %3011 = vmatpush1.msra.mxu0 %v1875
    %3012 = vmatprep.subr.mxu0 %v1873
    %3013 = vmatpush1.msra.mxu0 %v1872
    %3014 = vmatprep.subr.mxu0 %v1870
    %3015 = vmatpush1.msra.mxu0 %v1869
    %3016 = vmatprep.subr.mxu0 %v1867
    %3017 = vmatpush1.msra.mxu0 %v1866
    %3018 = vmatprep.subr.mxu0 %v1864
    %3019 = vmatpush1.msra.mxu0 %v1863
    %3020 = vmatprep.subr.mxu0 %v1861
    %3021 = vmatpush1.msra.mxu0 %v1860
    %3022 = vmatprep.subr.mxu0 %v1858
    %3023 = vmatpush1.msra.mxu0 %v1857
    %3024 = vmatprep.subr.mxu0 %v1855
    %3025 = vmatpush1.msra.mxu0 %v1854
    %3026 = vmatprep.subr.mxu0 %v1852
    %3027 = vmatpush1.msra.mxu0 %v1851
    %3028 = vmatprep.subr.mxu0 %v1849
    %3029 = vmatpush1.msra.mxu0 %v1848
    %3030 = vmatprep.subr.mxu0 %v1846
    %3031 = vmatpush1.msra.mxu0 %v1845
    %3032 = vmatprep.subr.mxu0 0.0
    %3033 = vmatpush2.msra.mxu0 0.0
    %3034 = vmatprep.subr.mxu0 0.0
    %3035 = vmatpush2.msra.mxu0 0.0
    %3036 = vmatprep.subr.mxu0 0.0
    %3037 = vmatpush2.msra.mxu0 0.0
    %3038 = vmatprep.subr.mxu0 0.0
    %3039 = vmatpush2.msra.mxu0 0.0
    %3040 = vmatprep.subr.mxu0 0.0
    %3041 = vmatpush2.msra.mxu0 0.0
    %3042 = vmatprep.subr.mxu0 0.0
    %3043 = vmatpush2.msra.mxu0 0.0
    %3044 = vmatprep.subr.mxu0 0.0
    %3045 = vmatpush2.msra.mxu0 0.0
    %3046 = vmatprep.subr.mxu0 0.0
    %3047 = vmatpush2.msra.mxu0 0.0
    %3048 = vmatprep.subr.mxu0 0.0
    %3049 = vmatpush2.msra.mxu0 0.0
    %3050 = vmatprep.subr.mxu0 0.0
    %3051 = vmatpush2.msra.mxu0 0.0
    %3052 = vmatprep.subr.mxu0 0.0
    %3053 = vmatpush2.msra.mxu0 0.0
    %3054 = vmatprep.subr.mxu0 0.0
    %3055 = vmatpush2.msra.mxu0 0.0
    %3056 = vmatprep.subr.mxu0 0.0
    %3057 = vmatpush2.msra.mxu0 0.0
    %3058 = vmatprep.subr.mxu0 0.0
    %3059 = vmatpush2.msra.mxu0 0.0
    %3060 = vmatprep.subr.mxu0 0.0
    %3061 = vmatpush2.msra.mxu0 0.0
    %3062 = vmatprep.subr.mxu0 0.0
    %3063 = vmatpush2.msra.mxu0 0.0
    %3064 = vmatprep.mubr.f32.mxu0 0.0
    %3065 = vmatmul.mubr.f32.gmra.mxu0 %v2996
    %v3066 = vpop.f32.mrf.mxu0
    %v3067 = vadd.f32 0.0, %v3066
    %v3068 = vpop.f32.mrf.mxu0
    %v3069 = vadd.f32 0.0, %v3068
    %3070 = vdwg.mxu0
    %3071 = vmatprep.subr.mxu0 0.0
    %3072 = vmatpush1.msra.mxu0 %v1892
    %3073 = vmatprep.subr.mxu0 0.0
    %3074 = vmatpush1.msra.mxu0 %v1889
    %3075 = vmatprep.subr.mxu0 0.0
    %3076 = vmatpush1.msra.mxu0 %v1886
    %3077 = vmatprep.subr.mxu0 0.0
    %3078 = vmatpush1.msra.mxu0 %v1883
    %3079 = vmatprep.subr.mxu0 0.0
    %3080 = vmatpush1.msra.mxu0 %v1880
    %3081 = vmatprep.subr.mxu0 0.0
    %3082 = vmatpush1.msra.mxu0 %v1877
    %3083 = vmatprep.subr.mxu0 0.0
    %3084 = vmatpush1.msra.mxu0 %v1874
    %3085 = vmatprep.subr.mxu0 0.0
    %3086 = vmatpush1.msra.mxu0 %v1871
    %3087 = vmatprep.subr.mxu0 0.0
    %3088 = vmatpush1.msra.mxu0 %v1868
    %3089 = vmatprep.subr.mxu0 0.0
    %3090 = vmatpush1.msra.mxu0 %v1865
    %3091 = vmatprep.subr.mxu0 0.0
    %3092 = vmatpush1.msra.mxu0 %v1862
    %3093 = vmatprep.subr.mxu0 0.0
    %3094 = vmatpush1.msra.mxu0 %v1859
    %3095 = vmatprep.subr.mxu0 0.0
    %3096 = vmatpush1.msra.mxu0 %v1856
    %3097 = vmatprep.subr.mxu0 0.0
    %3098 = vmatpush1.msra.mxu0 %v1853
    %3099 = vmatprep.subr.mxu0 0.0
    %3100 = vmatpush1.msra.mxu0 %v1850
    %3101 = vmatprep.subr.mxu0 0.0
    %3102 = vmatpush1.msra.mxu0 %v1847
    %3103 = vmatprep.subr.mxu0 0.0
    %3104 = vmatpush2.msra.mxu0 0.0
    %3105 = vmatprep.subr.mxu0 0.0
    %3106 = vmatpush2.msra.mxu0 0.0
    %3107 = vmatprep.subr.mxu0 0.0
    %3108 = vmatpush2.msra.mxu0 0.0
    %3109 = vmatprep.subr.mxu0 0.0
    %3110 = vmatpush2.msra.mxu0 0.0
    %3111 = vmatprep.subr.mxu0 0.0
    %3112 = vmatpush2.msra.mxu0 0.0
    %3113 = vmatprep.subr.mxu0 0.0
    %3114 = vmatpush2.msra.mxu0 0.0
    %3115 = vmatprep.subr.mxu0 0.0
    %3116 = vmatpush2.msra.mxu0 0.0
    %3117 = vmatprep.subr.mxu0 0.0
    %3118 = vmatpush2.msra.mxu0 0.0
    %3119 = vmatprep.subr.mxu0 0.0
    %3120 = vmatpush2.msra.mxu0 0.0
    %3121 = vmatprep.subr.mxu0 0.0
    %3122 = vmatpush2.msra.mxu0 0.0
    %3123 = vmatprep.subr.mxu0 0.0
    %3124 = vmatpush2.msra.mxu0 0.0
    %3125 = vmatprep.subr.mxu0 0.0
    %3126 = vmatpush2.msra.mxu0 0.0
    %3127 = vmatprep.subr.mxu0 0.0
    %3128 = vmatpush2.msra.mxu0 0.0
    %3129 = vmatprep.subr.mxu0 0.0
    %3130 = vmatpush2.msra.mxu0 0.0
    %3131 = vmatprep.subr.mxu0 0.0
    %3132 = vmatpush2.msra.mxu0 0.0
    %3133 = vmatprep.subr.mxu0 0.0
    %3134 = vmatpush2.msra.mxu0 0.0
    %3135 = vmatprep.mubr.f32.mxu0 0.0
    %3136 = vmatmul.mubr.f32.gmra.mxu0 %v2996
    %v3137 = vpop.f32.mrf.mxu0
    %v3138 = vadd.f32 0.0, %v3137
    %v3139 = vpop.f32.mrf.mxu0
    %3140 = vdwg.mxu0
    %v3141 = vadd.f32 %v2997, %v3067
    %v3142 = vxor.u32 %v3141, 2147483648
    %v3143 = vmul.f32 %v3142, 1.442695
    %v3144 = vpow.pop %v3143
    %v3145 = vadd.f32 %v3144, 1.0
    %v3146 = vrcp.pop %v3145
    %v3147 = vmul.f32 1.0, %v3146
    %v3148 = vadd.f32 %v2998, %v3069
    %v3149 = vxor.u32 %v3148, 2147483648
    %v3150 = vmul.f32 %v3149, 1.442695
    %v3151 = vpow.pop %v3150
    %v3152 = vadd.f32 %v3151, 1.0
    %v3153 = vrcp.pop %v3152
    %v3154 = vmul.f32 1.0, %v3153
    %v3155 = vadd.f32 %v3138, %v1899
    %v3156 = vmul.f32 %v3147, %v3155
    %v3157 = vadd.f32 %v2999, %v3156
    %v3158 = vtanh.pop %v3157
    %v3159 = vsub.f32 1.0, %v3154
    %v3160 = vmul.f32 %v3159, %v3158
    %v3161 = vmul.f32 %v3154, %v2996
    %v3162 = vadd.f32 %v3160, %v3161
    %v3163 = vld [vmem:[%s1457] sm:$0xff]
    %v3164 = vld [vmem:[%s1457 + $0x8] sm:$0xff]
    %v3165 = vld [vmem:[%s1457 + $0x10] sm:$0xff]
    %3166 = vmatprep.subr.mxu0 %v1891
    %3167 = vmatpush1.msra.mxu0 %v1890
    %3168 = vmatprep.subr.mxu0 %v1888
    %3169 = vmatpush1.msra.mxu0 %v1887
    %3170 = vmatprep.subr.mxu0 %v1885
    %3171 = vmatpush1.msra.mxu0 %v1884
    %3172 = vmatprep.subr.mxu0 %v1882
    %3173 = vmatpush1.msra.mxu0 %v1881
    %3174 = vmatprep.subr.mxu0 %v1879
    %3175 = vmatpush1.msra.mxu0 %v1878
    %3176 = vmatprep.subr.mxu0 %v1876
    %3177 = vmatpush1.msra.mxu0 %v1875
    %3178 = vmatprep.subr.mxu0 %v1873
    %3179 = vmatpush1.msra.mxu0 %v1872
    %3180 = vmatprep.subr.mxu0 %v1870
    %3181 = vmatpush1.msra.mxu0 %v1869
    %3182 = vmatprep.subr.mxu0 %v1867
    %3183 = vmatpush1.msra.mxu0 %v1866
    %3184 = vmatprep.subr.mxu0 %v1864
    %3185 = vmatpush1.msra.mxu0 %v1863
    %3186 = vmatprep.subr.mxu0 %v1861
    %3187 = vmatpush1.msra.mxu0 %v1860
    %3188 = vmatprep.subr.mxu0 %v1858
    %3189 = vmatpush1.msra.mxu0 %v1857
    %3190 = vmatprep.subr.mxu0 %v1855
    %3191 = vmatpush1.msra.mxu0 %v1854
    %3192 = vmatprep.subr.mxu0 %v1852
    %3193 = vmatpush1.msra.mxu0 %v1851
    %3194 = vmatprep.subr.mxu0 %v1849
    %3195 = vmatpush1.msra.mxu0 %v1848
    %3196 = vmatprep.subr.mxu0 %v1846
    %3197 = vmatpush1.msra.mxu0 %v1845
    %3198 = vmatprep.subr.mxu0 0.0
    %3199 = vmatpush2.msra.mxu0 0.0
    %3200 = vmatprep.subr.mxu0 0.0
    %3201 = vmatpush2.msra.mxu0 0.0
    %3202 = vmatprep.subr.mxu0 0.0
    %3203 = vmatpush2.msra.mxu0 0.0
    %3204 = vmatprep.subr.mxu0 0.0
    %3205 = vmatpush2.msra.mxu0 0.0
    %3206 = vmatprep.subr.mxu0 0.0
    %3207 = vmatpush2.msra.mxu0 0.0
    %3208 = vmatprep.subr.mxu0 0.0
    %3209 = vmatpush2.msra.mxu0 0.0
    %3210 = vmatprep.subr.mxu0 0.0
    %3211 = vmatpush2.msra.mxu0 0.0
    %3212 = vmatprep.subr.mxu0 0.0
    %3213 = vmatpush2.msra.mxu0 0.0
    %3214 = vmatprep.subr.mxu0 0.0
    %3215 = vmatpush2.msra.mxu0 0.0
    %3216 = vmatprep.subr.mxu0 0.0
    %3217 = vmatpush2.msra.mxu0 0.0
    %3218 = vmatprep.subr.mxu0 0.0
    %3219 = vmatpush2.msra.mxu0 0.0
    %3220 = vmatprep.subr.mxu0 0.0
    %3221 = vmatpush2.msra.mxu0 0.0
    %3222 = vmatprep.subr.mxu0 0.0
    %3223 = vmatpush2.msra.mxu0 0.0
    %3224 = vmatprep.subr.mxu0 0.0
    %3225 = vmatpush2.msra.mxu0 0.0
    %3226 = vmatprep.subr.mxu0 0.0
    %3227 = vmatpush2.msra.mxu0 0.0
    %3228 = vmatprep.subr.mxu0 0.0
    %3229 = vmatpush2.msra.mxu0 0.0
    %3230 = vmatprep.mubr.f32.mxu0 0.0
    %3231 = vmatmul.mubr.f32.gmra.mxu0 %v3162
    %v3232 = vpop.f32.mrf.mxu0
    %v3233 = vadd.f32 0.0, %v3232
    %v3234 = vpop.f32.mrf.mxu0
    %v3235 = vadd.f32 0.0, %v3234
    %3236 = vdwg.mxu0
    %3237 = vmatprep.subr.mxu0 0.0
    %3238 = vmatpush1.msra.mxu0 %v1892
    %3239 = vmatprep.subr.mxu0 0.0
    %3240 = vmatpush1.msra.mxu0 %v1889
    %3241 = vmatprep.subr.mxu0 0.0
    %3242 = vmatpush1.msra.mxu0 %v1886
    %3243 = vmatprep.subr.mxu0 0.0
    %3244 = vmatpush1.msra.mxu0 %v1883
    %3245 = vmatprep.subr.mxu0 0.0
    %3246 = vmatpush1.msra.mxu0 %v1880
    %3247 = vmatprep.subr.mxu0 0.0
    %3248 = vmatpush1.msra.mxu0 %v1877
    %3249 = vmatprep.subr.mxu0 0.0
    %3250 = vmatpush1.msra.mxu0 %v1874
    %3251 = vmatprep.subr.mxu0 0.0
    %3252 = vmatpush1.msra.mxu0 %v1871
    %3253 = vmatprep.subr.mxu0 0.0
    %3254 = vmatpush1.msra.mxu0 %v1868
    %3255 = vmatprep.subr.mxu0 0.0
    %3256 = vmatpush1.msra.mxu0 %v1865
    %3257 = vmatprep.subr.mxu0 0.0
    %3258 = vmatpush1.msra.mxu0 %v1862
    %3259 = vmatprep.subr.mxu0 0.0
    %3260 = vmatpush1.msra.mxu0 %v1859
    %3261 = vmatprep.subr.mxu0 0.0
    %3262 = vmatpush1.msra.mxu0 %v1856
    %3263 = vmatprep.subr.mxu0 0.0
    %3264 = vmatpush1.msra.mxu0 %v1853
    %3265 = vmatprep.subr.mxu0 0.0
    %3266 = vmatpush1.msra.mxu0 %v1850
    %3267 = vmatprep.subr.mxu0 0.0
    %3268 = vmatpush1.msra.mxu0 %v1847
    %3269 = vmatprep.subr.mxu0 0.0
    %3270 = vmatpush2.msra.mxu0 0.0
    %3271 = vmatprep.subr.mxu0 0.0
    %3272 = vmatpush2.msra.mxu0 0.0
    %3273 = vmatprep.subr.mxu0 0.0
    %3274 = vmatpush2.msra.mxu0 0.0
    %3275 = vmatprep.subr.mxu0 0.0
    %3276 = vmatpush2.msra.mxu0 0.0
    %3277 = vmatprep.subr.mxu0 0.0
    %3278 = vmatpush2.msra.mxu0 0.0
    %3279 = vmatprep.subr.mxu0 0.0
    %3280 = vmatpush2.msra.mxu0 0.0
    %3281 = vmatprep.subr.mxu0 0.0
    %3282 = vmatpush2.msra.mxu0 0.0
    %3283 = vmatprep.subr.mxu0 0.0
    %3284 = vmatpush2.msra.mxu0 0.0
    %3285 = vmatprep.subr.mxu0 0.0
    %3286 = vmatpush2.msra.mxu0 0.0
    %3287 = vmatprep.subr.mxu0 0.0
    %3288 = vmatpush2.msra.mxu0 0.0
    %3289 = vmatprep.subr.mxu0 0.0
    %3290 = vmatpush2.msra.mxu0 0.0
    %3291 = vmatprep.subr.mxu0 0.0
    %3292 = vmatpush2.msra.mxu0 0.0
    %3293 = vmatprep.subr.mxu0 0.0
    %3294 = vmatpush2.msra.mxu0 0.0
    %3295 = vmatprep.subr.mxu0 0.0
    %3296 = vmatpush2.msra.mxu0 0.0
    %3297 = vmatprep.subr.mxu0 0.0
    %3298 = vmatpush2.msra.mxu0 0.0
    %3299 = vmatprep.subr.mxu0 0.0
    %3300 = vmatpush2.msra.mxu0 0.0
    %3301 = vmatprep.mubr.f32.mxu0 0.0
    %3302 = vmatmul.mubr.f32.gmra.mxu0 %v3162
    %v3303 = vpop.f32.mrf.mxu0
    %v3304 = vadd.f32 0.0, %v3303
    %v3305 = vpop.f32.mrf.mxu0
    %3306 = vdwg.mxu0
    %v3307 = vadd.f32 %v3163, %v3233
    %v3308 = vxor.u32 %v3307, 2147483648
    %v3309 = vmul.f32 %v3308, 1.442695
    %v3310 = vpow.pop %v3309
    %v3311 = vadd.f32 %v3310, 1.0
    %v3312 = vrcp.pop %v3311
    %v3313 = vmul.f32 1.0, %v3312
    %v3314 = vadd.f32 %v3164, %v3235
    %v3315 = vxor.u32 %v3314, 2147483648
    %v3316 = vmul.f32 %v3315, 1.442695
    %v3317 = vpow.pop %v3316
    %v3318 = vadd.f32 %v3317, 1.0
    %v3319 = vrcp.pop %v3318
    %v3320 = vmul.f32 1.0, %v3319
    %v3321 = vadd.f32 %v3304, %v1899
    %v3322 = vmul.f32 %v3313, %v3321
    %v3323 = vadd.f32 %v3165, %v3322
    %v3324 = vtanh.pop %v3323
    %v3325 = vsub.f32 1.0, %v3320
    %v3326 = vmul.f32 %v3325, %v3324
    %v3327 = vmul.f32 %v3320, %v3162
    %v3328 = vadd.f32 %v3326, %v3327
    %v3329 = vld [vmem:[%s1628] sm:$0xff]
    %v3330 = vld [vmem:[%s1628 + $0x8] sm:$0xff]
    %v3331 = vld [vmem:[%s1628 + $0x10] sm:$0xff]
    %3332 = vmatprep.subr.mxu0 %v1891
    %3333 = vmatpush1.msra.mxu0 %v1890
    %3334 = vmatprep.subr.mxu0 %v1888
    %3335 = vmatpush1.msra.mxu0 %v1887
    %3336 = vmatprep.subr.mxu0 %v1885
    %3337 = vmatpush1.msra.mxu0 %v1884
    %3338 = vmatprep.subr.mxu0 %v1882
    %3339 = vmatpush1.msra.mxu0 %v1881
    %3340 = vmatprep.subr.mxu0 %v1879
    %3341 = vmatpush1.msra.mxu0 %v1878
    %3342 = vmatprep.subr.mxu0 %v1876
    %3343 = vmatpush1.msra.mxu0 %v1875
    %3344 = vmatprep.subr.mxu0 %v1873
    %3345 = vmatpush1.msra.mxu0 %v1872
    %3346 = vmatprep.subr.mxu0 %v1870
    %3347 = vmatpush1.msra.mxu0 %v1869
    %3348 = vmatprep.subr.mxu0 %v1867
    %3349 = vmatpush1.msra.mxu0 %v1866
    %3350 = vmatprep.subr.mxu0 %v1864
    %3351 = vmatpush1.msra.mxu0 %v1863
    %3352 = vmatprep.subr.mxu0 %v1861
    %3353 = vmatpush1.msra.mxu0 %v1860
    %3354 = vmatprep.subr.mxu0 %v1858
    %3355 = vmatpush1.msra.mxu0 %v1857
    %3356 = vmatprep.subr.mxu0 %v1855
    %3357 = vmatpush1.msra.mxu0 %v1854
    %3358 = vmatprep.subr.mxu0 %v1852
    %3359 = vmatpush1.msra.mxu0 %v1851
    %3360 = vmatprep.subr.mxu0 %v1849
    %3361 = vmatpush1.msra.mxu0 %v1848
    %3362 = vmatprep.subr.mxu0 %v1846
    %3363 = vmatpush1.msra.mxu0 %v1845
    %3364 = vmatprep.subr.mxu0 0.0
    %3365 = vmatpush2.msra.mxu0 0.0
    %3366 = vmatprep.subr.mxu0 0.0
    %3367 = vmatpush2.msra.mxu0 0.0
    %3368 = vmatprep.subr.mxu0 0.0
    %3369 = vmatpush2.msra.mxu0 0.0
    %3370 = vmatprep.subr.mxu0 0.0
    %3371 = vmatpush2.msra.mxu0 0.0
    %3372 = vmatprep.subr.mxu0 0.0
    %3373 = vmatpush2.msra.mxu0 0.0
    %3374 = vmatprep.subr.mxu0 0.0
    %3375 = vmatpush2.msra.mxu0 0.0
    %3376 = vmatprep.subr.mxu0 0.0
    %3377 = vmatpush2.msra.mxu0 0.0
    %3378 = vmatprep.subr.mxu0 0.0
    %3379 = vmatpush2.msra.mxu0 0.0
    %3380 = vmatprep.subr.mxu0 0.0
    %3381 = vmatpush2.msra.mxu0 0.0
    %3382 = vmatprep.subr.mxu0 0.0
    %3383 = vmatpush2.msra.mxu0 0.0
    %3384 = vmatprep.subr.mxu0 0.0
    %3385 = vmatpush2.msra.mxu0 0.0
    %3386 = vmatprep.subr.mxu0 0.0
    %3387 = vmatpush2.msra.mxu0 0.0
    %3388 = vmatprep.subr.mxu0 0.0
    %3389 = vmatpush2.msra.mxu0 0.0
    %3390 = vmatprep.subr.mxu0 0.0
    %3391 = vmatpush2.msra.mxu0 0.0
    %3392 = vmatprep.subr.mxu0 0.0
    %3393 = vmatpush2.msra.mxu0 0.0
    %3394 = vmatprep.subr.mxu0 0.0
    %3395 = vmatpush2.msra.mxu0 0.0
    %3396 = vmatprep.mubr.f32.mxu0 0.0
    %3397 = vmatmul.mubr.f32.gmra.mxu0 %v3328
    %v3398 = vpop.f32.mrf.mxu0
    %v3399 = vadd.f32 0.0, %v3398
    %v3400 = vpop.f32.mrf.mxu0
    %v3401 = vadd.f32 0.0, %v3400
    %3402 = vdwg.mxu0
    %3403 = vmatprep.subr.mxu0 0.0
    %3404 = vmatpush1.msra.mxu0 %v1892
    %3405 = vmatprep.subr.mxu0 0.0
    %3406 = vmatpush1.msra.mxu0 %v1889
    %3407 = vmatprep.subr.mxu0 0.0
    %3408 = vmatpush1.msra.mxu0 %v1886
    %3409 = vmatprep.subr.mxu0 0.0
    %3410 = vmatpush1.msra.mxu0 %v1883
    %3411 = vmatprep.subr.mxu0 0.0
    %3412 = vmatpush1.msra.mxu0 %v1880
    %3413 = vmatprep.subr.mxu0 0.0
    %3414 = vmatpush1.msra.mxu0 %v1877
    %3415 = vmatprep.subr.mxu0 0.0
    %3416 = vmatpush1.msra.mxu0 %v1874
    %3417 = vmatprep.subr.mxu0 0.0
    %3418 = vmatpush1.msra.mxu0 %v1871
    %3419 = vmatprep.subr.mxu0 0.0
    %3420 = vmatpush1.msra.mxu0 %v1868
    %3421 = vmatprep.subr.mxu0 0.0
    %3422 = vmatpush1.msra.mxu0 %v1865
    %3423 = vmatprep.subr.mxu0 0.0
    %3424 = vmatpush1.msra.mxu0 %v1862
    %3425 = vmatprep.subr.mxu0 0.0
    %3426 = vmatpush1.msra.mxu0 %v1859
    %3427 = vmatprep.subr.mxu0 0.0
    %3428 = vmatpush1.msra.mxu0 %v1856
    %3429 = vmatprep.subr.mxu0 0.0
    %3430 = vmatpush1.msra.mxu0 %v1853
    %3431 = vmatprep.subr.mxu0 0.0
    %3432 = vmatpush1.msra.mxu0 %v1850
    %3433 = vmatprep.subr.mxu0 0.0
    %3434 = vmatpush1.msra.mxu0 %v1847
    %3435 = vmatprep.subr.mxu0 0.0
    %3436 = vmatpush2.msra.mxu0 0.0
    %3437 = vmatprep.subr.mxu0 0.0
    %3438 = vmatpush2.msra.mxu0 0.0
    %3439 = vmatprep.subr.mxu0 0.0
    %3440 = vmatpush2.msra.mxu0 0.0
    %3441 = vmatprep.subr.mxu0 0.0
    %3442 = vmatpush2.msra.mxu0 0.0
    %3443 = vmatprep.subr.mxu0 0.0
    %3444 = vmatpush2.msra.mxu0 0.0
    %3445 = vmatprep.subr.mxu0 0.0
    %3446 = vmatpush2.msra.mxu0 0.0
    %3447 = vmatprep.subr.mxu0 0.0
    %3448 = vmatpush2.msra.mxu0 0.0
    %3449 = vmatprep.subr.mxu0 0.0
    %3450 = vmatpush2.msra.mxu0 0.0
    %3451 = vmatprep.subr.mxu0 0.0
    %3452 = vmatpush2.msra.mxu0 0.0
    %3453 = vmatprep.subr.mxu0 0.0
    %3454 = vmatpush2.msra.mxu0 0.0
    %3455 = vmatprep.subr.mxu0 0.0
    %3456 = vmatpush2.msra.mxu0 0.0
    %3457 = vmatprep.subr.mxu0 0.0
    %3458 = vmatpush2.msra.mxu0 0.0
    %3459 = vmatprep.subr.mxu0 0.0
    %3460 = vmatpush2.msra.mxu0 0.0
    %3461 = vmatprep.subr.mxu0 0.0
    %3462 = vmatpush2.msra.mxu0 0.0
    %3463 = vmatprep.subr.mxu0 0.0
    %3464 = vmatpush2.msra.mxu0 0.0
    %3465 = vmatprep.subr.mxu0 0.0
    %3466 = vmatpush2.msra.mxu0 0.0
    %3467 = vmatprep.mubr.f32.mxu0 0.0
    %3468 = vmatmul.mubr.f32.gmra.mxu0 %v3328
    %v3469 = vpop.f32.mrf.mxu0
    %v3470 = vadd.f32 0.0, %v3469
    %v3471 = vpop.f32.mrf.mxu0
    %3472 = vdwg.mxu0
    %v3473 = vadd.f32 %v3329, %v3399
    %v3474 = vxor.u32 %v3473, 2147483648
    %v3475 = vmul.f32 %v3474, 1.442695
    %v3476 = vpow.pop %v3475
    %v3477 = vadd.f32 %v3476, 1.0
    %v3478 = vrcp.pop %v3477
    %v3479 = vmul.f32 1.0, %v3478
    %v3480 = vadd.f32 %v3330, %v3401
    %v3481 = vxor.u32 %v3480, 2147483648
    %v3482 = vmul.f32 %v3481, 1.442695
    %v3483 = vpow.pop %v3482
    %v3484 = vadd.f32 %v3483, 1.0
    %v3485 = vrcp.pop %v3484
    %v3486 = vmul.f32 1.0, %v3485
    %v3487 = vadd.f32 %v3470, %v1899
    %v3488 = vmul.f32 %v3479, %v3487
    %v3489 = vadd.f32 %v3331, %v3488
    %v3490 = vtanh.pop %v3489
    %v3491 = vsub.f32 1.0, %v3486
    %v3492 = vmul.f32 %v3491, %v3490
    %v3493 = vmul.f32 %v3486, %v3328
    %v3494 = vadd.f32 %v3492, %v3493
    %v3495 = vld [vmem:[%s9] sm:$0xff]
    %v3496 = vld [vmem:[%s9 + $0x8] sm:$0xff]
    %v3497 = vld [vmem:[%s9 + $0x10] sm:$0xff]
    %v3498 = vld [vmem:[%s9 + $0x18] sm:$0xff]
    %v3499 = vld [vmem:[%s9 + $0x20] sm:$0xff]
    %v3500 = vld [vmem:[%s9 + $0x28] sm:$0xff]
    %v3501 = vld [vmem:[%s9 + $0x30] sm:$0xff]
    %v3502 = vld [vmem:[%s9 + $0x38] sm:$0xff]
    %v3503 = vld [vmem:[%s9 + $0x40] sm:$0xff]
    %v3504 = vld [vmem:[%s9 + $0x48] sm:$0xff]
    %v3505 = vld [vmem:[%s9 + $0x50] sm:$0xff]
    %v3506 = vld [vmem:[%s9 + $0x58] sm:$0xff]
    %v3507 = vld [vmem:[%s9 + $0x60] sm:$0xff]
    %v3508 = vld [vmem:[%s9 + $0x68] sm:$0xff]
    %v3509 = vld [vmem:[%s9 + $0x70] sm:$0xff]
    %v3510 = vld [vmem:[%s9 + $0x78] sm:$0xff]
    %v3511 = vld [vmem:[%s10] sm:$0x1]
    %v3513 = vlaneseq
    %v3514 = vshrl.u32 %v3513, 7
    %v3515 = vsub.s32 0, %v3514
    %v3516 = vrot.slane %v3511, %v3515
    %3518 = vmatprep.subr.mxu0 0.0
    %3519 = vmatpush1.msra.mxu0 %v3510
    %3520 = vmatprep.subr.mxu0 0.0
    %3521 = vmatpush1.msra.mxu0 %v3509
    %3522 = vmatprep.subr.mxu0 0.0
    %3523 = vmatpush1.msra.mxu0 %v3508
    %3524 = vmatprep.subr.mxu0 0.0
    %3525 = vmatpush1.msra.mxu0 %v3507
    %3526 = vmatprep.subr.mxu0 0.0
    %3527 = vmatpush1.msra.mxu0 %v3506
    %3528 = vmatprep.subr.mxu0 0.0
    %3529 = vmatpush1.msra.mxu0 %v3505
    %3530 = vmatprep.subr.mxu0 0.0
    %3531 = vmatpush1.msra.mxu0 %v3504
    %3532 = vmatprep.subr.mxu0 0.0
    %3533 = vmatpush1.msra.mxu0 %v3503
    %3534 = vmatprep.subr.mxu0 0.0
    %3535 = vmatpush1.msra.mxu0 %v3502
    %3536 = vmatprep.subr.mxu0 0.0
    %3537 = vmatpush1.msra.mxu0 %v3501
    %3538 = vmatprep.subr.mxu0 0.0
    %3539 = vmatpush1.msra.mxu0 %v3500
    %3540 = vmatprep.subr.mxu0 0.0
    %3541 = vmatpush1.msra.mxu0 %v3499
    %3542 = vmatprep.subr.mxu0 0.0
    %3543 = vmatpush1.msra.mxu0 %v3498
    %3544 = vmatprep.subr.mxu0 0.0
    %3545 = vmatpush1.msra.mxu0 %v3497
    %3546 = vmatprep.subr.mxu0 0.0
    %3547 = vmatpush1.msra.mxu0 %v3496
    %3548 = vmatprep.subr.mxu0 0.0
    %3549 = vmatpush1.msra.mxu0 %v3495
    %3550 = vmatprep.subr.mxu0 0.0
    %3551 = vmatpush2.msra.mxu0 0.0
    %3552 = vmatprep.subr.mxu0 0.0
    %3553 = vmatpush2.msra.mxu0 0.0
    %3554 = vmatprep.subr.mxu0 0.0
    %3555 = vmatpush2.msra.mxu0 0.0
    %3556 = vmatprep.subr.mxu0 0.0
    %3557 = vmatpush2.msra.mxu0 0.0
    %3558 = vmatprep.subr.mxu0 0.0
    %3559 = vmatpush2.msra.mxu0 0.0
    %3560 = vmatprep.subr.mxu0 0.0
    %3561 = vmatpush2.msra.mxu0 0.0
    %3562 = vmatprep.subr.mxu0 0.0
    %3563 = vmatpush2.msra.mxu0 0.0
    %3564 = vmatprep.subr.mxu0 0.0
    %3565 = vmatpush2.msra.mxu0 0.0
    %3566 = vmatprep.subr.mxu0 0.0
    %3567 = vmatpush2.msra.mxu0 0.0
    %3568 = vmatprep.subr.mxu0 0.0
    %3569 = vmatpush2.msra.mxu0 0.0
    %3570 = vmatprep.subr.mxu0 0.0
    %3571 = vmatpush2.msra.mxu0 0.0
    %3572 = vmatprep.subr.mxu0 0.0
    %3573 = vmatpush2.msra.mxu0 0.0
    %3574 = vmatprep.subr.mxu0 0.0
    %3575 = vmatpush2.msra.mxu0 0.0
    %3576 = vmatprep.subr.mxu0 0.0
    %3577 = vmatpush2.msra.mxu0 0.0
    %3578 = vmatprep.subr.mxu0 0.0
    %3579 = vmatpush2.msra.mxu0 0.0
    %3580 = vmatprep.subr.mxu0 0.0
    %3581 = vmatpush2.msra.mxu0 0.0
    %3582 = vmatprep.mubr.f32.mxu0 0.0
    %3583 = vmatmul.mubr.f32.gmra.mxu0 %v3494
    %v3584 = vpop.f32.mrf.mxu0
    %v3585 = vadd.f32 %v3516, %v3584
    %v3586 = vpop.f32.mrf.mxu0
    %3587 = vdwg.mxu0
    %vm3588 = vcmask 130048
    %3589 = vst.msk [vmem:[#allocation10] sm:$0xff] %vm3588, %v3585
    // Predicated region
    $region58: #{tpu_custom_call.1} parent=1 // pred_check
      _
    $region59: #{tpu_custom_call.1} parent=1 // pred_check_branch
      %3591 = sbr.rel (0) target = $region61
    $region60: #{tpu_custom_call.1} parent=1 // pred_region
      %s3593 = ssub.s32 128, 128
      %3594 = vsyncadd [#allocation6], %s3593
      %s3596 = sshll.u32 [#allocation10], 4
      %s3597 = int_to_ptr.vmem [resolvable:$true] %s3596
      %3599 = dma.vmem_to_hbm [thread:$0]  %s3597, 128, %s11, [#allocation6]
    $region61: #{tpu_custom_call.1} parent=1 // pred_fallthru
      _
    // Predicated region
    $region62: #{tpu_custom_call.1} parent=1 // pred_check
      _
    $region63: #{tpu_custom_call.1} parent=1 // pred_check_branch
      %3601 = sbr.rel (0) target = $region65
    $region64: #{tpu_custom_call.1} parent=1 // pred_region
      %3602 = dma.done [#allocation6], 128
    $region65: #{tpu_custom_call.1} parent=1 // pred_fallthru
      _
    %3603 = vsyncpa [#allocation5], 1
    %3604 = vsyncpa [#allocation8], 1
    %3605 = vsyncpa [#allocation6], 1

</llo_original>
